<compile_context>
chip_gen: v5e
topology: v5e:2x2
jax: 0.10.0
libtpu: 0.0.40
codegen_flags: <defaults>
</compile_context>

<pallas_src>
import functools

import jax
import jax.numpy as jnp
from jax.experimental import pallas as pl
from jax.experimental.pallas import tpu as pltpu


# ------------------------------- Pallas kernel ------------------------------ #

def _rca_group_kernel(x_ref, w1_ref, b1_ref, w2_ref, b2_ref,
                      wd_ref, bd_ref, wu_ref, bu_ref,
                      wf_ref, bf_ref, mask_ref,
                      out_ref, *, H, W, C, nb):
    HW = H * W
    x = x_ref[0]                                     # (C, HW) f32, channel-major

    # Off-centre 3x3 taps: (tap index t = (dy+1)*3+(dx+1), flat shift, mask row).
    taps = []
    mi = 0
    for dy in (-1, 0, 1):
        for dx in (-1, 0, 1):
            if dy == 0 and dx == 0:
                continue
            taps.append(((dy + 1) * 3 + (dx + 1), dy * W + dx, mi))
            mi += 1

    def conv3x3(a, w_ref, blk, b):
        # SAME 3x3 conv as 9 accumulating (C,C)@(C,HW) MXU dots.  Neighbour taps
        # are XLU lane-rolls of `a`; image-border wrap-around is killed by the
        # precomputed masks.  No halo buffer, no im2col scratch.
        acc = jnp.dot(w_ref[blk, 4], a, preferred_element_type=jnp.float32)   # centre
        for t, sh, m in taps:
            tap = pltpu.roll(a, (-sh) % HW, 1) * mask_ref[m]
            acc = acc + jnp.dot(w_ref[blk, t], tap,
                                preferred_element_type=jnp.float32)
        return acc + b

    a = x
    for blk in range(nb):        # static unroll; nb is small (use fori_loop if it grows)
        r = jnp.maximum(conv3x3(a, w1_ref, blk, b1_ref[blk]), 0.0)
        r = conv3x3(r, w2_ref, blk, b2_ref[blk])
        # CALayer: GAP -> 1x1 -> ReLU -> 1x1 -> sigmoid -> channel scale.
        y = jnp.sum(r, axis=1, keepdims=True) * (1.0 / HW)                       # (C, 1)
        d = jnp.maximum(jnp.sum(wd_ref[blk] * y, axis=0, keepdims=True)
                        + bd_ref[blk], 0.0)                                      # (1, Cr)
        s = jax.nn.sigmoid(jnp.sum(wu_ref[blk] * d, axis=1, keepdims=True)
                           + bu_ref[blk])                                        # (C, 1)
        a = r * s + a                                 # block residual (stays in vregs)

    res = conv3x3(a, wf_ref, 0, bf_ref[...])          # trailing plain conv of the group
    out_ref[0] = (res + x).astype(out_ref.dtype)      # fused group residual, lane-dense


# ------------------------------ Pallas wrapper ------------------------------ #

def pack_params(p):
    """One-time repack of raw parameters into kernel layout (hoist out of jit)."""
    nb, _, _, C, _ = p['w1'].shape
    Cr = p['wd'].shape[-1]
    # HWIO (kh,kw,ci,co) -> tap-major (9, co, ci); tap t = (dy+1)*3 + (dx+1).
    w1k = jnp.transpose(p['w1'], (0, 1, 2, 4, 3)).reshape(nb, 9, C, C)
    w2k = jnp.transpose(p['w2'], (0, 1, 2, 4, 3)).reshape(nb, 9, C, C)
    wfk = jnp.transpose(p['wf'], (0, 1, 3, 2)).reshape(1, 9, C, C)
    return {
        'w1': w1k, 'b1': p['b1'].reshape(nb, C, 1),
        'w2': w2k, 'b2': p['b2'].reshape(nb, C, 1),
        'wd': p['wd'], 'bd': p['bd'].reshape(nb, 1, Cr),
        'wu': p['wu'], 'bu': p['bu'].reshape(nb, C, 1),
        'wf': wfk, 'bf': p['bf'].reshape(C, 1),
    }


def rca_group(x, packed):
    """x: (N, C, H, W) float32. Returns RCAGroup(x) with the same shape."""
    N, C, H, W = x.shape
    HW = H * W
    nb = packed['w1'].shape[0]
    Cr = packed['wd'].shape[-1]

    # Combined validity masks for the 8 off-centre taps (constant, 8 KB).
    row = jnp.arange(HW, dtype=jnp.int32) // W
    col = jnp.arange(HW, dtype=jnp.int32) % W
    ms = []
    for dy in (-1, 0, 1):
        for dx in (-1, 0, 1):
            if dy == 0 and dx == 0:
                continue
            valid = jnp.ones((HW,), jnp.bool_)
            if dy == -1:
                valid = valid & (row != 0)
            if dy == 1:
                valid = valid & (row != H - 1)
            if dx == -1:
                valid = valid & (col != 0)
            if dx == 1:
                valid = valid & (col != W - 1)
            ms.append(valid.astype(jnp.float32))
    masks = jnp.stack(ms).reshape(8, 1, HW)

    kernel = functools.partial(_rca_group_kernel, H=H, W=W, C=C, nb=nb)

    def full(shape):
        return pl.BlockSpec(shape, lambda n, _s=shape: (0,) * len(_s))

    out = pl.pallas_call(
        kernel,
        out_shape=jax.ShapeDtypeStruct((N, C, HW), x.dtype),
        grid_spec=pltpu.PrefetchScalarGridSpec(
            num_scalar_prefetch=0,
            grid=(N,),
            in_specs=[
                pl.BlockSpec((1, C, HW), lambda n: (n, 0, 0)),   # x (per image)
                full((nb, 9, C, C)), full((nb, C, 1)),           # w1, b1
                full((nb, 9, C, C)), full((nb, C, 1)),           # w2, b2
                full((nb, C, Cr)), full((nb, 1, Cr)),            # wd, bd
                full((nb, C, Cr)), full((nb, C, 1)),             # wu, bu
                full((1, 9, C, C)), full((C, 1)),                # wf, bf
                full((8, 1, HW)),                                # tap masks
            ],
            out_specs=pl.BlockSpec((1, C, HW), lambda n: (n, 0, 0)),
        ),
        compiler_params=pltpu.CompilerParams(dimension_semantics=("parallel",)),
    )(x.reshape(N, C, HW),
      packed['w1'], packed['b1'], packed['w2'], packed['b2'],
      packed['wd'], packed['bd'], packed['wu'], packed['bu'],
      packed['wf'], packed['bf'], masks)
    return out.reshape(N, C, H, W)


# -------------------------- deterministic parameters ------------------------ #

def init_params(key, C, reduction, nb):
    Cr = max(C // reduction, 1)
    s3 = 1.0 / (9.0 * C) ** 0.5
    ks = jax.random.split(key, 10)
    return {
        'w1': s3 * jax.random.normal(ks[0], (nb, 3, 3, C, C), jnp.float32),   # HWIO
        'b1': 0.01 * jax.random.normal(ks[1], (nb, C), jnp.float32),
        'w2': s3 * jax.random.normal(ks[2], (nb, 3, 3, C, C), jnp.float32),
        'b2': 0.01 * jax.random.normal(ks[3], (nb, C), jnp.float32),
        'wd': (1.0 / C ** 0.5) * jax.random.normal(ks[4], (nb, C, Cr), jnp.float32),
        'bd': 0.01 * jax.random.normal(ks[5], (nb, Cr), jnp.float32),
        'wu': (1.0 / Cr ** 0.5) * jax.random.normal(ks[6], (nb, C, Cr), jnp.float32),
        'bu': 0.01 * jax.random.normal(ks[7], (nb, C), jnp.float32),
        'wf': s3 * jax.random.normal(ks[8], (3, 3, C, C), jnp.float32),
        'bf': 0.01 * jax.random.normal(ks[9], (C,), jnp.float32),
    }


# ---------------------------- pure-JAX reference ----------------------------- #

def _ref_conv3x3(x, w, b):
    y = jax.lax.conv_general_dilated(
        x, w, window_strides=(1, 1), padding='SAME',
        dimension_numbers=('NCHW', 'HWIO', 'NCHW'))
    return y + b.reshape(1, -1, 1, 1)


def _ref_rca_group(x, p):
    nb = p['w1'].shape[0]
    res = x
    for i in range(nb):
        r = jnp.maximum(_ref_conv3x3(res, p['w1'][i], p['b1'][i]), 0.0)
        r = _ref_conv3x3(r, p['w2'][i], p['b2'][i])
        y = jnp.mean(r, axis=(2, 3))                                        # (N, C)
        d = jnp.maximum(jnp.einsum('nc,cr->nr', y, p['wd'][i]) + p['bd'][i], 0.0)
        s = jax.nn.sigmoid(jnp.einsum('nr,cr->nc', d, p['wu'][i]) + p['bu'][i])
        res = r * s[:, :, None, None] + res
    res = _ref_conv3x3(res, p['wf'], p['bf'])
    return res + x


# ------------------------------------ main ----------------------------------- #

if __name__ == "__main__":
    N, C, H, W = 2, 16, 16, 16          # NCHW, matching the torch module layout
    reduction, nb = 4, 2

    key = jax.random.PRNGKey(0)
    kx, kp = jax.random.split(key)
    x = jax.random.normal(kx, (N, C, H, W), jnp.float32)
    params = init_params(kp, C, reduction, nb)
    packed = pack_params(params)        # one-time repack, hoisted out of the jitted call

    out = jax.block_until_ready(jax.jit(rca_group)(x, packed))

    ref = jax.block_until_ready(_ref_rca_group(x, params))
    assert out.shape == (N, C, H, W)
    err = float(jnp.max(jnp.abs(out - ref)))
    assert jnp.allclose(out, ref, atol=2e-3, rtol=2e-3), err

    print("KERNEL_OK")
</pallas_src>

<mosaic_0001>
module attributes {stable_mosaic.version = 11 : i64} {
  func.func @_rca_group_kernel(%arg0: i32, %arg1: memref<1x16x256xf32, #tpu.memory_space<vmem>>, %arg2: memref<2x9x16x16xf32, #tpu.memory_space<vmem>>, %arg3: memref<2x16x1xf32, #tpu.memory_space<vmem>>, %arg4: memref<2x9x16x16xf32, #tpu.memory_space<vmem>>, %arg5: memref<2x16x1xf32, #tpu.memory_space<vmem>>, %arg6: memref<2x16x4xf32, #tpu.memory_space<vmem>>, %arg7: memref<2x1x4xf32, #tpu.memory_space<vmem>>, %arg8: memref<2x16x4xf32, #tpu.memory_space<vmem>>, %arg9: memref<2x16x1xf32, #tpu.memory_space<vmem>>, %arg10: memref<1x9x16x16xf32, #tpu.memory_space<vmem>>, %arg11: memref<16x1xf32, #tpu.memory_space<vmem>>, %arg12: memref<8x1x256xf32, #tpu.memory_space<vmem>>, %arg13: memref<1x16x256xf32, #tpu.memory_space<vmem>>) attributes {dimension_semantics = [#tpu.dimension_semantics<parallel>], iteration_bounds = array<i64: 2>, scalar_prefetch = 0 : i64, scratch_operands = 0 : i64, tpu.core_type = #tpu.core_type<tc>, window_params = [{transform_indices = @transform_0, window_bounds = array<i64: 1, 16, 256>}, {pipeline_mode = #tpu.pipeline_mode<synchronous>, transform_indices = @transform_1, window_bounds = array<i64: 2, 9, 16, 16>}, {pipeline_mode = #tpu.pipeline_mode<synchronous>, transform_indices = @transform_2, window_bounds = array<i64: 2, 16, 1>}, {pipeline_mode = #tpu.pipeline_mode<synchronous>, transform_indices = @transform_3, window_bounds = array<i64: 2, 9, 16, 16>}, {pipeline_mode = #tpu.pipeline_mode<synchronous>, transform_indices = @transform_4, window_bounds = array<i64: 2, 16, 1>}, {pipeline_mode = #tpu.pipeline_mode<synchronous>, transform_indices = @transform_5, window_bounds = array<i64: 2, 16, 4>}, {pipeline_mode = #tpu.pipeline_mode<synchronous>, transform_indices = @transform_6, window_bounds = array<i64: 2, 1, 4>}, {pipeline_mode = #tpu.pipeline_mode<synchronous>, transform_indices = @transform_7, window_bounds = array<i64: 2, 16, 4>}, {pipeline_mode = #tpu.pipeline_mode<synchronous>, transform_indices = @transform_8, window_bounds = array<i64: 2, 16, 1>}, {pipeline_mode = #tpu.pipeline_mode<synchronous>, transform_indices = @transform_9, window_bounds = array<i64: 1, 9, 16, 16>}, {pipeline_mode = #tpu.pipeline_mode<synchronous>, transform_indices = @transform_10, window_bounds = array<i64: 16, 1>}, {pipeline_mode = #tpu.pipeline_mode<synchronous>, transform_indices = @transform_11, window_bounds = array<i64: 8, 1, 256>}, {transform_indices = @transform_12, window_bounds = array<i64: 1, 16, 256>}]} {
    %c0 = arith.constant 0 : index
    %c0_0 = arith.constant 0 : index
    %c0_1 = arith.constant 0 : index
    %0 = vector.load %arg1[%c0, %c0_0, %c0_1] : memref<1x16x256xf32, #tpu.memory_space<vmem>>, vector<1x16x256xf32>
    %1 = vector.shape_cast %0 : vector<1x16x256xf32> to vector<16x256xf32>
    %c0_2 = arith.constant 0 : index
    %c0_3 = arith.constant 0 : index
    %c0_4 = arith.constant 0 : index
    %2 = vector.load %arg3[%c0_2, %c0_3, %c0_4] : memref<2x16x1xf32, #tpu.memory_space<vmem>>, vector<1x16x1xf32>
    %3 = vector.shape_cast %2 : vector<1x16x1xf32> to vector<16x1xf32>
    %c0_5 = arith.constant 0 : index
    %c4 = arith.constant 4 : index
    %c0_6 = arith.constant 0 : index
    %c0_7 = arith.constant 0 : index
    %4 = vector.load %arg2[%c0_5, %c4, %c0_6, %c0_7] : memref<2x9x16x16xf32, #tpu.memory_space<vmem>>, vector<1x1x16x16xf32>
    %5 = vector.shape_cast %4 : vector<1x1x16x16xf32> to vector<16x16xf32>
    %cst = arith.constant dense<0.000000e+00> : vector<16x256xf32>
    %6 = tpu.matmul %5, %1, %cst {dimension_numbers = #tpu.dot_dimension_numbers<[1], [0], [0], [1], [0, 0, 1, 1], [], []>} : vector<16x16xf32>, vector<16x256xf32>, vector<16x256xf32> -> vector<16x256xf32>
    %c17_i32 = arith.constant 17 : i32
    %7 = tpu.dynamic_rotate %1 by %c17_i32 dim 1 : vector<16x256xf32>, i32 -> vector<16x256xf32>
    %c0_8 = arith.constant 0 : index
    %c0_9 = arith.constant 0 : index
    %c0_10 = arith.constant 0 : index
    %8 = vector.load %arg12[%c0_8, %c0_9, %c0_10] : memref<8x1x256xf32, #tpu.memory_space<vmem>>, vector<1x1x256xf32>
    %9 = vector.shape_cast %8 : vector<1x1x256xf32> to vector<1x256xf32>
    %10 = vector.broadcast %9 : vector<1x256xf32> to vector<16x256xf32>
    %11 = arith.mulf %7, %10 : vector<16x256xf32>
    %c0_11 = arith.constant 0 : index
    %c0_12 = arith.constant 0 : index
    %c0_13 = arith.constant 0 : index
    %c0_14 = arith.constant 0 : index
    %12 = vector.load %arg2[%c0_11, %c0_12, %c0_13, %c0_14] : memref<2x9x16x16xf32, #tpu.memory_space<vmem>>, vector<1x1x16x16xf32>
    %13 = vector.shape_cast %12 : vector<1x1x16x16xf32> to vector<16x16xf32>
    %cst_15 = arith.constant dense<0.000000e+00> : vector<16x256xf32>
    %14 = tpu.matmul %13, %11, %cst_15 {dimension_numbers = #tpu.dot_dimension_numbers<[1], [0], [0], [1], [0, 0, 1, 1], [], []>} : vector<16x16xf32>, vector<16x256xf32>, vector<16x256xf32> -> vector<16x256xf32>
    %15 = arith.addf %6, %14 : vector<16x256xf32>
    %c16_i32 = arith.constant 16 : i32
    %16 = tpu.dynamic_rotate %1 by %c16_i32 dim 1 : vector<16x256xf32>, i32 -> vector<16x256xf32>
    %c1 = arith.constant 1 : index
    %c0_16 = arith.constant 0 : index
    %c0_17 = arith.constant 0 : index
    %17 = vector.load %arg12[%c1, %c0_16, %c0_17] : memref<8x1x256xf32, #tpu.memory_space<vmem>>, vector<1x1x256xf32>
    %18 = vector.shape_cast %17 : vector<1x1x256xf32> to vector<1x256xf32>
    %19 = vector.broadcast %18 : vector<1x256xf32> to vector<16x256xf32>
    %20 = arith.mulf %16, %19 : vector<16x256xf32>
    %c0_18 = arith.constant 0 : index
    %c1_19 = arith.constant 1 : index
    %c0_20 = arith.constant 0 : index
    %c0_21 = arith.constant 0 : index
    %21 = vector.load %arg2[%c0_18, %c1_19, %c0_20, %c0_21] : memref<2x9x16x16xf32, #tpu.memory_space<vmem>>, vector<1x1x16x16xf32>
    %22 = vector.shape_cast %21 : vector<1x1x16x16xf32> to vector<16x16xf32>
    %cst_22 = arith.constant dense<0.000000e+00> : vector<16x256xf32>
    %23 = tpu.matmul %22, %20, %cst_22 {dimension_numbers = #tpu.dot_dimension_numbers<[1], [0], [0], [1], [0, 0, 1, 1], [], []>} : vector<16x16xf32>, vector<16x256xf32>, vector<16x256xf32> -> vector<16x256xf32>
    %24 = arith.addf %15, %23 : vector<16x256xf32>
    %c15_i32 = arith.constant 15 : i32
    %25 = tpu.dynamic_rotate %1 by %c15_i32 dim 1 : vector<16x256xf32>, i32 -> vector<16x256xf32>
    %c2 = arith.constant 2 : index
    %c0_23 = arith.constant 0 : index
    %c0_24 = arith.constant 0 : index
    %26 = vector.load %arg12[%c2, %c0_23, %c0_24] : memref<8x1x256xf32, #tpu.memory_space<vmem>>, vector<1x1x256xf32>
    %27 = vector.shape_cast %26 : vector<1x1x256xf32> to vector<1x256xf32>
    %28 = vector.broadcast %27 : vector<1x256xf32> to vector<16x256xf32>
    %29 = arith.mulf %25, %28 : vector<16x256xf32>
    %c0_25 = arith.constant 0 : index
    %c2_26 = arith.constant 2 : index
    %c0_27 = arith.constant 0 : index
    %c0_28 = arith.constant 0 : index
    %30 = vector.load %arg2[%c0_25, %c2_26, %c0_27, %c0_28] : memref<2x9x16x16xf32, #tpu.memory_space<vmem>>, vector<1x1x16x16xf32>
    %31 = vector.shape_cast %30 : vector<1x1x16x16xf32> to vector<16x16xf32>
    %cst_29 = arith.constant dense<0.000000e+00> : vector<16x256xf32>
    %32 = tpu.matmul %31, %29, %cst_29 {dimension_numbers = #tpu.dot_dimension_numbers<[1], [0], [0], [1], [0, 0, 1, 1], [], []>} : vector<16x16xf32>, vector<16x256xf32>, vector<16x256xf32> -> vector<16x256xf32>
    %33 = arith.addf %24, %32 : vector<16x256xf32>
    %c1_i32 = arith.constant 1 : i32
    %34 = tpu.dynamic_rotate %1 by %c1_i32 dim 1 : vector<16x256xf32>, i32 -> vector<16x256xf32>
    %c3 = arith.constant 3 : index
    %c0_30 = arith.constant 0 : index
    %c0_31 = arith.constant 0 : index
    %35 = vector.load %arg12[%c3, %c0_30, %c0_31] : memref<8x1x256xf32, #tpu.memory_space<vmem>>, vector<1x1x256xf32>
    %36 = vector.shape_cast %35 : vector<1x1x256xf32> to vector<1x256xf32>
    %37 = vector.broadcast %36 : vector<1x256xf32> to vector<16x256xf32>
    %38 = arith.mulf %34, %37 : vector<16x256xf32>
    %c0_32 = arith.constant 0 : index
    %c3_33 = arith.constant 3 : index
    %c0_34 = arith.constant 0 : index
    %c0_35 = arith.constant 0 : index
    %39 = vector.load %arg2[%c0_32, %c3_33, %c0_34, %c0_35] : memref<2x9x16x16xf32, #tpu.memory_space<vmem>>, vector<1x1x16x16xf32>
    %40 = vector.shape_cast %39 : vector<1x1x16x16xf32> to vector<16x16xf32>
    %cst_36 = arith.constant dense<0.000000e+00> : vector<16x256xf32>
    %41 = tpu.matmul %40, %38, %cst_36 {dimension_numbers = #tpu.dot_dimension_numbers<[1], [0], [0], [1], [0, 0, 1, 1], [], []>} : vector<16x16xf32>, vector<16x256xf32>, vector<16x256xf32> -> vector<16x256xf32>
    %42 = arith.addf %33, %41 : vector<16x256xf32>
    %c255_i32 = arith.constant 255 : i32
    %43 = tpu.dynamic_rotate %1 by %c255_i32 dim 1 : vector<16x256xf32>, i32 -> vector<16x256xf32>
    %c4_37 = arith.constant 4 : index
    %c0_38 = arith.constant 0 : index
    %c0_39 = arith.constant 0 : index
    %44 = vector.load %arg12[%c4_37, %c0_38, %c0_39] : memref<8x1x256xf32, #tpu.memory_space<vmem>>, vector<1x1x256xf32>
    %45 = vector.shape_cast %44 : vector<1x1x256xf32> to vector<1x256xf32>
    %46 = vector.broadcast %45 : vector<1x256xf32> to vector<16x256xf32>
    %47 = arith.mulf %43, %46 : vector<16x256xf32>
    %c0_40 = arith.constant 0 : index
    %c5 = arith.constant 5 : index
    %c0_41 = arith.constant 0 : index
    %c0_42 = arith.constant 0 : index
    %48 = vector.load %arg2[%c0_40, %c5, %c0_41, %c0_42] : memref<2x9x16x16xf32, #tpu.memory_space<vmem>>, vector<1x1x16x16xf32>
    %49 = vector.shape_cast %48 : vector<1x1x16x16xf32> to vector<16x16xf32>
    %cst_43 = arith.constant dense<0.000000e+00> : vector<16x256xf32>
    %50 = tpu.matmul %49, %47, %cst_43 {dimension_numbers = #tpu.dot_dimension_numbers<[1], [0], [0], [1], [0, 0, 1, 1], [], []>} : vector<16x16xf32>, vector<16x256xf32>, vector<16x256xf32> -> vector<16x256xf32>
    %51 = arith.addf %42, %50 : vector<16x256xf32>
    %c241_i32 = arith.constant 241 : i32
    %52 = tpu.dynamic_rotate %1 by %c241_i32 dim 1 : vector<16x256xf32>, i32 -> vector<16x256xf32>
    %c5_44 = arith.constant 5 : index
    %c0_45 = arith.constant 0 : index
    %c0_46 = arith.constant 0 : index
    %53 = vector.load %arg12[%c5_44, %c0_45, %c0_46] : memref<8x1x256xf32, #tpu.memory_space<vmem>>, vector<1x1x256xf32>
    %54 = vector.shape_cast %53 : vector<1x1x256xf32> to vector<1x256xf32>
    %55 = vector.broadcast %54 : vector<1x256xf32> to vector<16x256xf32>
    %56 = arith.mulf %52, %55 : vector<16x256xf32>
    %c0_47 = arith.constant 0 : index
    %c6 = arith.constant 6 : index
    %c0_48 = arith.constant 0 : index
    %c0_49 = arith.constant 0 : index
    %57 = vector.load %arg2[%c0_47, %c6, %c0_48, %c0_49] : memref<2x9x16x16xf32, #tpu.memory_space<vmem>>, vector<1x1x16x16xf32>
    %58 = vector.shape_cast %57 : vector<1x1x16x16xf32> to vector<16x16xf32>
    %cst_50 = arith.constant dense<0.000000e+00> : vector<16x256xf32>
    %59 = tpu.matmul %58, %56, %cst_50 {dimension_numbers = #tpu.dot_dimension_numbers<[1], [0], [0], [1], [0, 0, 1, 1], [], []>} : vector<16x16xf32>, vector<16x256xf32>, vector<16x256xf32> -> vector<16x256xf32>
    %60 = arith.addf %51, %59 : vector<16x256xf32>
    %c240_i32 = arith.constant 240 : i32
    %61 = tpu.dynamic_rotate %1 by %c240_i32 dim 1 : vector<16x256xf32>, i32 -> vector<16x256xf32>
    %c6_51 = arith.constant 6 : index
    %c0_52 = arith.constant 0 : index
    %c0_53 = arith.constant 0 : index
    %62 = vector.load %arg12[%c6_51, %c0_52, %c0_53] : memref<8x1x256xf32, #tpu.memory_space<vmem>>, vector<1x1x256xf32>
    %63 = vector.shape_cast %62 : vector<1x1x256xf32> to vector<1x256xf32>
    %64 = vector.broadcast %63 : vector<1x256xf32> to vector<16x256xf32>
    %65 = arith.mulf %61, %64 : vector<16x256xf32>
    %c0_54 = arith.constant 0 : index
    %c7 = arith.constant 7 : index
    %c0_55 = arith.constant 0 : index
    %c0_56 = arith.constant 0 : index
    %66 = vector.load %arg2[%c0_54, %c7, %c0_55, %c0_56] : memref<2x9x16x16xf32, #tpu.memory_space<vmem>>, vector<1x1x16x16xf32>
    %67 = vector.shape_cast %66 : vector<1x1x16x16xf32> to vector<16x16xf32>
    %cst_57 = arith.constant dense<0.000000e+00> : vector<16x256xf32>
    %68 = tpu.matmul %67, %65, %cst_57 {dimension_numbers = #tpu.dot_dimension_numbers<[1], [0], [0], [1], [0, 0, 1, 1], [], []>} : vector<16x16xf32>, vector<16x256xf32>, vector<16x256xf32> -> vector<16x256xf32>
    %69 = arith.addf %60, %68 : vector<16x256xf32>
    %c239_i32 = arith.constant 239 : i32
    %70 = tpu.dynamic_rotate %1 by %c239_i32 dim 1 : vector<16x256xf32>, i32 -> vector<16x256xf32>
    %c7_58 = arith.constant 7 : index
    %c0_59 = arith.constant 0 : index
    %c0_60 = arith.constant 0 : index
    %71 = vector.load %arg12[%c7_58, %c0_59, %c0_60] : memref<8x1x256xf32, #tpu.memory_space<vmem>>, vector<1x1x256xf32>
    %72 = vector.shape_cast %71 : vector<1x1x256xf32> to vector<1x256xf32>
    %73 = vector.broadcast %72 : vector<1x256xf32> to vector<16x256xf32>
    %74 = arith.mulf %70, %73 : vector<16x256xf32>
    %c0_61 = arith.constant 0 : index
    %c8 = arith.constant 8 : index
    %c0_62 = arith.constant 0 : index
    %c0_63 = arith.constant 0 : index
    %75 = vector.load %arg2[%c0_61, %c8, %c0_62, %c0_63] : memref<2x9x16x16xf32, #tpu.memory_space<vmem>>, vector<1x1x16x16xf32>
    %76 = vector.shape_cast %75 : vector<1x1x16x16xf32> to vector<16x16xf32>
    %cst_64 = arith.constant dense<0.000000e+00> : vector<16x256xf32>
    %77 = tpu.matmul %76, %74, %cst_64 {dimension_numbers = #tpu.dot_dimension_numbers<[1], [0], [0], [1], [0, 0, 1, 1], [], []>} : vector<16x16xf32>, vector<16x256xf32>, vector<16x256xf32> -> vector<16x256xf32>
    %78 = arith.addf %69, %77 : vector<16x256xf32>
    %79 = vector.broadcast %3 : vector<16x1xf32> to vector<16x256xf32>
    %80 = arith.addf %78, %79 : vector<16x256xf32>
    %cst_65 = arith.constant 0.000000e+00 : f32
    %81 = vector.broadcast %cst_65 : f32 to vector<16x256xf32>
    %82 = arith.maximumf %80, %81 : vector<16x256xf32>
    %c0_66 = arith.constant 0 : index
    %c0_67 = arith.constant 0 : index
    %c0_68 = arith.constant 0 : index
    %83 = vector.load %arg5[%c0_66, %c0_67, %c0_68] : memref<2x16x1xf32, #tpu.memory_space<vmem>>, vector<1x16x1xf32>
    %84 = vector.shape_cast %83 : vector<1x16x1xf32> to vector<16x1xf32>
    %c0_69 = arith.constant 0 : index
    %c4_70 = arith.constant 4 : index
    %c0_71 = arith.constant 0 : index
    %c0_72 = arith.constant 0 : index
    %85 = vector.load %arg4[%c0_69, %c4_70, %c0_71, %c0_72] : memref<2x9x16x16xf32, #tpu.memory_space<vmem>>, vector<1x1x16x16xf32>
    %86 = vector.shape_cast %85 : vector<1x1x16x16xf32> to vector<16x16xf32>
    %cst_73 = arith.constant dense<0.000000e+00> : vector<16x256xf32>
    %87 = tpu.matmul %86, %82, %cst_73 {dimension_numbers = #tpu.dot_dimension_numbers<[1], [0], [0], [1], [0, 0, 1, 1], [], []>} : vector<16x16xf32>, vector<16x256xf32>, vector<16x256xf32> -> vector<16x256xf32>
    %c17_i32_74 = arith.constant 17 : i32
    %88 = tpu.dynamic_rotate %82 by %c17_i32_74 dim 1 : vector<16x256xf32>, i32 -> vector<16x256xf32>
    %c0_75 = arith.constant 0 : index
    %c0_76 = arith.constant 0 : index
    %c0_77 = arith.constant 0 : index
    %89 = vector.load %arg12[%c0_75, %c0_76, %c0_77] : memref<8x1x256xf32, #tpu.memory_space<vmem>>, vector<1x1x256xf32>
    %90 = vector.shape_cast %89 : vector<1x1x256xf32> to vector<1x256xf32>
    %91 = vector.broadcast %90 : vector<1x256xf32> to vector<16x256xf32>
    %92 = arith.mulf %88, %91 : vector<16x256xf32>
    %c0_78 = arith.constant 0 : index
    %c0_79 = arith.constant 0 : index
    %c0_80 = arith.constant 0 : index
    %c0_81 = arith.constant 0 : index
    %93 = vector.load %arg4[%c0_78, %c0_79, %c0_80, %c0_81] : memref<2x9x16x16xf32, #tpu.memory_space<vmem>>, vector<1x1x16x16xf32>
    %94 = vector.shape_cast %93 : vector<1x1x16x16xf32> to vector<16x16xf32>
    %cst_82 = arith.constant dense<0.000000e+00> : vector<16x256xf32>
    %95 = tpu.matmul %94, %92, %cst_82 {dimension_numbers = #tpu.dot_dimension_numbers<[1], [0], [0], [1], [0, 0, 1, 1], [], []>} : vector<16x16xf32>, vector<16x256xf32>, vector<16x256xf32> -> vector<16x256xf32>
    %96 = arith.addf %87, %95 : vector<16x256xf32>
    %c16_i32_83 = arith.constant 16 : i32
    %97 = tpu.dynamic_rotate %82 by %c16_i32_83 dim 1 : vector<16x256xf32>, i32 -> vector<16x256xf32>
    %c1_84 = arith.constant 1 : index
    %c0_85 = arith.constant 0 : index
    %c0_86 = arith.constant 0 : index
    %98 = vector.load %arg12[%c1_84, %c0_85, %c0_86] : memref<8x1x256xf32, #tpu.memory_space<vmem>>, vector<1x1x256xf32>
    %99 = vector.shape_cast %98 : vector<1x1x256xf32> to vector<1x256xf32>
    %100 = vector.broadcast %99 : vector<1x256xf32> to vector<16x256xf32>
    %101 = arith.mulf %97, %100 : vector<16x256xf32>
    %c0_87 = arith.constant 0 : index
    %c1_88 = arith.constant 1 : index
    %c0_89 = arith.constant 0 : index
    %c0_90 = arith.constant 0 : index
    %102 = vector.load %arg4[%c0_87, %c1_88, %c0_89, %c0_90] : memref<2x9x16x16xf32, #tpu.memory_space<vmem>>, vector<1x1x16x16xf32>
    %103 = vector.shape_cast %102 : vector<1x1x16x16xf32> to vector<16x16xf32>
    %cst_91 = arith.constant dense<0.000000e+00> : vector<16x256xf32>
    %104 = tpu.matmul %103, %101, %cst_91 {dimension_numbers = #tpu.dot_dimension_numbers<[1], [0], [0], [1], [0, 0, 1, 1], [], []>} : vector<16x16xf32>, vector<16x256xf32>, vector<16x256xf32> -> vector<16x256xf32>
    %105 = arith.addf %96, %104 : vector<16x256xf32>
    %c15_i32_92 = arith.constant 15 : i32
    %106 = tpu.dynamic_rotate %82 by %c15_i32_92 dim 1 : vector<16x256xf32>, i32 -> vector<16x256xf32>
    %c2_93 = arith.constant 2 : index
    %c0_94 = arith.constant 0 : index
    %c0_95 = arith.constant 0 : index
    %107 = vector.load %arg12[%c2_93, %c0_94, %c0_95] : memref<8x1x256xf32, #tpu.memory_space<vmem>>, vector<1x1x256xf32>
    %108 = vector.shape_cast %107 : vector<1x1x256xf32> to vector<1x256xf32>
    %109 = vector.broadcast %108 : vector<1x256xf32> to vector<16x256xf32>
    %110 = arith.mulf %106, %109 : vector<16x256xf32>
    %c0_96 = arith.constant 0 : index
    %c2_97 = arith.constant 2 : index
    %c0_98 = arith.constant 0 : index
    %c0_99 = arith.constant 0 : index
    %111 = vector.load %arg4[%c0_96, %c2_97, %c0_98, %c0_99] : memref<2x9x16x16xf32, #tpu.memory_space<vmem>>, vector<1x1x16x16xf32>
    %112 = vector.shape_cast %111 : vector<1x1x16x16xf32> to vector<16x16xf32>
    %cst_100 = arith.constant dense<0.000000e+00> : vector<16x256xf32>
    %113 = tpu.matmul %112, %110, %cst_100 {dimension_numbers = #tpu.dot_dimension_numbers<[1], [0], [0], [1], [0, 0, 1, 1], [], []>} : vector<16x16xf32>, vector<16x256xf32>, vector<16x256xf32> -> vector<16x256xf32>
    %114 = arith.addf %105, %113 : vector<16x256xf32>
    %c1_i32_101 = arith.constant 1 : i32
    %115 = tpu.dynamic_rotate %82 by %c1_i32_101 dim 1 : vector<16x256xf32>, i32 -> vector<16x256xf32>
    %c3_102 = arith.constant 3 : index
    %c0_103 = arith.constant 0 : index
    %c0_104 = arith.constant 0 : index
    %116 = vector.load %arg12[%c3_102, %c0_103, %c0_104] : memref<8x1x256xf32, #tpu.memory_space<vmem>>, vector<1x1x256xf32>
    %117 = vector.shape_cast %116 : vector<1x1x256xf32> to vector<1x256xf32>
    %118 = vector.broadcast %117 : vector<1x256xf32> to vector<16x256xf32>
    %119 = arith.mulf %115, %118 : vector<16x256xf32>
    %c0_105 = arith.constant 0 : index
    %c3_106 = arith.constant 3 : index
    %c0_107 = arith.constant 0 : index
    %c0_108 = arith.constant 0 : index
    %120 = vector.load %arg4[%c0_105, %c3_106, %c0_107, %c0_108] : memref<2x9x16x16xf32, #tpu.memory_space<vmem>>, vector<1x1x16x16xf32>
    %121 = vector.shape_cast %120 : vector<1x1x16x16xf32> to vector<16x16xf32>
    %cst_109 = arith.constant dense<0.000000e+00> : vector<16x256xf32>
    %122 = tpu.matmul %121, %119, %cst_109 {dimension_numbers = #tpu.dot_dimension_numbers<[1], [0], [0], [1], [0, 0, 1, 1], [], []>} : vector<16x16xf32>, vector<16x256xf32>, vector<16x256xf32> -> vector<16x256xf32>
    %123 = arith.addf %114, %122 : vector<16x256xf32>
    %c255_i32_110 = arith.constant 255 : i32
    %124 = tpu.dynamic_rotate %82 by %c255_i32_110 dim 1 : vector<16x256xf32>, i32 -> vector<16x256xf32>
    %c4_111 = arith.constant 4 : index
    %c0_112 = arith.constant 0 : index
    %c0_113 = arith.constant 0 : index
    %125 = vector.load %arg12[%c4_111, %c0_112, %c0_113] : memref<8x1x256xf32, #tpu.memory_space<vmem>>, vector<1x1x256xf32>
    %126 = vector.shape_cast %125 : vector<1x1x256xf32> to vector<1x256xf32>
    %127 = vector.broadcast %126 : vector<1x256xf32> to vector<16x256xf32>
    %128 = arith.mulf %124, %127 : vector<16x256xf32>
    %c0_114 = arith.constant 0 : index
    %c5_115 = arith.constant 5 : index
    %c0_116 = arith.constant 0 : index
    %c0_117 = arith.constant 0 : index
    %129 = vector.load %arg4[%c0_114, %c5_115, %c0_116, %c0_117] : memref<2x9x16x16xf32, #tpu.memory_space<vmem>>, vector<1x1x16x16xf32>
    %130 = vector.shape_cast %129 : vector<1x1x16x16xf32> to vector<16x16xf32>
    %cst_118 = arith.constant dense<0.000000e+00> : vector<16x256xf32>
    %131 = tpu.matmul %130, %128, %cst_118 {dimension_numbers = #tpu.dot_dimension_numbers<[1], [0], [0], [1], [0, 0, 1, 1], [], []>} : vector<16x16xf32>, vector<16x256xf32>, vector<16x256xf32> -> vector<16x256xf32>
    %132 = arith.addf %123, %131 : vector<16x256xf32>
    %c241_i32_119 = arith.constant 241 : i32
    %133 = tpu.dynamic_rotate %82 by %c241_i32_119 dim 1 : vector<16x256xf32>, i32 -> vector<16x256xf32>
    %c5_120 = arith.constant 5 : index
    %c0_121 = arith.constant 0 : index
    %c0_122 = arith.constant 0 : index
    %134 = vector.load %arg12[%c5_120, %c0_121, %c0_122] : memref<8x1x256xf32, #tpu.memory_space<vmem>>, vector<1x1x256xf32>
    %135 = vector.shape_cast %134 : vector<1x1x256xf32> to vector<1x256xf32>
    %136 = vector.broadcast %135 : vector<1x256xf32> to vector<16x256xf32>
    %137 = arith.mulf %133, %136 : vector<16x256xf32>
    %c0_123 = arith.constant 0 : index
    %c6_124 = arith.constant 6 : index
    %c0_125 = arith.constant 0 : index
    %c0_126 = arith.constant 0 : index
    %138 = vector.load %arg4[%c0_123, %c6_124, %c0_125, %c0_126] : memref<2x9x16x16xf32, #tpu.memory_space<vmem>>, vector<1x1x16x16xf32>
    %139 = vector.shape_cast %138 : vector<1x1x16x16xf32> to vector<16x16xf32>
    %cst_127 = arith.constant dense<0.000000e+00> : vector<16x256xf32>
    %140 = tpu.matmul %139, %137, %cst_127 {dimension_numbers = #tpu.dot_dimension_numbers<[1], [0], [0], [1], [0, 0, 1, 1], [], []>} : vector<16x16xf32>, vector<16x256xf32>, vector<16x256xf32> -> vector<16x256xf32>
    %141 = arith.addf %132, %140 : vector<16x256xf32>
    %c240_i32_128 = arith.constant 240 : i32
    %142 = tpu.dynamic_rotate %82 by %c240_i32_128 dim 1 : vector<16x256xf32>, i32 -> vector<16x256xf32>
    %c6_129 = arith.constant 6 : index
    %c0_130 = arith.constant 0 : index
    %c0_131 = arith.constant 0 : index
    %143 = vector.load %arg12[%c6_129, %c0_130, %c0_131] : memref<8x1x256xf32, #tpu.memory_space<vmem>>, vector<1x1x256xf32>
    %144 = vector.shape_cast %143 : vector<1x1x256xf32> to vector<1x256xf32>
    %145 = vector.broadcast %144 : vector<1x256xf32> to vector<16x256xf32>
    %146 = arith.mulf %142, %145 : vector<16x256xf32>
    %c0_132 = arith.constant 0 : index
    %c7_133 = arith.constant 7 : index
    %c0_134 = arith.constant 0 : index
    %c0_135 = arith.constant 0 : index
    %147 = vector.load %arg4[%c0_132, %c7_133, %c0_134, %c0_135] : memref<2x9x16x16xf32, #tpu.memory_space<vmem>>, vector<1x1x16x16xf32>
    %148 = vector.shape_cast %147 : vector<1x1x16x16xf32> to vector<16x16xf32>
    %cst_136 = arith.constant dense<0.000000e+00> : vector<16x256xf32>
    %149 = tpu.matmul %148, %146, %cst_136 {dimension_numbers = #tpu.dot_dimension_numbers<[1], [0], [0], [1], [0, 0, 1, 1], [], []>} : vector<16x16xf32>, vector<16x256xf32>, vector<16x256xf32> -> vector<16x256xf32>
    %150 = arith.addf %141, %149 : vector<16x256xf32>
    %c239_i32_137 = arith.constant 239 : i32
    %151 = tpu.dynamic_rotate %82 by %c239_i32_137 dim 1 : vector<16x256xf32>, i32 -> vector<16x256xf32>
    %c7_138 = arith.constant 7 : index
    %c0_139 = arith.constant 0 : index
    %c0_140 = arith.constant 0 : index
    %152 = vector.load %arg12[%c7_138, %c0_139, %c0_140] : memref<8x1x256xf32, #tpu.memory_space<vmem>>, vector<1x1x256xf32>
    %153 = vector.shape_cast %152 : vector<1x1x256xf32> to vector<1x256xf32>
    %154 = vector.broadcast %153 : vector<1x256xf32> to vector<16x256xf32>
    %155 = arith.mulf %151, %154 : vector<16x256xf32>
    %c0_141 = arith.constant 0 : index
    %c8_142 = arith.constant 8 : index
    %c0_143 = arith.constant 0 : index
    %c0_144 = arith.constant 0 : index
    %156 = vector.load %arg4[%c0_141, %c8_142, %c0_143, %c0_144] : memref<2x9x16x16xf32, #tpu.memory_space<vmem>>, vector<1x1x16x16xf32>
    %157 = vector.shape_cast %156 : vector<1x1x16x16xf32> to vector<16x16xf32>
    %cst_145 = arith.constant dense<0.000000e+00> : vector<16x256xf32>
    %158 = tpu.matmul %157, %155, %cst_145 {dimension_numbers = #tpu.dot_dimension_numbers<[1], [0], [0], [1], [0, 0, 1, 1], [], []>} : vector<16x16xf32>, vector<16x256xf32>, vector<16x256xf32> -> vector<16x256xf32>
    %159 = arith.addf %150, %158 : vector<16x256xf32>
    %160 = vector.broadcast %84 : vector<16x1xf32> to vector<16x256xf32>
    %161 = arith.addf %159, %160 : vector<16x256xf32>
    %cst_146 = arith.constant dense<0.000000e+00> : vector<16xf32>
    %162 = vector.multi_reduction <add>, %161, %cst_146 [1] : vector<16x256xf32> to vector<16xf32>
    %163 = vector.shape_cast %162 : vector<16xf32> to vector<16x1xf32>
    %cst_147 = arith.constant 3.906250e-03 : f32
    %164 = vector.broadcast %cst_147 : f32 to vector<16x1xf32>
    %165 = arith.mulf %163, %164 : vector<16x1xf32>
    %c0_148 = arith.constant 0 : index
    %c0_149 = arith.constant 0 : index
    %c0_150 = arith.constant 0 : index
    %166 = vector.load %arg6[%c0_148, %c0_149, %c0_150] : memref<2x16x4xf32, #tpu.memory_space<vmem>>, vector<1x16x4xf32>
    %167 = vector.shape_cast %166 : vector<1x16x4xf32> to vector<16x4xf32>
    %168 = vector.broadcast %165 : vector<16x1xf32> to vector<16x4xf32>
    %169 = arith.mulf %167, %168 : vector<16x4xf32>
    %cst_151 = arith.constant dense<0.000000e+00> : vector<4xf32>
    %170 = vector.multi_reduction <add>, %169, %cst_151 [0] : vector<16x4xf32> to vector<4xf32>
    %171 = vector.shape_cast %170 : vector<4xf32> to vector<1x4xf32>
    %c0_152 = arith.constant 0 : index
    %c0_153 = arith.constant 0 : index
    %c0_154 = arith.constant 0 : index
    %172 = vector.load %arg7[%c0_152, %c0_153, %c0_154] : memref<2x1x4xf32, #tpu.memory_space<vmem>>, vector<1x1x4xf32>
    %173 = vector.shape_cast %172 : vector<1x1x4xf32> to vector<1x4xf32>
    %174 = arith.addf %171, %173 : vector<1x4xf32>
    %cst_155 = arith.constant 0.000000e+00 : f32
    %175 = vector.broadcast %cst_155 : f32 to vector<1x4xf32>
    %176 = arith.maximumf %174, %175 : vector<1x4xf32>
    %c0_156 = arith.constant 0 : index
    %c0_157 = arith.constant 0 : index
    %c0_158 = arith.constant 0 : index
    %177 = vector.load %arg8[%c0_156, %c0_157, %c0_158] : memref<2x16x4xf32, #tpu.memory_space<vmem>>, vector<1x16x4xf32>
    %178 = vector.shape_cast %177 : vector<1x16x4xf32> to vector<16x4xf32>
    %179 = vector.broadcast %176 : vector<1x4xf32> to vector<16x4xf32>
    %180 = arith.mulf %178, %179 : vector<16x4xf32>
    %cst_159 = arith.constant dense<0.000000e+00> : vector<16xf32>
    %181 = vector.multi_reduction <add>, %180, %cst_159 [1] : vector<16x4xf32> to vector<16xf32>
    %182 = vector.shape_cast %181 : vector<16xf32> to vector<16x1xf32>
    %c0_160 = arith.constant 0 : index
    %c0_161 = arith.constant 0 : index
    %c0_162 = arith.constant 0 : index
    %183 = vector.load %arg9[%c0_160, %c0_161, %c0_162] : memref<2x16x1xf32, #tpu.memory_space<vmem>>, vector<1x16x1xf32>
    %184 = vector.shape_cast %183 : vector<1x16x1xf32> to vector<16x1xf32>
    %185 = arith.addf %182, %184 : vector<16x1xf32>
    %186 = arith.negf %185 : vector<16x1xf32>
    %187 = math.exp %186 : vector<16x1xf32>
    %cst_163 = arith.constant 1.000000e+00 : f32
    %188 = vector.broadcast %cst_163 : f32 to vector<16x1xf32>
    %189 = arith.addf %188, %187 : vector<16x1xf32>
    %190 = arith.divf %188, %189 : vector<16x1xf32>
    %191 = vector.broadcast %190 : vector<16x1xf32> to vector<16x256xf32>
    %192 = arith.mulf %161, %191 : vector<16x256xf32>
    %193 = arith.addf %192, %1 : vector<16x256xf32>
    %c1_164 = arith.constant 1 : index
    %c0_165 = arith.constant 0 : index
    %c0_166 = arith.constant 0 : index
    %194 = vector.load %arg3[%c1_164, %c0_165, %c0_166] : memref<2x16x1xf32, #tpu.memory_space<vmem>>, vector<1x16x1xf32>
    %195 = vector.shape_cast %194 : vector<1x16x1xf32> to vector<16x1xf32>
    %c1_167 = arith.constant 1 : index
    %c4_168 = arith.constant 4 : index
    %c0_169 = arith.constant 0 : index
    %c0_170 = arith.constant 0 : index
    %196 = vector.load %arg2[%c1_167, %c4_168, %c0_169, %c0_170] : memref<2x9x16x16xf32, #tpu.memory_space<vmem>>, vector<1x1x16x16xf32>
    %197 = vector.shape_cast %196 : vector<1x1x16x16xf32> to vector<16x16xf32>
    %cst_171 = arith.constant dense<0.000000e+00> : vector<16x256xf32>
    %198 = tpu.matmul %197, %193, %cst_171 {dimension_numbers = #tpu.dot_dimension_numbers<[1], [0], [0], [1], [0, 0, 1, 1], [], []>} : vector<16x16xf32>, vector<16x256xf32>, vector<16x256xf32> -> vector<16x256xf32>
    %c17_i32_172 = arith.constant 17 : i32
    %199 = tpu.dynamic_rotate %193 by %c17_i32_172 dim 1 : vector<16x256xf32>, i32 -> vector<16x256xf32>
    %c0_173 = arith.constant 0 : index
    %c0_174 = arith.constant 0 : index
    %c0_175 = arith.constant 0 : index
    %200 = vector.load %arg12[%c0_173, %c0_174, %c0_175] : memref<8x1x256xf32, #tpu.memory_space<vmem>>, vector<1x1x256xf32>
    %201 = vector.shape_cast %200 : vector<1x1x256xf32> to vector<1x256xf32>
    %202 = vector.broadcast %201 : vector<1x256xf32> to vector<16x256xf32>
    %203 = arith.mulf %199, %202 : vector<16x256xf32>
    %c1_176 = arith.constant 1 : index
    %c0_177 = arith.constant 0 : index
    %c0_178 = arith.constant 0 : index
    %c0_179 = arith.constant 0 : index
    %204 = vector.load %arg2[%c1_176, %c0_177, %c0_178, %c0_179] : memref<2x9x16x16xf32, #tpu.memory_space<vmem>>, vector<1x1x16x16xf32>
    %205 = vector.shape_cast %204 : vector<1x1x16x16xf32> to vector<16x16xf32>
    %cst_180 = arith.constant dense<0.000000e+00> : vector<16x256xf32>
    %206 = tpu.matmul %205, %203, %cst_180 {dimension_numbers = #tpu.dot_dimension_numbers<[1], [0], [0], [1], [0, 0, 1, 1], [], []>} : vector<16x16xf32>, vector<16x256xf32>, vector<16x256xf32> -> vector<16x256xf32>
    %207 = arith.addf %198, %206 : vector<16x256xf32>
    %c16_i32_181 = arith.constant 16 : i32
    %208 = tpu.dynamic_rotate %193 by %c16_i32_181 dim 1 : vector<16x256xf32>, i32 -> vector<16x256xf32>
    %c1_182 = arith.constant 1 : index
    %c0_183 = arith.constant 0 : index
    %c0_184 = arith.constant 0 : index
    %209 = vector.load %arg12[%c1_182, %c0_183, %c0_184] : memref<8x1x256xf32, #tpu.memory_space<vmem>>, vector<1x1x256xf32>
    %210 = vector.shape_cast %209 : vector<1x1x256xf32> to vector<1x256xf32>
    %211 = vector.broadcast %210 : vector<1x256xf32> to vector<16x256xf32>
    %212 = arith.mulf %208, %211 : vector<16x256xf32>
    %c1_185 = arith.constant 1 : index
    %c1_186 = arith.constant 1 : index
    %c0_187 = arith.constant 0 : index
    %c0_188 = arith.constant 0 : index
    %213 = vector.load %arg2[%c1_185, %c1_186, %c0_187, %c0_188] : memref<2x9x16x16xf32, #tpu.memory_space<vmem>>, vector<1x1x16x16xf32>
    %214 = vector.shape_cast %213 : vector<1x1x16x16xf32> to vector<16x16xf32>
    %cst_189 = arith.constant dense<0.000000e+00> : vector<16x256xf32>
    %215 = tpu.matmul %214, %212, %cst_189 {dimension_numbers = #tpu.dot_dimension_numbers<[1], [0], [0], [1], [0, 0, 1, 1], [], []>} : vector<16x16xf32>, vector<16x256xf32>, vector<16x256xf32> -> vector<16x256xf32>
    %216 = arith.addf %207, %215 : vector<16x256xf32>
    %c15_i32_190 = arith.constant 15 : i32
    %217 = tpu.dynamic_rotate %193 by %c15_i32_190 dim 1 : vector<16x256xf32>, i32 -> vector<16x256xf32>
    %c2_191 = arith.constant 2 : index
    %c0_192 = arith.constant 0 : index
    %c0_193 = arith.constant 0 : index
    %218 = vector.load %arg12[%c2_191, %c0_192, %c0_193] : memref<8x1x256xf32, #tpu.memory_space<vmem>>, vector<1x1x256xf32>
    %219 = vector.shape_cast %218 : vector<1x1x256xf32> to vector<1x256xf32>
    %220 = vector.broadcast %219 : vector<1x256xf32> to vector<16x256xf32>
    %221 = arith.mulf %217, %220 : vector<16x256xf32>
    %c1_194 = arith.constant 1 : index
    %c2_195 = arith.constant 2 : index
    %c0_196 = arith.constant 0 : index
    %c0_197 = arith.constant 0 : index
    %222 = vector.load %arg2[%c1_194, %c2_195, %c0_196, %c0_197] : memref<2x9x16x16xf32, #tpu.memory_space<vmem>>, vector<1x1x16x16xf32>
    %223 = vector.shape_cast %222 : vector<1x1x16x16xf32> to vector<16x16xf32>
    %cst_198 = arith.constant dense<0.000000e+00> : vector<16x256xf32>
    %224 = tpu.matmul %223, %221, %cst_198 {dimension_numbers = #tpu.dot_dimension_numbers<[1], [0], [0], [1], [0, 0, 1, 1], [], []>} : vector<16x16xf32>, vector<16x256xf32>, vector<16x256xf32> -> vector<16x256xf32>
    %225 = arith.addf %216, %224 : vector<16x256xf32>
    %c1_i32_199 = arith.constant 1 : i32
    %226 = tpu.dynamic_rotate %193 by %c1_i32_199 dim 1 : vector<16x256xf32>, i32 -> vector<16x256xf32>
    %c3_200 = arith.constant 3 : index
    %c0_201 = arith.constant 0 : index
    %c0_202 = arith.constant 0 : index
    %227 = vector.load %arg12[%c3_200, %c0_201, %c0_202] : memref<8x1x256xf32, #tpu.memory_space<vmem>>, vector<1x1x256xf32>
    %228 = vector.shape_cast %227 : vector<1x1x256xf32> to vector<1x256xf32>
    %229 = vector.broadcast %228 : vector<1x256xf32> to vector<16x256xf32>
    %230 = arith.mulf %226, %229 : vector<16x256xf32>
    %c1_203 = arith.constant 1 : index
    %c3_204 = arith.constant 3 : index
    %c0_205 = arith.constant 0 : index
    %c0_206 = arith.constant 0 : index
    %231 = vector.load %arg2[%c1_203, %c3_204, %c0_205, %c0_206] : memref<2x9x16x16xf32, #tpu.memory_space<vmem>>, vector<1x1x16x16xf32>
    %232 = vector.shape_cast %231 : vector<1x1x16x16xf32> to vector<16x16xf32>
    %cst_207 = arith.constant dense<0.000000e+00> : vector<16x256xf32>
    %233 = tpu.matmul %232, %230, %cst_207 {dimension_numbers = #tpu.dot_dimension_numbers<[1], [0], [0], [1], [0, 0, 1, 1], [], []>} : vector<16x16xf32>, vector<16x256xf32>, vector<16x256xf32> -> vector<16x256xf32>
    %234 = arith.addf %225, %233 : vector<16x256xf32>
    %c255_i32_208 = arith.constant 255 : i32
    %235 = tpu.dynamic_rotate %193 by %c255_i32_208 dim 1 : vector<16x256xf32>, i32 -> vector<16x256xf32>
    %c4_209 = arith.constant 4 : index
    %c0_210 = arith.constant 0 : index
    %c0_211 = arith.constant 0 : index
    %236 = vector.load %arg12[%c4_209, %c0_210, %c0_211] : memref<8x1x256xf32, #tpu.memory_space<vmem>>, vector<1x1x256xf32>
    %237 = vector.shape_cast %236 : vector<1x1x256xf32> to vector<1x256xf32>
    %238 = vector.broadcast %237 : vector<1x256xf32> to vector<16x256xf32>
    %239 = arith.mulf %235, %238 : vector<16x256xf32>
    %c1_212 = arith.constant 1 : index
    %c5_213 = arith.constant 5 : index
    %c0_214 = arith.constant 0 : index
    %c0_215 = arith.constant 0 : index
    %240 = vector.load %arg2[%c1_212, %c5_213, %c0_214, %c0_215] : memref<2x9x16x16xf32, #tpu.memory_space<vmem>>, vector<1x1x16x16xf32>
    %241 = vector.shape_cast %240 : vector<1x1x16x16xf32> to vector<16x16xf32>
    %cst_216 = arith.constant dense<0.000000e+00> : vector<16x256xf32>
    %242 = tpu.matmul %241, %239, %cst_216 {dimension_numbers = #tpu.dot_dimension_numbers<[1], [0], [0], [1], [0, 0, 1, 1], [], []>} : vector<16x16xf32>, vector<16x256xf32>, vector<16x256xf32> -> vector<16x256xf32>
    %243 = arith.addf %234, %242 : vector<16x256xf32>
    %c241_i32_217 = arith.constant 241 : i32
    %244 = tpu.dynamic_rotate %193 by %c241_i32_217 dim 1 : vector<16x256xf32>, i32 -> vector<16x256xf32>
    %c5_218 = arith.constant 5 : index
    %c0_219 = arith.constant 0 : index
    %c0_220 = arith.constant 0 : index
    %245 = vector.load %arg12[%c5_218, %c0_219, %c0_220] : memref<8x1x256xf32, #tpu.memory_space<vmem>>, vector<1x1x256xf32>
    %246 = vector.shape_cast %245 : vector<1x1x256xf32> to vector<1x256xf32>
    %247 = vector.broadcast %246 : vector<1x256xf32> to vector<16x256xf32>
    %248 = arith.mulf %244, %247 : vector<16x256xf32>
    %c1_221 = arith.constant 1 : index
    %c6_222 = arith.constant 6 : index
    %c0_223 = arith.constant 0 : index
    %c0_224 = arith.constant 0 : index
    %249 = vector.load %arg2[%c1_221, %c6_222, %c0_223, %c0_224] : memref<2x9x16x16xf32, #tpu.memory_space<vmem>>, vector<1x1x16x16xf32>
    %250 = vector.shape_cast %249 : vector<1x1x16x16xf32> to vector<16x16xf32>
    %cst_225 = arith.constant dense<0.000000e+00> : vector<16x256xf32>
    %251 = tpu.matmul %250, %248, %cst_225 {dimension_numbers = #tpu.dot_dimension_numbers<[1], [0], [0], [1], [0, 0, 1, 1], [], []>} : vector<16x16xf32>, vector<16x256xf32>, vector<16x256xf32> -> vector<16x256xf32>
    %252 = arith.addf %243, %251 : vector<16x256xf32>
    %c240_i32_226 = arith.constant 240 : i32
    %253 = tpu.dynamic_rotate %193 by %c240_i32_226 dim 1 : vector<16x256xf32>, i32 -> vector<16x256xf32>
    %c6_227 = arith.constant 6 : index
    %c0_228 = arith.constant 0 : index
    %c0_229 = arith.constant 0 : index
    %254 = vector.load %arg12[%c6_227, %c0_228, %c0_229] : memref<8x1x256xf32, #tpu.memory_space<vmem>>, vector<1x1x256xf32>
    %255 = vector.shape_cast %254 : vector<1x1x256xf32> to vector<1x256xf32>
    %256 = vector.broadcast %255 : vector<1x256xf32> to vector<16x256xf32>
    %257 = arith.mulf %253, %256 : vector<16x256xf32>
    %c1_230 = arith.constant 1 : index
    %c7_231 = arith.constant 7 : index
    %c0_232 = arith.constant 0 : index
    %c0_233 = arith.constant 0 : index
    %258 = vector.load %arg2[%c1_230, %c7_231, %c0_232, %c0_233] : memref<2x9x16x16xf32, #tpu.memory_space<vmem>>, vector<1x1x16x16xf32>
    %259 = vector.shape_cast %258 : vector<1x1x16x16xf32> to vector<16x16xf32>
    %cst_234 = arith.constant dense<0.000000e+00> : vector<16x256xf32>
    %260 = tpu.matmul %259, %257, %cst_234 {dimension_numbers = #tpu.dot_dimension_numbers<[1], [0], [0], [1], [0, 0, 1, 1], [], []>} : vector<16x16xf32>, vector<16x256xf32>, vector<16x256xf32> -> vector<16x256xf32>
    %261 = arith.addf %252, %260 : vector<16x256xf32>
    %c239_i32_235 = arith.constant 239 : i32
    %262 = tpu.dynamic_rotate %193 by %c239_i32_235 dim 1 : vector<16x256xf32>, i32 -> vector<16x256xf32>
    %c7_236 = arith.constant 7 : index
    %c0_237 = arith.constant 0 : index
    %c0_238 = arith.constant 0 : index
    %263 = vector.load %arg12[%c7_236, %c0_237, %c0_238] : memref<8x1x256xf32, #tpu.memory_space<vmem>>, vector<1x1x256xf32>
    %264 = vector.shape_cast %263 : vector<1x1x256xf32> to vector<1x256xf32>
    %265 = vector.broadcast %264 : vector<1x256xf32> to vector<16x256xf32>
    %266 = arith.mulf %262, %265 : vector<16x256xf32>
    %c1_239 = arith.constant 1 : index
    %c8_240 = arith.constant 8 : index
    %c0_241 = arith.constant 0 : index
    %c0_242 = arith.constant 0 : index
    %267 = vector.load %arg2[%c1_239, %c8_240, %c0_241, %c0_242] : memref<2x9x16x16xf32, #tpu.memory_space<vmem>>, vector<1x1x16x16xf32>
    %268 = vector.shape_cast %267 : vector<1x1x16x16xf32> to vector<16x16xf32>
    %cst_243 = arith.constant dense<0.000000e+00> : vector<16x256xf32>
    %269 = tpu.matmul %268, %266, %cst_243 {dimension_numbers = #tpu.dot_dimension_numbers<[1], [0], [0], [1], [0, 0, 1, 1], [], []>} : vector<16x16xf32>, vector<16x256xf32>, vector<16x256xf32> -> vector<16x256xf32>
    %270 = arith.addf %261, %269 : vector<16x256xf32>
    %271 = vector.broadcast %195 : vector<16x1xf32> to vector<16x256xf32>
    %272 = arith.addf %270, %271 : vector<16x256xf32>
    %cst_244 = arith.constant 0.000000e+00 : f32
    %273 = vector.broadcast %cst_244 : f32 to vector<16x256xf32>
    %274 = arith.maximumf %272, %273 : vector<16x256xf32>
    %c1_245 = arith.constant 1 : index
    %c0_246 = arith.constant 0 : index
    %c0_247 = arith.constant 0 : index
    %275 = vector.load %arg5[%c1_245, %c0_246, %c0_247] : memref<2x16x1xf32, #tpu.memory_space<vmem>>, vector<1x16x1xf32>
    %276 = vector.shape_cast %275 : vector<1x16x1xf32> to vector<16x1xf32>
    %c1_248 = arith.constant 1 : index
    %c4_249 = arith.constant 4 : index
    %c0_250 = arith.constant 0 : index
    %c0_251 = arith.constant 0 : index
    %277 = vector.load %arg4[%c1_248, %c4_249, %c0_250, %c0_251] : memref<2x9x16x16xf32, #tpu.memory_space<vmem>>, vector<1x1x16x16xf32>
    %278 = vector.shape_cast %277 : vector<1x1x16x16xf32> to vector<16x16xf32>
    %cst_252 = arith.constant dense<0.000000e+00> : vector<16x256xf32>
    %279 = tpu.matmul %278, %274, %cst_252 {dimension_numbers = #tpu.dot_dimension_numbers<[1], [0], [0], [1], [0, 0, 1, 1], [], []>} : vector<16x16xf32>, vector<16x256xf32>, vector<16x256xf32> -> vector<16x256xf32>
    %c17_i32_253 = arith.constant 17 : i32
    %280 = tpu.dynamic_rotate %274 by %c17_i32_253 dim 1 : vector<16x256xf32>, i32 -> vector<16x256xf32>
    %c0_254 = arith.constant 0 : index
    %c0_255 = arith.constant 0 : index
    %c0_256 = arith.constant 0 : index
    %281 = vector.load %arg12[%c0_254, %c0_255, %c0_256] : memref<8x1x256xf32, #tpu.memory_space<vmem>>, vector<1x1x256xf32>
    %282 = vector.shape_cast %281 : vector<1x1x256xf32> to vector<1x256xf32>
    %283 = vector.broadcast %282 : vector<1x256xf32> to vector<16x256xf32>
    %284 = arith.mulf %280, %283 : vector<16x256xf32>
    %c1_257 = arith.constant 1 : index
    %c0_258 = arith.constant 0 : index
    %c0_259 = arith.constant 0 : index
    %c0_260 = arith.constant 0 : index
    %285 = vector.load %arg4[%c1_257, %c0_258, %c0_259, %c0_260] : memref<2x9x16x16xf32, #tpu.memory_space<vmem>>, vector<1x1x16x16xf32>
    %286 = vector.shape_cast %285 : vector<1x1x16x16xf32> to vector<16x16xf32>
    %cst_261 = arith.constant dense<0.000000e+00> : vector<16x256xf32>
    %287 = tpu.matmul %286, %284, %cst_261 {dimension_numbers = #tpu.dot_dimension_numbers<[1], [0], [0], [1], [0, 0, 1, 1], [], []>} : vector<16x16xf32>, vector<16x256xf32>, vector<16x256xf32> -> vector<16x256xf32>
    %288 = arith.addf %279, %287 : vector<16x256xf32>
    %c16_i32_262 = arith.constant 16 : i32
    %289 = tpu.dynamic_rotate %274 by %c16_i32_262 dim 1 : vector<16x256xf32>, i32 -> vector<16x256xf32>
    %c1_263 = arith.constant 1 : index
    %c0_264 = arith.constant 0 : index
    %c0_265 = arith.constant 0 : index
    %290 = vector.load %arg12[%c1_263, %c0_264, %c0_265] : memref<8x1x256xf32, #tpu.memory_space<vmem>>, vector<1x1x256xf32>
    %291 = vector.shape_cast %290 : vector<1x1x256xf32> to vector<1x256xf32>
    %292 = vector.broadcast %291 : vector<1x256xf32> to vector<16x256xf32>
    %293 = arith.mulf %289, %292 : vector<16x256xf32>
    %c1_266 = arith.constant 1 : index
    %c1_267 = arith.constant 1 : index
    %c0_268 = arith.constant 0 : index
    %c0_269 = arith.constant 0 : index
    %294 = vector.load %arg4[%c1_266, %c1_267, %c0_268, %c0_269] : memref<2x9x16x16xf32, #tpu.memory_space<vmem>>, vector<1x1x16x16xf32>
    %295 = vector.shape_cast %294 : vector<1x1x16x16xf32> to vector<16x16xf32>
    %cst_270 = arith.constant dense<0.000000e+00> : vector<16x256xf32>
    %296 = tpu.matmul %295, %293, %cst_270 {dimension_numbers = #tpu.dot_dimension_numbers<[1], [0], [0], [1], [0, 0, 1, 1], [], []>} : vector<16x16xf32>, vector<16x256xf32>, vector<16x256xf32> -> vector<16x256xf32>
    %297 = arith.addf %288, %296 : vector<16x256xf32>
    %c15_i32_271 = arith.constant 15 : i32
    %298 = tpu.dynamic_rotate %274 by %c15_i32_271 dim 1 : vector<16x256xf32>, i32 -> vector<16x256xf32>
    %c2_272 = arith.constant 2 : index
    %c0_273 = arith.constant 0 : index
    %c0_274 = arith.constant 0 : index
    %299 = vector.load %arg12[%c2_272, %c0_273, %c0_274] : memref<8x1x256xf32, #tpu.memory_space<vmem>>, vector<1x1x256xf32>
    %300 = vector.shape_cast %299 : vector<1x1x256xf32> to vector<1x256xf32>
    %301 = vector.broadcast %300 : vector<1x256xf32> to vector<16x256xf32>
    %302 = arith.mulf %298, %301 : vector<16x256xf32>
    %c1_275 = arith.constant 1 : index
    %c2_276 = arith.constant 2 : index
    %c0_277 = arith.constant 0 : index
    %c0_278 = arith.constant 0 : index
    %303 = vector.load %arg4[%c1_275, %c2_276, %c0_277, %c0_278] : memref<2x9x16x16xf32, #tpu.memory_space<vmem>>, vector<1x1x16x16xf32>
    %304 = vector.shape_cast %303 : vector<1x1x16x16xf32> to vector<16x16xf32>
    %cst_279 = arith.constant dense<0.000000e+00> : vector<16x256xf32>
    %305 = tpu.matmul %304, %302, %cst_279 {dimension_numbers = #tpu.dot_dimension_numbers<[1], [0], [0], [1], [0, 0, 1, 1], [], []>} : vector<16x16xf32>, vector<16x256xf32>, vector<16x256xf32> -> vector<16x256xf32>
    %306 = arith.addf %297, %305 : vector<16x256xf32>
    %c1_i32_280 = arith.constant 1 : i32
    %307 = tpu.dynamic_rotate %274 by %c1_i32_280 dim 1 : vector<16x256xf32>, i32 -> vector<16x256xf32>
    %c3_281 = arith.constant 3 : index
    %c0_282 = arith.constant 0 : index
    %c0_283 = arith.constant 0 : index
    %308 = vector.load %arg12[%c3_281, %c0_282, %c0_283] : memref<8x1x256xf32, #tpu.memory_space<vmem>>, vector<1x1x256xf32>
    %309 = vector.shape_cast %308 : vector<1x1x256xf32> to vector<1x256xf32>
    %310 = vector.broadcast %309 : vector<1x256xf32> to vector<16x256xf32>
    %311 = arith.mulf %307, %310 : vector<16x256xf32>
    %c1_284 = arith.constant 1 : index
    %c3_285 = arith.constant 3 : index
    %c0_286 = arith.constant 0 : index
    %c0_287 = arith.constant 0 : index
    %312 = vector.load %arg4[%c1_284, %c3_285, %c0_286, %c0_287] : memref<2x9x16x16xf32, #tpu.memory_space<vmem>>, vector<1x1x16x16xf32>
    %313 = vector.shape_cast %312 : vector<1x1x16x16xf32> to vector<16x16xf32>
    %cst_288 = arith.constant dense<0.000000e+00> : vector<16x256xf32>
    %314 = tpu.matmul %313, %311, %cst_288 {dimension_numbers = #tpu.dot_dimension_numbers<[1], [0], [0], [1], [0, 0, 1, 1], [], []>} : vector<16x16xf32>, vector<16x256xf32>, vector<16x256xf32> -> vector<16x256xf32>
    %315 = arith.addf %306, %314 : vector<16x256xf32>
    %c255_i32_289 = arith.constant 255 : i32
    %316 = tpu.dynamic_rotate %274 by %c255_i32_289 dim 1 : vector<16x256xf32>, i32 -> vector<16x256xf32>
    %c4_290 = arith.constant 4 : index
    %c0_291 = arith.constant 0 : index
    %c0_292 = arith.constant 0 : index
    %317 = vector.load %arg12[%c4_290, %c0_291, %c0_292] : memref<8x1x256xf32, #tpu.memory_space<vmem>>, vector<1x1x256xf32>
    %318 = vector.shape_cast %317 : vector<1x1x256xf32> to vector<1x256xf32>
    %319 = vector.broadcast %318 : vector<1x256xf32> to vector<16x256xf32>
    %320 = arith.mulf %316, %319 : vector<16x256xf32>
    %c1_293 = arith.constant 1 : index
    %c5_294 = arith.constant 5 : index
    %c0_295 = arith.constant 0 : index
    %c0_296 = arith.constant 0 : index
    %321 = vector.load %arg4[%c1_293, %c5_294, %c0_295, %c0_296] : memref<2x9x16x16xf32, #tpu.memory_space<vmem>>, vector<1x1x16x16xf32>
    %322 = vector.shape_cast %321 : vector<1x1x16x16xf32> to vector<16x16xf32>
    %cst_297 = arith.constant dense<0.000000e+00> : vector<16x256xf32>
    %323 = tpu.matmul %322, %320, %cst_297 {dimension_numbers = #tpu.dot_dimension_numbers<[1], [0], [0], [1], [0, 0, 1, 1], [], []>} : vector<16x16xf32>, vector<16x256xf32>, vector<16x256xf32> -> vector<16x256xf32>
    %324 = arith.addf %315, %323 : vector<16x256xf32>
    %c241_i32_298 = arith.constant 241 : i32
    %325 = tpu.dynamic_rotate %274 by %c241_i32_298 dim 1 : vector<16x256xf32>, i32 -> vector<16x256xf32>
    %c5_299 = arith.constant 5 : index
    %c0_300 = arith.constant 0 : index
    %c0_301 = arith.constant 0 : index
    %326 = vector.load %arg12[%c5_299, %c0_300, %c0_301] : memref<8x1x256xf32, #tpu.memory_space<vmem>>, vector<1x1x256xf32>
    %327 = vector.shape_cast %326 : vector<1x1x256xf32> to vector<1x256xf32>
    %328 = vector.broadcast %327 : vector<1x256xf32> to vector<16x256xf32>
    %329 = arith.mulf %325, %328 : vector<16x256xf32>
    %c1_302 = arith.constant 1 : index
    %c6_303 = arith.constant 6 : index
    %c0_304 = arith.constant 0 : index
    %c0_305 = arith.constant 0 : index
    %330 = vector.load %arg4[%c1_302, %c6_303, %c0_304, %c0_305] : memref<2x9x16x16xf32, #tpu.memory_space<vmem>>, vector<1x1x16x16xf32>
    %331 = vector.shape_cast %330 : vector<1x1x16x16xf32> to vector<16x16xf32>
    %cst_306 = arith.constant dense<0.000000e+00> : vector<16x256xf32>
    %332 = tpu.matmul %331, %329, %cst_306 {dimension_numbers = #tpu.dot_dimension_numbers<[1], [0], [0], [1], [0, 0, 1, 1], [], []>} : vector<16x16xf32>, vector<16x256xf32>, vector<16x256xf32> -> vector<16x256xf32>
    %333 = arith.addf %324, %332 : vector<16x256xf32>
    %c240_i32_307 = arith.constant 240 : i32
    %334 = tpu.dynamic_rotate %274 by %c240_i32_307 dim 1 : vector<16x256xf32>, i32 -> vector<16x256xf32>
    %c6_308 = arith.constant 6 : index
    %c0_309 = arith.constant 0 : index
    %c0_310 = arith.constant 0 : index
    %335 = vector.load %arg12[%c6_308, %c0_309, %c0_310] : memref<8x1x256xf32, #tpu.memory_space<vmem>>, vector<1x1x256xf32>
    %336 = vector.shape_cast %335 : vector<1x1x256xf32> to vector<1x256xf32>
    %337 = vector.broadcast %336 : vector<1x256xf32> to vector<16x256xf32>
    %338 = arith.mulf %334, %337 : vector<16x256xf32>
    %c1_311 = arith.constant 1 : index
    %c7_312 = arith.constant 7 : index
    %c0_313 = arith.constant 0 : index
    %c0_314 = arith.constant 0 : index
    %339 = vector.load %arg4[%c1_311, %c7_312, %c0_313, %c0_314] : memref<2x9x16x16xf32, #tpu.memory_space<vmem>>, vector<1x1x16x16xf32>
    %340 = vector.shape_cast %339 : vector<1x1x16x16xf32> to vector<16x16xf32>
    %cst_315 = arith.constant dense<0.000000e+00> : vector<16x256xf32>
    %341 = tpu.matmul %340, %338, %cst_315 {dimension_numbers = #tpu.dot_dimension_numbers<[1], [0], [0], [1], [0, 0, 1, 1], [], []>} : vector<16x16xf32>, vector<16x256xf32>, vector<16x256xf32> -> vector<16x256xf32>
    %342 = arith.addf %333, %341 : vector<16x256xf32>
    %c239_i32_316 = arith.constant 239 : i32
    %343 = tpu.dynamic_rotate %274 by %c239_i32_316 dim 1 : vector<16x256xf32>, i32 -> vector<16x256xf32>
    %c7_317 = arith.constant 7 : index
    %c0_318 = arith.constant 0 : index
    %c0_319 = arith.constant 0 : index
    %344 = vector.load %arg12[%c7_317, %c0_318, %c0_319] : memref<8x1x256xf32, #tpu.memory_space<vmem>>, vector<1x1x256xf32>
    %345 = vector.shape_cast %344 : vector<1x1x256xf32> to vector<1x256xf32>
    %346 = vector.broadcast %345 : vector<1x256xf32> to vector<16x256xf32>
    %347 = arith.mulf %343, %346 : vector<16x256xf32>
    %c1_320 = arith.constant 1 : index
    %c8_321 = arith.constant 8 : index
    %c0_322 = arith.constant 0 : index
    %c0_323 = arith.constant 0 : index
    %348 = vector.load %arg4[%c1_320, %c8_321, %c0_322, %c0_323] : memref<2x9x16x16xf32, #tpu.memory_space<vmem>>, vector<1x1x16x16xf32>
    %349 = vector.shape_cast %348 : vector<1x1x16x16xf32> to vector<16x16xf32>
    %cst_324 = arith.constant dense<0.000000e+00> : vector<16x256xf32>
    %350 = tpu.matmul %349, %347, %cst_324 {dimension_numbers = #tpu.dot_dimension_numbers<[1], [0], [0], [1], [0, 0, 1, 1], [], []>} : vector<16x16xf32>, vector<16x256xf32>, vector<16x256xf32> -> vector<16x256xf32>
    %351 = arith.addf %342, %350 : vector<16x256xf32>
    %352 = vector.broadcast %276 : vector<16x1xf32> to vector<16x256xf32>
    %353 = arith.addf %351, %352 : vector<16x256xf32>
    %cst_325 = arith.constant dense<0.000000e+00> : vector<16xf32>
    %354 = vector.multi_reduction <add>, %353, %cst_325 [1] : vector<16x256xf32> to vector<16xf32>
    %355 = vector.shape_cast %354 : vector<16xf32> to vector<16x1xf32>
    %cst_326 = arith.constant 3.906250e-03 : f32
    %356 = vector.broadcast %cst_326 : f32 to vector<16x1xf32>
    %357 = arith.mulf %355, %356 : vector<16x1xf32>
    %c1_327 = arith.constant 1 : index
    %c0_328 = arith.constant 0 : index
    %c0_329 = arith.constant 0 : index
    %358 = vector.load %arg6[%c1_327, %c0_328, %c0_329] : memref<2x16x4xf32, #tpu.memory_space<vmem>>, vector<1x16x4xf32>
    %359 = vector.shape_cast %358 : vector<1x16x4xf32> to vector<16x4xf32>
    %360 = vector.broadcast %357 : vector<16x1xf32> to vector<16x4xf32>
    %361 = arith.mulf %359, %360 : vector<16x4xf32>
    %cst_330 = arith.constant dense<0.000000e+00> : vector<4xf32>
    %362 = vector.multi_reduction <add>, %361, %cst_330 [0] : vector<16x4xf32> to vector<4xf32>
    %363 = vector.shape_cast %362 : vector<4xf32> to vector<1x4xf32>
    %c1_331 = arith.constant 1 : index
    %c0_332 = arith.constant 0 : index
    %c0_333 = arith.constant 0 : index
    %364 = vector.load %arg7[%c1_331, %c0_332, %c0_333] : memref<2x1x4xf32, #tpu.memory_space<vmem>>, vector<1x1x4xf32>
    %365 = vector.shape_cast %364 : vector<1x1x4xf32> to vector<1x4xf32>
    %366 = arith.addf %363, %365 : vector<1x4xf32>
    %cst_334 = arith.constant 0.000000e+00 : f32
    %367 = vector.broadcast %cst_334 : f32 to vector<1x4xf32>
    %368 = arith.maximumf %366, %367 : vector<1x4xf32>
    %c1_335 = arith.constant 1 : index
    %c0_336 = arith.constant 0 : index
    %c0_337 = arith.constant 0 : index
    %369 = vector.load %arg8[%c1_335, %c0_336, %c0_337] : memref<2x16x4xf32, #tpu.memory_space<vmem>>, vector<1x16x4xf32>
    %370 = vector.shape_cast %369 : vector<1x16x4xf32> to vector<16x4xf32>
    %371 = vector.broadcast %368 : vector<1x4xf32> to vector<16x4xf32>
    %372 = arith.mulf %370, %371 : vector<16x4xf32>
    %cst_338 = arith.constant dense<0.000000e+00> : vector<16xf32>
    %373 = vector.multi_reduction <add>, %372, %cst_338 [1] : vector<16x4xf32> to vector<16xf32>
    %374 = vector.shape_cast %373 : vector<16xf32> to vector<16x1xf32>
    %c1_339 = arith.constant 1 : index
    %c0_340 = arith.constant 0 : index
    %c0_341 = arith.constant 0 : index
    %375 = vector.load %arg9[%c1_339, %c0_340, %c0_341] : memref<2x16x1xf32, #tpu.memory_space<vmem>>, vector<1x16x1xf32>
    %376 = vector.shape_cast %375 : vector<1x16x1xf32> to vector<16x1xf32>
    %377 = arith.addf %374, %376 : vector<16x1xf32>
    %378 = arith.negf %377 : vector<16x1xf32>
    %379 = math.exp %378 : vector<16x1xf32>
    %cst_342 = arith.constant 1.000000e+00 : f32
    %380 = vector.broadcast %cst_342 : f32 to vector<16x1xf32>
    %381 = arith.addf %380, %379 : vector<16x1xf32>
    %382 = arith.divf %380, %381 : vector<16x1xf32>
    %383 = vector.broadcast %382 : vector<16x1xf32> to vector<16x256xf32>
    %384 = arith.mulf %353, %383 : vector<16x256xf32>
    %385 = arith.addf %384, %193 : vector<16x256xf32>
    %c0_343 = arith.constant 0 : index
    %c0_344 = arith.constant 0 : index
    %386 = vector.load %arg11[%c0_343, %c0_344] : memref<16x1xf32, #tpu.memory_space<vmem>>, vector<16x1xf32>
    %c0_345 = arith.constant 0 : index
    %c4_346 = arith.constant 4 : index
    %c0_347 = arith.constant 0 : index
    %c0_348 = arith.constant 0 : index
    %387 = vector.load %arg10[%c0_345, %c4_346, %c0_347, %c0_348] : memref<1x9x16x16xf32, #tpu.memory_space<vmem>>, vector<1x1x16x16xf32>
    %388 = vector.shape_cast %387 : vector<1x1x16x16xf32> to vector<16x16xf32>
    %cst_349 = arith.constant dense<0.000000e+00> : vector<16x256xf32>
    %389 = tpu.matmul %388, %385, %cst_349 {dimension_numbers = #tpu.dot_dimension_numbers<[1], [0], [0], [1], [0, 0, 1, 1], [], []>} : vector<16x16xf32>, vector<16x256xf32>, vector<16x256xf32> -> vector<16x256xf32>
    %c17_i32_350 = arith.constant 17 : i32
    %390 = tpu.dynamic_rotate %385 by %c17_i32_350 dim 1 : vector<16x256xf32>, i32 -> vector<16x256xf32>
    %c0_351 = arith.constant 0 : index
    %c0_352 = arith.constant 0 : index
    %c0_353 = arith.constant 0 : index
    %391 = vector.load %arg12[%c0_351, %c0_352, %c0_353] : memref<8x1x256xf32, #tpu.memory_space<vmem>>, vector<1x1x256xf32>
    %392 = vector.shape_cast %391 : vector<1x1x256xf32> to vector<1x256xf32>
    %393 = vector.broadcast %392 : vector<1x256xf32> to vector<16x256xf32>
    %394 = arith.mulf %390, %393 : vector<16x256xf32>
    %c0_354 = arith.constant 0 : index
    %c0_355 = arith.constant 0 : index
    %c0_356 = arith.constant 0 : index
    %c0_357 = arith.constant 0 : index
    %395 = vector.load %arg10[%c0_354, %c0_355, %c0_356, %c0_357] : memref<1x9x16x16xf32, #tpu.memory_space<vmem>>, vector<1x1x16x16xf32>
    %396 = vector.shape_cast %395 : vector<1x1x16x16xf32> to vector<16x16xf32>
    %cst_358 = arith.constant dense<0.000000e+00> : vector<16x256xf32>
    %397 = tpu.matmul %396, %394, %cst_358 {dimension_numbers = #tpu.dot_dimension_numbers<[1], [0], [0], [1], [0, 0, 1, 1], [], []>} : vector<16x16xf32>, vector<16x256xf32>, vector<16x256xf32> -> vector<16x256xf32>
    %398 = arith.addf %389, %397 : vector<16x256xf32>
    %c16_i32_359 = arith.constant 16 : i32
    %399 = tpu.dynamic_rotate %385 by %c16_i32_359 dim 1 : vector<16x256xf32>, i32 -> vector<16x256xf32>
    %c1_360 = arith.constant 1 : index
    %c0_361 = arith.constant 0 : index
    %c0_362 = arith.constant 0 : index
    %400 = vector.load %arg12[%c1_360, %c0_361, %c0_362] : memref<8x1x256xf32, #tpu.memory_space<vmem>>, vector<1x1x256xf32>
    %401 = vector.shape_cast %400 : vector<1x1x256xf32> to vector<1x256xf32>
    %402 = vector.broadcast %401 : vector<1x256xf32> to vector<16x256xf32>
    %403 = arith.mulf %399, %402 : vector<16x256xf32>
    %c0_363 = arith.constant 0 : index
    %c1_364 = arith.constant 1 : index
    %c0_365 = arith.constant 0 : index
    %c0_366 = arith.constant 0 : index
    %404 = vector.load %arg10[%c0_363, %c1_364, %c0_365, %c0_366] : memref<1x9x16x16xf32, #tpu.memory_space<vmem>>, vector<1x1x16x16xf32>
    %405 = vector.shape_cast %404 : vector<1x1x16x16xf32> to vector<16x16xf32>
    %cst_367 = arith.constant dense<0.000000e+00> : vector<16x256xf32>
    %406 = tpu.matmul %405, %403, %cst_367 {dimension_numbers = #tpu.dot_dimension_numbers<[1], [0], [0], [1], [0, 0, 1, 1], [], []>} : vector<16x16xf32>, vector<16x256xf32>, vector<16x256xf32> -> vector<16x256xf32>
    %407 = arith.addf %398, %406 : vector<16x256xf32>
    %c15_i32_368 = arith.constant 15 : i32
    %408 = tpu.dynamic_rotate %385 by %c15_i32_368 dim 1 : vector<16x256xf32>, i32 -> vector<16x256xf32>
    %c2_369 = arith.constant 2 : index
    %c0_370 = arith.constant 0 : index
    %c0_371 = arith.constant 0 : index
    %409 = vector.load %arg12[%c2_369, %c0_370, %c0_371] : memref<8x1x256xf32, #tpu.memory_space<vmem>>, vector<1x1x256xf32>
    %410 = vector.shape_cast %409 : vector<1x1x256xf32> to vector<1x256xf32>
    %411 = vector.broadcast %410 : vector<1x256xf32> to vector<16x256xf32>
    %412 = arith.mulf %408, %411 : vector<16x256xf32>
    %c0_372 = arith.constant 0 : index
    %c2_373 = arith.constant 2 : index
    %c0_374 = arith.constant 0 : index
    %c0_375 = arith.constant 0 : index
    %413 = vector.load %arg10[%c0_372, %c2_373, %c0_374, %c0_375] : memref<1x9x16x16xf32, #tpu.memory_space<vmem>>, vector<1x1x16x16xf32>
    %414 = vector.shape_cast %413 : vector<1x1x16x16xf32> to vector<16x16xf32>
    %cst_376 = arith.constant dense<0.000000e+00> : vector<16x256xf32>
    %415 = tpu.matmul %414, %412, %cst_376 {dimension_numbers = #tpu.dot_dimension_numbers<[1], [0], [0], [1], [0, 0, 1, 1], [], []>} : vector<16x16xf32>, vector<16x256xf32>, vector<16x256xf32> -> vector<16x256xf32>
    %416 = arith.addf %407, %415 : vector<16x256xf32>
    %c1_i32_377 = arith.constant 1 : i32
    %417 = tpu.dynamic_rotate %385 by %c1_i32_377 dim 1 : vector<16x256xf32>, i32 -> vector<16x256xf32>
    %c3_378 = arith.constant 3 : index
    %c0_379 = arith.constant 0 : index
    %c0_380 = arith.constant 0 : index
    %418 = vector.load %arg12[%c3_378, %c0_379, %c0_380] : memref<8x1x256xf32, #tpu.memory_space<vmem>>, vector<1x1x256xf32>
    %419 = vector.shape_cast %418 : vector<1x1x256xf32> to vector<1x256xf32>
    %420 = vector.broadcast %419 : vector<1x256xf32> to vector<16x256xf32>
    %421 = arith.mulf %417, %420 : vector<16x256xf32>
    %c0_381 = arith.constant 0 : index
    %c3_382 = arith.constant 3 : index
    %c0_383 = arith.constant 0 : index
    %c0_384 = arith.constant 0 : index
    %422 = vector.load %arg10[%c0_381, %c3_382, %c0_383, %c0_384] : memref<1x9x16x16xf32, #tpu.memory_space<vmem>>, vector<1x1x16x16xf32>
    %423 = vector.shape_cast %422 : vector<1x1x16x16xf32> to vector<16x16xf32>
    %cst_385 = arith.constant dense<0.000000e+00> : vector<16x256xf32>
    %424 = tpu.matmul %423, %421, %cst_385 {dimension_numbers = #tpu.dot_dimension_numbers<[1], [0], [0], [1], [0, 0, 1, 1], [], []>} : vector<16x16xf32>, vector<16x256xf32>, vector<16x256xf32> -> vector<16x256xf32>
    %425 = arith.addf %416, %424 : vector<16x256xf32>
    %c255_i32_386 = arith.constant 255 : i32
    %426 = tpu.dynamic_rotate %385 by %c255_i32_386 dim 1 : vector<16x256xf32>, i32 -> vector<16x256xf32>
    %c4_387 = arith.constant 4 : index
    %c0_388 = arith.constant 0 : index
    %c0_389 = arith.constant 0 : index
    %427 = vector.load %arg12[%c4_387, %c0_388, %c0_389] : memref<8x1x256xf32, #tpu.memory_space<vmem>>, vector<1x1x256xf32>
    %428 = vector.shape_cast %427 : vector<1x1x256xf32> to vector<1x256xf32>
    %429 = vector.broadcast %428 : vector<1x256xf32> to vector<16x256xf32>
    %430 = arith.mulf %426, %429 : vector<16x256xf32>
    %c0_390 = arith.constant 0 : index
    %c5_391 = arith.constant 5 : index
    %c0_392 = arith.constant 0 : index
    %c0_393 = arith.constant 0 : index
    %431 = vector.load %arg10[%c0_390, %c5_391, %c0_392, %c0_393] : memref<1x9x16x16xf32, #tpu.memory_space<vmem>>, vector<1x1x16x16xf32>
    %432 = vector.shape_cast %431 : vector<1x1x16x16xf32> to vector<16x16xf32>
    %cst_394 = arith.constant dense<0.000000e+00> : vector<16x256xf32>
    %433 = tpu.matmul %432, %430, %cst_394 {dimension_numbers = #tpu.dot_dimension_numbers<[1], [0], [0], [1], [0, 0, 1, 1], [], []>} : vector<16x16xf32>, vector<16x256xf32>, vector<16x256xf32> -> vector<16x256xf32>
    %434 = arith.addf %425, %433 : vector<16x256xf32>
    %c241_i32_395 = arith.constant 241 : i32
    %435 = tpu.dynamic_rotate %385 by %c241_i32_395 dim 1 : vector<16x256xf32>, i32 -> vector<16x256xf32>
    %c5_396 = arith.constant 5 : index
    %c0_397 = arith.constant 0 : index
    %c0_398 = arith.constant 0 : index
    %436 = vector.load %arg12[%c5_396, %c0_397, %c0_398] : memref<8x1x256xf32, #tpu.memory_space<vmem>>, vector<1x1x256xf32>
    %437 = vector.shape_cast %436 : vector<1x1x256xf32> to vector<1x256xf32>
    %438 = vector.broadcast %437 : vector<1x256xf32> to vector<16x256xf32>
    %439 = arith.mulf %435, %438 : vector<16x256xf32>
    %c0_399 = arith.constant 0 : index
    %c6_400 = arith.constant 6 : index
    %c0_401 = arith.constant 0 : index
    %c0_402 = arith.constant 0 : index
    %440 = vector.load %arg10[%c0_399, %c6_400, %c0_401, %c0_402] : memref<1x9x16x16xf32, #tpu.memory_space<vmem>>, vector<1x1x16x16xf32>
    %441 = vector.shape_cast %440 : vector<1x1x16x16xf32> to vector<16x16xf32>
    %cst_403 = arith.constant dense<0.000000e+00> : vector<16x256xf32>
    %442 = tpu.matmul %441, %439, %cst_403 {dimension_numbers = #tpu.dot_dimension_numbers<[1], [0], [0], [1], [0, 0, 1, 1], [], []>} : vector<16x16xf32>, vector<16x256xf32>, vector<16x256xf32> -> vector<16x256xf32>
    %443 = arith.addf %434, %442 : vector<16x256xf32>
    %c240_i32_404 = arith.constant 240 : i32
    %444 = tpu.dynamic_rotate %385 by %c240_i32_404 dim 1 : vector<16x256xf32>, i32 -> vector<16x256xf32>
    %c6_405 = arith.constant 6 : index
    %c0_406 = arith.constant 0 : index
    %c0_407 = arith.constant 0 : index
    %445 = vector.load %arg12[%c6_405, %c0_406, %c0_407] : memref<8x1x256xf32, #tpu.memory_space<vmem>>, vector<1x1x256xf32>
    %446 = vector.shape_cast %445 : vector<1x1x256xf32> to vector<1x256xf32>
    %447 = vector.broadcast %446 : vector<1x256xf32> to vector<16x256xf32>
    %448 = arith.mulf %444, %447 : vector<16x256xf32>
    %c0_408 = arith.constant 0 : index
    %c7_409 = arith.constant 7 : index
    %c0_410 = arith.constant 0 : index
    %c0_411 = arith.constant 0 : index
    %449 = vector.load %arg10[%c0_408, %c7_409, %c0_410, %c0_411] : memref<1x9x16x16xf32, #tpu.memory_space<vmem>>, vector<1x1x16x16xf32>
    %450 = vector.shape_cast %449 : vector<1x1x16x16xf32> to vector<16x16xf32>
    %cst_412 = arith.constant dense<0.000000e+00> : vector<16x256xf32>
    %451 = tpu.matmul %450, %448, %cst_412 {dimension_numbers = #tpu.dot_dimension_numbers<[1], [0], [0], [1], [0, 0, 1, 1], [], []>} : vector<16x16xf32>, vector<16x256xf32>, vector<16x256xf32> -> vector<16x256xf32>
    %452 = arith.addf %443, %451 : vector<16x256xf32>
    %c239_i32_413 = arith.constant 239 : i32
    %453 = tpu.dynamic_rotate %385 by %c239_i32_413 dim 1 : vector<16x256xf32>, i32 -> vector<16x256xf32>
    %c7_414 = arith.constant 7 : index
    %c0_415 = arith.constant 0 : index
    %c0_416 = arith.constant 0 : index
    %454 = vector.load %arg12[%c7_414, %c0_415, %c0_416] : memref<8x1x256xf32, #tpu.memory_space<vmem>>, vector<1x1x256xf32>
    %455 = vector.shape_cast %454 : vector<1x1x256xf32> to vector<1x256xf32>
    %456 = vector.broadcast %455 : vector<1x256xf32> to vector<16x256xf32>
    %457 = arith.mulf %453, %456 : vector<16x256xf32>
    %c0_417 = arith.constant 0 : index
    %c8_418 = arith.constant 8 : index
    %c0_419 = arith.constant 0 : index
    %c0_420 = arith.constant 0 : index
    %458 = vector.load %arg10[%c0_417, %c8_418, %c0_419, %c0_420] : memref<1x9x16x16xf32, #tpu.memory_space<vmem>>, vector<1x1x16x16xf32>
    %459 = vector.shape_cast %458 : vector<1x1x16x16xf32> to vector<16x16xf32>
    %cst_421 = arith.constant dense<0.000000e+00> : vector<16x256xf32>
    %460 = tpu.matmul %459, %457, %cst_421 {dimension_numbers = #tpu.dot_dimension_numbers<[1], [0], [0], [1], [0, 0, 1, 1], [], []>} : vector<16x16xf32>, vector<16x256xf32>, vector<16x256xf32> -> vector<16x256xf32>
    %461 = arith.addf %452, %460 : vector<16x256xf32>
    %462 = vector.broadcast %386 : vector<16x1xf32> to vector<16x256xf32>
    %463 = arith.addf %461, %462 : vector<16x256xf32>
    %464 = arith.addf %463, %1 : vector<16x256xf32>
    %c0_422 = arith.constant 0 : index
    %c0_423 = arith.constant 0 : index
    %c0_424 = arith.constant 0 : index
    %465 = vector.load %arg13[%c0_422, %c0_423, %c0_424] : memref<1x16x256xf32, #tpu.memory_space<vmem>>, vector<1x16x256xf32>
    %466 = vector.shape_cast %465 : vector<1x16x256xf32> to vector<16x256xf32>
    %467 = vector.shape_cast %464 : vector<16x256xf32> to vector<1x16x256xf32>
    tpu.vector_store %arg13[%c0_422, %c0_423, %c0_424], %467 {strides = array<i32>} : memref<1x16x256xf32, #tpu.memory_space<vmem>>, vector<1x16x256xf32>,
    return
  }
  func.func @transform_0(%arg0: i32) -> (i32, i32, i32) {
    %c0_i32 = arith.constant 0 : i32
    %c0_i32_0 = arith.constant 0 : i32
    %c0_i32_1 = arith.constant 0 : i32
    return %arg0, %c0_i32, %c0_i32_0 : i32, i32, i32
  }
  func.func @transform_1(%arg0: i32) -> (i32, i32, i32, i32) {
    %c0_i32 = arith.constant 0 : i32
    %c0_i32_0 = arith.constant 0 : i32
    %c0_i32_1 = arith.constant 0 : i32
    %c0_i32_2 = arith.constant 0 : i32
    %c0_i32_3 = arith.constant 0 : i32
    return %c0_i32, %c0_i32_0, %c0_i32_1, %c0_i32_2 : i32, i32, i32, i32
  }
  func.func @transform_2(%arg0: i32) -> (i32, i32, i32) {
    %c0_i32 = arith.constant 0 : i32
    %c0_i32_0 = arith.constant 0 : i32
    %c0_i32_1 = arith.constant 0 : i32
    %c0_i32_2 = arith.constant 0 : i32
    return %c0_i32, %c0_i32_0, %c0_i32_1 : i32, i32, i32
  }
  func.func @transform_3(%arg0: i32) -> (i32, i32, i32, i32) {
    %c0_i32 = arith.constant 0 : i32
    %c0_i32_0 = arith.constant 0 : i32
    %c0_i32_1 = arith.constant 0 : i32
    %c0_i32_2 = arith.constant 0 : i32
    %c0_i32_3 = arith.constant 0 : i32
    return %c0_i32, %c0_i32_0, %c0_i32_1, %c0_i32_2 : i32, i32, i32, i32
  }
  func.func @transform_4(%arg0: i32) -> (i32, i32, i32) {
    %c0_i32 = arith.constant 0 : i32
    %c0_i32_0 = arith.constant 0 : i32
    %c0_i32_1 = arith.constant 0 : i32
    %c0_i32_2 = arith.constant 0 : i32
    return %c0_i32, %c0_i32_0, %c0_i32_1 : i32, i32, i32
  }
  func.func @transform_5(%arg0: i32) -> (i32, i32, i32) {
    %c0_i32 = arith.constant 0 : i32
    %c0_i32_0 = arith.constant 0 : i32
    %c0_i32_1 = arith.constant 0 : i32
    %c0_i32_2 = arith.constant 0 : i32
    return %c0_i32, %c0_i32_0, %c0_i32_1 : i32, i32, i32
  }
  func.func @transform_6(%arg0: i32) -> (i32, i32, i32) {
    %c0_i32 = arith.constant 0 : i32
    %c0_i32_0 = arith.constant 0 : i32
    %c0_i32_1 = arith.constant 0 : i32
    %c0_i32_2 = arith.constant 0 : i32
    return %c0_i32, %c0_i32_0, %c0_i32_1 : i32, i32, i32
  }
  func.func @transform_7(%arg0: i32) -> (i32, i32, i32) {
    %c0_i32 = arith.constant 0 : i32
    %c0_i32_0 = arith.constant 0 : i32
    %c0_i32_1 = arith.constant 0 : i32
    %c0_i32_2 = arith.constant 0 : i32
    return %c0_i32, %c0_i32_0, %c0_i32_1 : i32, i32, i32
  }
  func.func @transform_8(%arg0: i32) -> (i32, i32, i32) {
    %c0_i32 = arith.constant 0 : i32
    %c0_i32_0 = arith.constant 0 : i32
    %c0_i32_1 = arith.constant 0 : i32
    %c0_i32_2 = arith.constant 0 : i32
    return %c0_i32, %c0_i32_0, %c0_i32_1 : i32, i32, i32
  }
  func.func @transform_9(%arg0: i32) -> (i32, i32, i32, i32) {
    %c0_i32 = arith.constant 0 : i32
    %c0_i32_0 = arith.constant 0 : i32
    %c0_i32_1 = arith.constant 0 : i32
    %c0_i32_2 = arith.constant 0 : i32
    %c0_i32_3 = arith.constant 0 : i32
    return %c0_i32, %c0_i32_0, %c0_i32_1, %c0_i32_2 : i32, i32, i32, i32
  }
  func.func @transform_10(%arg0: i32) -> (i32, i32) {
    %c0_i32 = arith.constant 0 : i32
    %c0_i32_0 = arith.constant 0 : i32
    %c0_i32_1 = arith.constant 0 : i32
    return %c0_i32, %c0_i32_0 : i32, i32
  }
  func.func @transform_11(%arg0: i32) -> (i32, i32, i32) {
    %c0_i32 = arith.constant 0 : i32
    %c0_i32_0 = arith.constant 0 : i32
    %c0_i32_1 = arith.constant 0 : i32
    %c0_i32_2 = arith.constant 0 : i32
    return %c0_i32, %c0_i32_0, %c0_i32_1 : i32, i32, i32
  }
  func.func @transform_12(%arg0: i32) -> (i32, i32, i32) {
    %c0_i32 = arith.constant 0 : i32
    %c0_i32_0 = arith.constant 0 : i32
    %c0_i32_1 = arith.constant 0 : i32
    return %arg0, %c0_i32, %c0_i32_0 : i32, i32, i32
  }
}

</mosaic_0001>

<llo_original>
// kernel: rca_group.1
$region0: #{rca_group.1}
  #allocation0 [shape = 'u32[]', space=smem, size = 0x4, offset = 0x4, fixed_abs, tag = 'smem constant byte address 0x4 - core index']
  #allocation1 [shape = 'u32[72,128]{1,0:T(1,128)}', space=vmem, size = 0x9000, scoped, tag = 'internal scratch']
  %s0 = inlined_call_operand.vmem [shape: f32[2,16,256], index: 0, kind: input, shape index: {}]
  %s1 = inlined_call_operand.vmem [shape: f32[2,9,16,16], index: 1, kind: input, shape index: {}]
  %s2 = inlined_call_operand.vmem [shape: f32[2,16,1], index: 2, kind: input, shape index: {}]
  %s3 = inlined_call_operand.vmem [shape: f32[2,9,16,16], index: 3, kind: input, shape index: {}]
  %s4 = inlined_call_operand.vmem [shape: f32[2,16,1], index: 4, kind: input, shape index: {}]
  %s5 = inlined_call_operand.vmem [shape: f32[2,16,4], index: 5, kind: input, shape index: {}]
  %s6 = inlined_call_operand.vmem [shape: f32[2,1,4], index: 6, kind: input, shape index: {}]
  %s7 = inlined_call_operand.vmem [shape: f32[2,16,4], index: 7, kind: input, shape index: {}]
  %s8 = inlined_call_operand.vmem [shape: f32[2,16,1], index: 8, kind: input, shape index: {}]
  %s9 = inlined_call_operand.hbm [shape: f32[1,9,16,16], index: 9, kind: input, shape index: {}]
  %s10 = inlined_call_operand.vmem [shape: f32[16,1], index: 10, kind: input, shape index: {}]
  %s11 = inlined_call_operand.vmem [shape: f32[8,1,256], index: 11, kind: input, shape index: {}]
  %s12 = inlined_call_operand.vmem [shape: f32[2,16,256], index: 12, kind: output, shape index: {}]
  %s13 = sld [smem:[#allocation0]]
  $region85: #{rca_group.1} parent=0
    _
  %s15 = ssub.s32 1, %s13
  %s16 = scalar_select 0, %s15, %s13
  $region1: #{rca_group.1} parent=0
    #allocation2 [shape = 'u8[73728]{0}', space=vmem, size = 0x12000, scoped, tag = 'input window, operand 9, single buffered']
    #allocation3 [shape = 's32[2]{0}', space=sflag, size = 0x8, scoped, tag = 'scoped memory for rca_group.1']
    %17 = vsyncpa [#allocation3], 0
    loop: start=0, step=1, limit=4
    $region2: #{rca_group.1} parent=1 // loop_pre_header
      _
    $region3: #{rca_group.1} parent=1 // loop_header
      %s19 = sphi 0, %s23
      %p20 = scmp.ge.s32.totalorder %s19, 4
      %s29 = sphi 0, %s31
      %s32 = sphi 0, %s29
      %s33 = sphi 0, %s32
      %s49 = sphi 0, %s33
      %s53 = sphi 0, %s53
      %s55 = sphi 0, %s53
      %s56 = sphi 0, %s55
      %s70 = sphi 0, %s56
      %s74 = sphi 0, %s74
      %s76 = sphi 0, %s74
      %s77 = sphi 0, %s76
      %s91 = sphi 0, %s77
      %s95 = sphi 0, %s95
      %s97 = sphi 0, %s95
      %s98 = sphi 0, %s97
      %s112 = sphi 0, %s98
      %s116 = sphi 0, %s116
      %s118 = sphi 0, %s116
      %s119 = sphi 0, %s118
      %s133 = sphi 0, %s119
      %s137 = sphi 0, %s137
      %s139 = sphi 0, %s137
      %s140 = sphi 0, %s139
      %s154 = sphi 0, %s140
      %s158 = sphi 0, %s158
      %s160 = sphi 0, %s158
      %s161 = sphi 0, %s160
      %s175 = sphi 0, %s161
      %s179 = sphi 0, %s179
      %s181 = sphi 0, %s179
      %s182 = sphi 0, %s181
      %s196 = sphi 0, %s182
      %s200 = sphi 0, %s200
      %s202 = sphi 0, %s200
      %s203 = sphi 0, %s202
      %s217 = sphi 0, %s203
      %s221 = sphi 0, %s221
      %s223 = sphi 0, %s221
      %s224 = sphi 0, %s223
      %s238 = sphi 0, %s224
      %s242 = sphi 0, %s242
      %s244 = sphi 0, %s242
      %s245 = sphi 0, %s244
      %s259 = sphi 0, %s245
      %s263 = sphi 0, %s263
      %s265 = sphi 0, %s263
      %s266 = sphi 0, %s265
      %s280 = sphi 0, %s266
      %s286 = sphi 0, %s288
      %s289 = sphi 0, %s286
      %s290 = sphi 0, %s289
      %s306 = sphi 0, %s290
    $region4: #{rca_group.1} parent=1 // loop_header_branch
      %22 = sbr.rel (%p20) target = $region8
    $region5: #{rca_group.1} parent=1 // loop_body
      %s24 = ssub.s32 %s19, 1
      %s25 = ssub.s32 %s19, 2
      %s26 = sadd.s32 %s19, 1
      %s27 = ssub.s32 %s19, %s26
      %p28 = scmp.eq.s32.totalorder %s27, 0
      %s30 = sadd.s32 %s29, 1
      %s31 = scalar_select %p28, %s29, %s30
      %p34 = pneg %p28
      %p35 = scmp.eq.s32.totalorder %s19, 1
      %p36 = por %p34, %p35
      %p37 = scmp.ne.s32.totalorder %s29, %s32
      %p38 = scmp.eq.s32.totalorder %s19, 0
      %p39 = por %p37, %p38
      %p40 = scmp.ne.s32.totalorder %s29, %s32
      %p41 = scmp.eq.s32.totalorder %s24, 1
      %p42 = por %p40, %p41
      %p43 = scmp.ne.s32.totalorder %s32, %s33
      %p44 = scmp.eq.s32.totalorder %s24, 0
      %p45 = por %p43, %p44
      %p46 = scmp.ne.s32.totalorder %s32, %s33
      %p47 = scmp.eq.s32.totalorder %s25, 1
      %p48 = por %p46, %p47
      %p50 = scmp.ne.s32.totalorder %s33, %s49
      %p51 = scmp.eq.s32.totalorder %s25, 0
      %p52 = por %p50, %p51
      %s54 = sadd.s32 %s53, 1
      %p57 = scmp.eq.s32.totalorder %s19, 1
      %p58 = scmp.ne.s32.totalorder %s53, %s55
      %p59 = scmp.eq.s32.totalorder %s19, 0
      %p60 = por %p58, %p59
      %p61 = scmp.ne.s32.totalorder %s53, %s55
      %p62 = scmp.eq.s32.totalorder %s24, 1
      %p63 = por %p61, %p62
      %p64 = scmp.ne.s32.totalorder %s55, %s56
      %p65 = scmp.eq.s32.totalorder %s24, 0
      %p66 = por %p64, %p65
      %p67 = scmp.ne.s32.totalorder %s55, %s56
      %p68 = scmp.eq.s32.totalorder %s25, 1
      %p69 = por %p67, %p68
      %p71 = scmp.ne.s32.totalorder %s56, %s70
      %p72 = scmp.eq.s32.totalorder %s25, 0
      %p73 = por %p71, %p72
      %s75 = sadd.s32 %s74, 1
      %p78 = scmp.eq.s32.totalorder %s19, 1
      %p79 = scmp.ne.s32.totalorder %s74, %s76
      %p80 = scmp.eq.s32.totalorder %s19, 0
      %p81 = por %p79, %p80
      %p82 = scmp.ne.s32.totalorder %s74, %s76
      %p83 = scmp.eq.s32.totalorder %s24, 1
      %p84 = por %p82, %p83
      %p85 = scmp.ne.s32.totalorder %s76, %s77
      %p86 = scmp.eq.s32.totalorder %s24, 0
      %p87 = por %p85, %p86
      %p88 = scmp.ne.s32.totalorder %s76, %s77
      %p89 = scmp.eq.s32.totalorder %s25, 1
      %p90 = por %p88, %p89
      %p92 = scmp.ne.s32.totalorder %s77, %s91
      %p93 = scmp.eq.s32.totalorder %s25, 0
      %p94 = por %p92, %p93
      %s96 = sadd.s32 %s95, 1
      %p99 = scmp.eq.s32.totalorder %s19, 1
      %p100 = scmp.ne.s32.totalorder %s95, %s97
      %p101 = scmp.eq.s32.totalorder %s19, 0
      %p102 = por %p100, %p101
      %p103 = scmp.ne.s32.totalorder %s95, %s97
      %p104 = scmp.eq.s32.totalorder %s24, 1
      %p105 = por %p103, %p104
      %p106 = scmp.ne.s32.totalorder %s97, %s98
      %p107 = scmp.eq.s32.totalorder %s24, 0
      %p108 = por %p106, %p107
      %p109 = scmp.ne.s32.totalorder %s97, %s98
      %p110 = scmp.eq.s32.totalorder %s25, 1
      %p111 = por %p109, %p110
      %p113 = scmp.ne.s32.totalorder %s98, %s112
      %p114 = scmp.eq.s32.totalorder %s25, 0
      %p115 = por %p113, %p114
      %s117 = sadd.s32 %s116, 1
      %p120 = scmp.eq.s32.totalorder %s19, 1
      %p121 = scmp.ne.s32.totalorder %s116, %s118
      %p122 = scmp.eq.s32.totalorder %s19, 0
      %p123 = por %p121, %p122
      %p124 = scmp.ne.s32.totalorder %s116, %s118
      %p125 = scmp.eq.s32.totalorder %s24, 1
      %p126 = por %p124, %p125
      %p127 = scmp.ne.s32.totalorder %s118, %s119
      %p128 = scmp.eq.s32.totalorder %s24, 0
      %p129 = por %p127, %p128
      %p130 = scmp.ne.s32.totalorder %s118, %s119
      %p131 = scmp.eq.s32.totalorder %s25, 1
      %p132 = por %p130, %p131
      %p134 = scmp.ne.s32.totalorder %s119, %s133
      %p135 = scmp.eq.s32.totalorder %s25, 0
      %p136 = por %p134, %p135
      %s138 = sadd.s32 %s137, 1
      %p141 = scmp.eq.s32.totalorder %s19, 1
      %p142 = scmp.ne.s32.totalorder %s137, %s139
      %p143 = scmp.eq.s32.totalorder %s19, 0
      %p144 = por %p142, %p143
      %p145 = scmp.ne.s32.totalorder %s137, %s139
      %p146 = scmp.eq.s32.totalorder %s24, 1
      %p147 = por %p145, %p146
      %p148 = scmp.ne.s32.totalorder %s139, %s140
      %p149 = scmp.eq.s32.totalorder %s24, 0
      %p150 = por %p148, %p149
      %p151 = scmp.ne.s32.totalorder %s139, %s140
      %p152 = scmp.eq.s32.totalorder %s25, 1
      %p153 = por %p151, %p152
      %p155 = scmp.ne.s32.totalorder %s140, %s154
      %p156 = scmp.eq.s32.totalorder %s25, 0
      %p157 = por %p155, %p156
      %s159 = sadd.s32 %s158, 1
      %p162 = scmp.eq.s32.totalorder %s19, 1
      %p163 = scmp.ne.s32.totalorder %s158, %s160
      %p164 = scmp.eq.s32.totalorder %s19, 0
      %p165 = por %p163, %p164
      %p166 = scmp.ne.s32.totalorder %s158, %s160
      %p167 = scmp.eq.s32.totalorder %s24, 1
      %p168 = por %p166, %p167
      %p169 = scmp.ne.s32.totalorder %s160, %s161
      %p170 = scmp.eq.s32.totalorder %s24, 0
      %p171 = por %p169, %p170
      %p172 = scmp.ne.s32.totalorder %s160, %s161
      %p173 = scmp.eq.s32.totalorder %s25, 1
      %p174 = por %p172, %p173
      %p176 = scmp.ne.s32.totalorder %s161, %s175
      %p177 = scmp.eq.s32.totalorder %s25, 0
      %p178 = por %p176, %p177
      %s180 = sadd.s32 %s179, 1
      %p183 = scmp.eq.s32.totalorder %s19, 1
      %p184 = scmp.ne.s32.totalorder %s179, %s181
      %p185 = scmp.eq.s32.totalorder %s19, 0
      %p186 = por %p184, %p185
      %p187 = scmp.ne.s32.totalorder %s179, %s181
      %p188 = scmp.eq.s32.totalorder %s24, 1
      %p189 = por %p187, %p188
      %p190 = scmp.ne.s32.totalorder %s181, %s182
      %p191 = scmp.eq.s32.totalorder %s24, 0
      %p192 = por %p190, %p191
      %p193 = scmp.ne.s32.totalorder %s181, %s182
      %p194 = scmp.eq.s32.totalorder %s25, 1
      %p195 = por %p193, %p194
      %p197 = scmp.ne.s32.totalorder %s182, %s196
      %p198 = scmp.eq.s32.totalorder %s25, 0
      %p199 = por %p197, %p198
      %s201 = sadd.s32 %s200, 1
      %p204 = scmp.eq.s32.totalorder %s19, 1
      %p205 = scmp.ne.s32.totalorder %s200, %s202
      %p206 = scmp.eq.s32.totalorder %s19, 0
      %p207 = por %p205, %p206
      %p208 = scmp.ne.s32.totalorder %s200, %s202
      %p209 = scmp.eq.s32.totalorder %s24, 1
      %p210 = por %p208, %p209
      %p211 = scmp.ne.s32.totalorder %s202, %s203
      %p212 = scmp.eq.s32.totalorder %s24, 0
      %p213 = por %p211, %p212
      %p214 = scmp.ne.s32.totalorder %s202, %s203
      %p215 = scmp.eq.s32.totalorder %s25, 1
      %p216 = por %p214, %p215
      %p218 = scmp.ne.s32.totalorder %s203, %s217
      %p219 = scmp.eq.s32.totalorder %s25, 0
      %p220 = por %p218, %p219
      %s222 = sadd.s32 %s221, 1
      %p225 = scmp.eq.s32.totalorder %s19, 1
      %p226 = scmp.ne.s32.totalorder %s221, %s223
      %p227 = scmp.eq.s32.totalorder %s19, 0
      %p228 = por %p226, %p227
      %p229 = scmp.ne.s32.totalorder %s221, %s223
      %p230 = scmp.eq.s32.totalorder %s24, 1
      %p231 = por %p229, %p230
      %p232 = scmp.ne.s32.totalorder %s223, %s224
      %p233 = scmp.eq.s32.totalorder %s24, 0
      %p234 = por %p232, %p233
      %p235 = scmp.ne.s32.totalorder %s223, %s224
      %p236 = scmp.eq.s32.totalorder %s25, 1
      %p237 = por %p235, %p236
      %p239 = scmp.ne.s32.totalorder %s224, %s238
      %p240 = scmp.eq.s32.totalorder %s25, 0
      %p241 = por %p239, %p240
      %s243 = sadd.s32 %s242, 1
      %p246 = scmp.eq.s32.totalorder %s19, 1
      %p247 = scmp.ne.s32.totalorder %s242, %s244
      %p248 = scmp.eq.s32.totalorder %s19, 0
      %p249 = por %p247, %p248
      %p250 = scmp.ne.s32.totalorder %s242, %s244
      %p251 = scmp.eq.s32.totalorder %s24, 1
      %p252 = por %p250, %p251
      %p253 = scmp.ne.s32.totalorder %s244, %s245
      %p254 = scmp.eq.s32.totalorder %s24, 0
      %p255 = por %p253, %p254
      %p256 = scmp.ne.s32.totalorder %s244, %s245
      %p257 = scmp.eq.s32.totalorder %s25, 1
      %p258 = por %p256, %p257
      %p260 = scmp.ne.s32.totalorder %s245, %s259
      %p261 = scmp.eq.s32.totalorder %s25, 0
      %p262 = por %p260, %p261
      %s264 = sadd.s32 %s263, 1
      %p267 = scmp.eq.s32.totalorder %s19, 1
      %p268 = scmp.ne.s32.totalorder %s263, %s265
      %p269 = scmp.eq.s32.totalorder %s19, 0
      %p270 = por %p268, %p269
      %p271 = scmp.ne.s32.totalorder %s263, %s265
      %p272 = scmp.eq.s32.totalorder %s24, 1
      %p273 = por %p271, %p272
      %p274 = scmp.ne.s32.totalorder %s265, %s266
      %p275 = scmp.eq.s32.totalorder %s24, 0
      %p276 = por %p274, %p275
      %p277 = scmp.ne.s32.totalorder %s265, %s266
      %p278 = scmp.eq.s32.totalorder %s25, 1
      %p279 = por %p277, %p278
      %p281 = scmp.ne.s32.totalorder %s266, %s280
      %p282 = scmp.eq.s32.totalorder %s25, 0
      %p283 = por %p281, %p282
      %s284 = ssub.s32 %s19, %s26
      %p285 = scmp.eq.s32.totalorder %s284, 0
      %s287 = sadd.s32 %s286, 1
      %s288 = scalar_select %p285, %s286, %s287
      %p291 = pneg %p285
      %p292 = scmp.eq.s32.totalorder %s19, 1
      %p293 = por %p291, %p292
      %p294 = scmp.ne.s32.totalorder %s286, %s289
      %p295 = scmp.eq.s32.totalorder %s19, 0
      %p296 = por %p294, %p295
      %p297 = scmp.ne.s32.totalorder %s286, %s289
      %p298 = scmp.eq.s32.totalorder %s24, 1
      %p299 = por %p297, %p298
      %p300 = scmp.ne.s32.totalorder %s289, %s290
      %p301 = scmp.eq.s32.totalorder %s24, 0
      %p302 = por %p300, %p301
      %p303 = scmp.ne.s32.totalorder %s289, %s290
      %p304 = scmp.eq.s32.totalorder %s25, 1
      %p305 = por %p303, %p304
      %p307 = scmp.ne.s32.totalorder %s290, %s306
      %p308 = scmp.eq.s32.totalorder %s25, 0
      %p309 = por %p307, %p308
      %p310 = scmp.le.s32.totalorder 1, %s19
      %p311 = scmp.lt.s32.totalorder %s19, 3
      %p312 = pnand %p310, %p311
      %p313 = pneg %p312
      // Predicated region
      $region9: #{rca_group.1} parent=5 // pred_check
        _
      $region10: #{rca_group.1} parent=5 // pred_check_branch
        %315 = sbr.rel (%p312) target = $region12
      $region11: #{rca_group.1} parent=5 // pred_region
        %s316 = ssub.s32 %s19, 1
        // Predicated region
        $region13: #{rca_group.1} parent=11 // pred_check
          %p317 = pneg %p66
        $region14: #{rca_group.1} parent=11 // pred_check_branch
          %319 = sbr.rel (%p317) target = $region16
        $region15: #{rca_group.1} parent=11 // pred_region
          _
        $region16: #{rca_group.1} parent=11 // pred_fallthru
          _
        // Predicated region
        $region17: #{rca_group.1} parent=11 // pred_check
          %p320 = pneg %p87
        $region18: #{rca_group.1} parent=11 // pred_check_branch
          %322 = sbr.rel (%p320) target = $region20
        $region19: #{rca_group.1} parent=11 // pred_region
          _
        $region20: #{rca_group.1} parent=11 // pred_fallthru
          _
        // Predicated region
        $region21: #{rca_group.1} parent=11 // pred_check
          %p323 = pneg %p108
        $region22: #{rca_group.1} parent=11 // pred_check_branch
          %325 = sbr.rel (%p323) target = $region24
        $region23: #{rca_group.1} parent=11 // pred_region
          _
        $region24: #{rca_group.1} parent=11 // pred_fallthru
          _
        // Predicated region
        $region25: #{rca_group.1} parent=11 // pred_check
          %p326 = pneg %p129
        $region26: #{rca_group.1} parent=11 // pred_check_branch
          %328 = sbr.rel (%p326) target = $region28
        $region27: #{rca_group.1} parent=11 // pred_region
          _
        $region28: #{rca_group.1} parent=11 // pred_fallthru
          _
        // Predicated region
        $region29: #{rca_group.1} parent=11 // pred_check
          %p329 = pneg %p150
        $region30: #{rca_group.1} parent=11 // pred_check_branch
          %331 = sbr.rel (%p329) target = $region32
        $region31: #{rca_group.1} parent=11 // pred_region
          _
        $region32: #{rca_group.1} parent=11 // pred_fallthru
          _
        // Predicated region
        $region33: #{rca_group.1} parent=11 // pred_check
          %p332 = pneg %p171
        $region34: #{rca_group.1} parent=11 // pred_check_branch
          %334 = sbr.rel (%p332) target = $region36
        $region35: #{rca_group.1} parent=11 // pred_region
          _
        $region36: #{rca_group.1} parent=11 // pred_fallthru
          _
        // Predicated region
        $region37: #{rca_group.1} parent=11 // pred_check
          %p335 = pneg %p192
        $region38: #{rca_group.1} parent=11 // pred_check_branch
          %337 = sbr.rel (%p335) target = $region40
        $region39: #{rca_group.1} parent=11 // pred_region
          _
        $region40: #{rca_group.1} parent=11 // pred_fallthru
          _
        // Predicated region
        $region41: #{rca_group.1} parent=11 // pred_check
          %p338 = pneg %p213
        $region42: #{rca_group.1} parent=11 // pred_check_branch
          %340 = sbr.rel (%p338) target = $region44
        $region43: #{rca_group.1} parent=11 // pred_region
          _
        $region44: #{rca_group.1} parent=11 // pred_fallthru
          _
        // Predicated region
        $region45: #{rca_group.1} parent=11 // pred_check
          %p341 = pneg %p234
        $region46: #{rca_group.1} parent=11 // pred_check_branch
          %343 = sbr.rel (%p341) target = $region48
        $region47: #{rca_group.1} parent=11 // pred_region
          %345 = vsyncadd [#allocation3], 0
          %s346 = sshll.u32 %s9, 4
          %s347 = int_to_ptr.hbm [resolvable:$true] %s346
          %s348 = sshll.u32 [#allocation2], 4
          %s349 = int_to_ptr.vmem [resolvable:$true] %s348
          %354 = dma.hbm_to_vmem [thread:$0]  %s347, 2304, %s349, [#allocation3], 128, 128, 8
        $region48: #{rca_group.1} parent=11 // pred_fallthru
          _
        // Predicated region
        $region49: #{rca_group.1} parent=11 // pred_check
          %p355 = pneg %p255
        $region50: #{rca_group.1} parent=11 // pred_check_branch
          %357 = sbr.rel (%p355) target = $region52
        $region51: #{rca_group.1} parent=11 // pred_region
          _
        $region52: #{rca_group.1} parent=11 // pred_fallthru
          _
        // Predicated region
        $region53: #{rca_group.1} parent=11 // pred_check
          %p358 = pneg %p276
        $region54: #{rca_group.1} parent=11 // pred_check_branch
          %360 = sbr.rel (%p358) target = $region56
        $region55: #{rca_group.1} parent=11 // pred_region
          _
        $region56: #{rca_group.1} parent=11 // pred_fallthru
          _
      $region12: #{rca_group.1} parent=5 // pred_fallthru
        _
      %p361 = scmp.lt.s32.totalorder %s19, 2
      // Predicated region
      $region57: #{rca_group.1} parent=5 // pred_check
        %p362 = pneg %p361
      $region58: #{rca_group.1} parent=5 // pred_check_branch
        %364 = sbr.rel (%p362) target = $region60
      $region59: #{rca_group.1} parent=5 // pred_region
        // Predicated region
        $region61: #{rca_group.1} parent=59 // pred_check
          %p365 = pneg %p39
        $region62: #{rca_group.1} parent=59 // pred_check_branch
          %367 = sbr.rel (%p365) target = $region64
        $region63: #{rca_group.1} parent=59 // pred_region
          %p368 = scmp.lt.s32.totalorder %s19, 1
          %s369 = scalar_select %p368, %s19, 1
          %s370 = smul.addr %s369, 4
          %s371 = smul.addr %s370, 8
          %s372 = scalar_lea.vmem %s0, %s371
        $region64: #{rca_group.1} parent=59 // pred_fallthru
          _
      $region60: #{rca_group.1} parent=5 // pred_fallthru
        _
      %p373 = scmp.le.s32.totalorder 1, %s19
      %p374 = scmp.lt.s32.totalorder %s19, 3
      %p375 = pnand %p373, %p374
      %p376 = pneg %p375
      // Predicated region
      $region65: #{rca_group.1} parent=5 // pred_check
        _
      $region66: #{rca_group.1} parent=5 // pred_check_branch
        %378 = sbr.rel (%p375) target = $region68
      $region67: #{rca_group.1} parent=5 // pred_region
        %s379 = ssub.s32 %s19, 1
        // Predicated region
        $region69: #{rca_group.1} parent=67 // pred_check
          %p380 = pneg %p234
        $region70: #{rca_group.1} parent=67 // pred_check_branch
          %382 = sbr.rel (%p380) target = $region72
        $region71: #{rca_group.1} parent=67 // pred_region
          %384 = dma.done [#allocation3], 2304
        $region72: #{rca_group.1} parent=67 // pred_fallthru
          _
        %p385 = scmp.lt.s32.totalorder %s24, 1
        %s386 = scalar_select %p385, %s24, 1
        %s387 = smul.addr %s386, 4
        %s388 = smul.addr %s387, 8
        %s389 = scalar_lea.vmem %s0, %s388
        %p390 = pneg %p45
        %p391 = pneg %p42
        %p392 = pneg %p66
        %p393 = pneg %p63
        %p394 = pneg %p87
        %p395 = pneg %p84
        %p396 = pneg %p108
        %p397 = pneg %p105
        %p398 = pneg %p129
        %p399 = pneg %p126
        %p400 = pneg %p150
        %p401 = pneg %p147
        %p402 = pneg %p171
        %p403 = pneg %p168
        %p404 = pneg %p192
        %p405 = pneg %p189
        %p406 = pneg %p213
        %p407 = pneg %p210
        %p408 = pneg %p234
        %p409 = pneg %p231
        %p410 = pneg %p255
        %p411 = pneg %p252
        %p412 = pneg %p276
        %p413 = pneg %p273
        %p414 = pneg %p302
        %p415 = pneg %p299
        %p416 = scmp.lt.s32.totalorder %s24, 1
        %s417 = scalar_select %p416, %s24, 1
        %s418 = smul.addr %s417, 4
        %s419 = smul.addr %s418, 8
        %s420 = scalar_lea.vmem %s12, %s419
        %p421 = scmp.lt.s32.totalorder %s24, 1
        %s422 = scalar_select %p421, %s24, 1
        %s423 = smul.addr %s422, 4
        %s424 = smul.addr %s423, 8
        %s425 = scalar_lea.vmem %s0, %s424
        %p426 = scmp.lt.s32.totalorder %s24, 1
        %s427 = scalar_select %p426, %s24, 1
        %s428 = smul.addr %s427, 4
        %s429 = smul.addr %s428, 8
        %s430 = scalar_lea.vmem %s12, %s429
        %v431 = vld [vmem:[%s425] sm:$0xff]
        %v432 = vld [vmem:[%s425 + $0x8] sm:$0xff]
        %v433 = vld [vmem:[%s425 + $0x10] sm:$0xff]
        %v434 = vld [vmem:[%s425 + $0x18] sm:$0xff]
        %v435 = vld [vmem:[%s2] sm:$0xff]
        %v436 = vld [vmem:[%s2 + $0x8] sm:$0xff]
        %s437 = scalar_lea.vmem %s1, 64
        %v438 = vld [vmem:[%s437] sm:$0xff]
        %v439 = vld [vmem:[%s437 + $0x8] sm:$0xff]
        %440 = vrot.lane.b32.xlu0 %v431, 17
        %v441 = vpop.permute.xlu0 %440
        %442 = vrot.lane.b32.xlu0 %v433, 17
        %v443 = vpop.permute.xlu0 %442
        %444 = vrot.lane.b32.xlu0 %v432, 17
        %v445 = vpop.permute.xlu0 %444
        %446 = vrot.lane.b32.xlu0 %v434, 17
        %v447 = vpop.permute.xlu0 %446
        %v448 = vlaneseq
        %v449 = vand.u32 %v448, 127
        %vm450 = vcmp.lt.s32.totalorder %v449, 17
        %v451 = vsel %vm450, %v441, %v445
        %v452 = vsel %vm450, %v443, %v447
        %v453 = vsel %vm450, %v445, %v441
        %v454 = vsel %vm450, %v447, %v443
        %v455 = vld [vmem:[%s11] sm:$0x3]
        %v457 = vperm.slane %v455, 0
        %v458 = vperm.slane %v455, 1
        %v461 = vmul.f32 %v453, %v457
        %v462 = vmul.f32 %v451, %v458
        %v463 = vmul.f32 %v454, %v457
        %v464 = vmul.f32 %v452, %v458
        %v465 = vld [vmem:[%s1] sm:$0xff]
        %v466 = vld [vmem:[%s1 + $0x8] sm:$0xff]
        %vm467 = vcmask 130048
        %v469 = vsel %vm467, %v465, 0
        %v472 = vsel %vm467, %v466, 0
        %474 = vmatpush.msra.mxu0 0.0
        %475 = vmatpush.msra.mxu0 0.0
        %476 = vmatpush.msra.mxu0 0.0
        %477 = vmatpush.msra.mxu0 0.0
        %478 = vmatpush.msra.mxu0 0.0
        %479 = vmatpush.msra.mxu0 0.0
        %480 = vmatpush.msra.mxu0 0.0
        %481 = vmatpush.msra.mxu0 0.0
        %482 = vmatpush.msra.mxu0 0.0
        %483 = vmatpush.msra.mxu0 0.0
        %484 = vmatpush.msra.mxu0 0.0
        %485 = vmatpush.msra.mxu0 0.0
        %486 = vmatpush.msra.mxu0 0.0
        %487 = vmatpush.msra.mxu0 0.0
        %488 = vmatpush.msra.mxu0 %v463
        %489 = vmatpush.msra.mxu0 %v461
        %490 = vmatmul.f32.gmra.mxu0 %v469
        %v491 = vpop.f32.mrf.mxu0
        %v492 = vadd.f32 0.0, %v491
        %493 = vmatmul.f32.gmra.mxu0 %v472
        %v494 = vpop.f32.mrf.mxu0
        %v495 = vadd.f32 0.0, %v494
        %496 = vdwg.mxu0
        %497 = vmatpush.msra.mxu0 0.0
        %498 = vmatpush.msra.mxu0 0.0
        %499 = vmatpush.msra.mxu0 0.0
        %500 = vmatpush.msra.mxu0 0.0
        %501 = vmatpush.msra.mxu0 0.0
        %502 = vmatpush.msra.mxu0 0.0
        %503 = vmatpush.msra.mxu0 0.0
        %504 = vmatpush.msra.mxu0 0.0
        %505 = vmatpush.msra.mxu0 0.0
        %506 = vmatpush.msra.mxu0 0.0
        %507 = vmatpush.msra.mxu0 0.0
        %508 = vmatpush.msra.mxu0 0.0
        %509 = vmatpush.msra.mxu0 0.0
        %510 = vmatpush.msra.mxu0 0.0
        %511 = vmatpush.msra.mxu0 %v464
        %512 = vmatpush.msra.mxu0 %v462
        %513 = vmatmul.f32.gmra.mxu0 %v469
        %v514 = vpop.f32.mrf.mxu0
        %v515 = vadd.f32 0.0, %v514
        %516 = vmatmul.f32.gmra.mxu0 %v472
        %v517 = vpop.f32.mrf.mxu0
        %v518 = vadd.f32 0.0, %v517
        %519 = vdwg.mxu0
        %v521 = vsel %vm467, %v438, 0
        %v524 = vsel %vm467, %v439, 0
        %526 = vmatpush.msra.mxu0 0.0
        %527 = vmatpush.msra.mxu0 0.0
        %528 = vmatpush.msra.mxu0 0.0
        %529 = vmatpush.msra.mxu0 0.0
        %530 = vmatpush.msra.mxu0 0.0
        %531 = vmatpush.msra.mxu0 0.0
        %532 = vmatpush.msra.mxu0 0.0
        %533 = vmatpush.msra.mxu0 0.0
        %534 = vmatpush.msra.mxu0 0.0
        %535 = vmatpush.msra.mxu0 0.0
        %536 = vmatpush.msra.mxu0 0.0
        %537 = vmatpush.msra.mxu0 0.0
        %538 = vmatpush.msra.mxu0 0.0
        %539 = vmatpush.msra.mxu0 0.0
        %540 = vmatpush.msra.mxu0 %v433
        %541 = vmatpush.msra.mxu0 %v431
        %542 = vmatmul.f32.gmra.mxu0 %v521
        %v543 = vpop.f32.mrf.mxu0
        %v544 = vadd.f32 %v492, %v543
        %545 = vmatmul.f32.gmra.mxu0 %v524
        %v546 = vpop.f32.mrf.mxu0
        %v547 = vadd.f32 %v495, %v546
        %548 = vdwg.mxu0
        %549 = vmatpush.msra.mxu0 0.0
        %550 = vmatpush.msra.mxu0 0.0
        %551 = vmatpush.msra.mxu0 0.0
        %552 = vmatpush.msra.mxu0 0.0
        %553 = vmatpush.msra.mxu0 0.0
        %554 = vmatpush.msra.mxu0 0.0
        %555 = vmatpush.msra.mxu0 0.0
        %556 = vmatpush.msra.mxu0 0.0
        %557 = vmatpush.msra.mxu0 0.0
        %558 = vmatpush.msra.mxu0 0.0
        %559 = vmatpush.msra.mxu0 0.0
        %560 = vmatpush.msra.mxu0 0.0
        %561 = vmatpush.msra.mxu0 0.0
        %562 = vmatpush.msra.mxu0 0.0
        %563 = vmatpush.msra.mxu0 %v434
        %564 = vmatpush.msra.mxu0 %v432
        %565 = vmatmul.f32.gmra.mxu0 %v521
        %v566 = vpop.f32.mrf.mxu0
        %v567 = vadd.f32 %v515, %v566
        %568 = vmatmul.f32.gmra.mxu0 %v524
        %v569 = vpop.f32.mrf.mxu0
        %v570 = vadd.f32 %v518, %v569
        %571 = vdwg.mxu0
        %572 = vrot.lane.b32.xlu0 %v431, 16
        %v573 = vpop.permute.xlu0 %572
        %574 = vrot.lane.b32.xlu0 %v433, 16
        %v575 = vpop.permute.xlu0 %574
        %576 = vrot.lane.b32.xlu0 %v432, 16
        %v577 = vpop.permute.xlu0 %576
        %578 = vrot.lane.b32.xlu0 %v434, 16
        %v579 = vpop.permute.xlu0 %578
        %vm580 = vcmp.lt.s32.totalorder %v449, 16
        %v581 = vsel %vm580, %v573, %v577
        %v582 = vsel %vm580, %v575, %v579
        %v583 = vsel %vm580, %v577, %v573
        %v584 = vsel %vm580, %v579, %v575
        %s585 = scalar_lea.vmem %s11, 2
        %v586 = vld [vmem:[%s585] sm:$0x3]
        %v588 = vperm.slane %v586, 0
        %v589 = vperm.slane %v586, 1
        %v592 = vmul.f32 %v583, %v588
        %v593 = vmul.f32 %v581, %v589
        %v594 = vmul.f32 %v584, %v588
        %v595 = vmul.f32 %v582, %v589
        %s596 = scalar_lea.vmem %s1, 16
        %v597 = vld [vmem:[%s596] sm:$0xff]
        %v598 = vld [vmem:[%s596 + $0x8] sm:$0xff]
        %v600 = vsel %vm467, %v597, 0
        %v603 = vsel %vm467, %v598, 0
        %605 = vmatpush.msra.mxu0 0.0
        %606 = vmatpush.msra.mxu0 0.0
        %607 = vmatpush.msra.mxu0 0.0
        %608 = vmatpush.msra.mxu0 0.0
        %609 = vmatpush.msra.mxu0 0.0
        %610 = vmatpush.msra.mxu0 0.0
        %611 = vmatpush.msra.mxu0 0.0
        %612 = vmatpush.msra.mxu0 0.0
        %613 = vmatpush.msra.mxu0 0.0
        %614 = vmatpush.msra.mxu0 0.0
        %615 = vmatpush.msra.mxu0 0.0
        %616 = vmatpush.msra.mxu0 0.0
        %617 = vmatpush.msra.mxu0 0.0
        %618 = vmatpush.msra.mxu0 0.0
        %619 = vmatpush.msra.mxu0 %v594
        %620 = vmatpush.msra.mxu0 %v592
        %621 = vmatmul.f32.gmra.mxu0 %v600
        %v622 = vpop.f32.mrf.mxu0
        %v623 = vadd.f32 0.0, %v622
        %624 = vmatmul.f32.gmra.mxu0 %v603
        %v625 = vpop.f32.mrf.mxu0
        %v626 = vadd.f32 0.0, %v625
        %627 = vdwg.mxu0
        %628 = vmatpush.msra.mxu0 0.0
        %629 = vmatpush.msra.mxu0 0.0
        %630 = vmatpush.msra.mxu0 0.0
        %631 = vmatpush.msra.mxu0 0.0
        %632 = vmatpush.msra.mxu0 0.0
        %633 = vmatpush.msra.mxu0 0.0
        %634 = vmatpush.msra.mxu0 0.0
        %635 = vmatpush.msra.mxu0 0.0
        %636 = vmatpush.msra.mxu0 0.0
        %637 = vmatpush.msra.mxu0 0.0
        %638 = vmatpush.msra.mxu0 0.0
        %639 = vmatpush.msra.mxu0 0.0
        %640 = vmatpush.msra.mxu0 0.0
        %641 = vmatpush.msra.mxu0 0.0
        %642 = vmatpush.msra.mxu0 %v595
        %643 = vmatpush.msra.mxu0 %v593
        %644 = vmatmul.f32.gmra.mxu0 %v600
        %v645 = vpop.f32.mrf.mxu0
        %v646 = vadd.f32 0.0, %v645
        %647 = vmatmul.f32.gmra.mxu0 %v603
        %v648 = vpop.f32.mrf.mxu0
        %v649 = vadd.f32 0.0, %v648
        %650 = vdwg.mxu0
        %v651 = vadd.f32 %v544, %v623
        %v652 = vadd.f32 %v567, %v646
        %v653 = vadd.f32 %v547, %v626
        %v654 = vadd.f32 %v570, %v649
        %655 = vrot.lane.b32.xlu0 %v431, 15
        %v656 = vpop.permute.xlu0 %655
        %657 = vrot.lane.b32.xlu0 %v433, 15
        %v658 = vpop.permute.xlu0 %657
        %659 = vrot.lane.b32.xlu0 %v432, 15
        %v660 = vpop.permute.xlu0 %659
        %661 = vrot.lane.b32.xlu0 %v434, 15
        %v662 = vpop.permute.xlu0 %661
        %vm663 = vcmp.lt.s32.totalorder %v449, 15
        %v664 = vsel %vm663, %v656, %v660
        %v665 = vsel %vm663, %v658, %v662
        %v666 = vsel %vm663, %v660, %v656
        %v667 = vsel %vm663, %v662, %v658
        %s668 = scalar_lea.vmem %s11, 4
        %v669 = vld [vmem:[%s668] sm:$0x3]
        %v671 = vperm.slane %v669, 0
        %v672 = vperm.slane %v669, 1
        %v675 = vmul.f32 %v666, %v671
        %v676 = vmul.f32 %v664, %v672
        %v677 = vmul.f32 %v667, %v671
        %v678 = vmul.f32 %v665, %v672
        %s679 = scalar_lea.vmem %s1, 32
        %v680 = vld [vmem:[%s679] sm:$0xff]
        %v681 = vld [vmem:[%s679 + $0x8] sm:$0xff]
        %v683 = vsel %vm467, %v680, 0
        %v686 = vsel %vm467, %v681, 0
        %688 = vmatpush.msra.mxu0 0.0
        %689 = vmatpush.msra.mxu0 0.0
        %690 = vmatpush.msra.mxu0 0.0
        %691 = vmatpush.msra.mxu0 0.0
        %692 = vmatpush.msra.mxu0 0.0
        %693 = vmatpush.msra.mxu0 0.0
        %694 = vmatpush.msra.mxu0 0.0
        %695 = vmatpush.msra.mxu0 0.0
        %696 = vmatpush.msra.mxu0 0.0
        %697 = vmatpush.msra.mxu0 0.0
        %698 = vmatpush.msra.mxu0 0.0
        %699 = vmatpush.msra.mxu0 0.0
        %700 = vmatpush.msra.mxu0 0.0
        %701 = vmatpush.msra.mxu0 0.0
        %702 = vmatpush.msra.mxu0 %v677
        %703 = vmatpush.msra.mxu0 %v675
        %704 = vmatmul.f32.gmra.mxu0 %v683
        %v705 = vpop.f32.mrf.mxu0
        %v706 = vadd.f32 0.0, %v705
        %707 = vmatmul.f32.gmra.mxu0 %v686
        %v708 = vpop.f32.mrf.mxu0
        %v709 = vadd.f32 0.0, %v708
        %710 = vdwg.mxu0
        %711 = vmatpush.msra.mxu0 0.0
        %712 = vmatpush.msra.mxu0 0.0
        %713 = vmatpush.msra.mxu0 0.0
        %714 = vmatpush.msra.mxu0 0.0
        %715 = vmatpush.msra.mxu0 0.0
        %716 = vmatpush.msra.mxu0 0.0
        %717 = vmatpush.msra.mxu0 0.0
        %718 = vmatpush.msra.mxu0 0.0
        %719 = vmatpush.msra.mxu0 0.0
        %720 = vmatpush.msra.mxu0 0.0
        %721 = vmatpush.msra.mxu0 0.0
        %722 = vmatpush.msra.mxu0 0.0
        %723 = vmatpush.msra.mxu0 0.0
        %724 = vmatpush.msra.mxu0 0.0
        %725 = vmatpush.msra.mxu0 %v678
        %726 = vmatpush.msra.mxu0 %v676
        %727 = vmatmul.f32.gmra.mxu0 %v683
        %v728 = vpop.f32.mrf.mxu0
        %v729 = vadd.f32 0.0, %v728
        %730 = vmatmul.f32.gmra.mxu0 %v686
        %v731 = vpop.f32.mrf.mxu0
        %v732 = vadd.f32 0.0, %v731
        %733 = vdwg.mxu0
        %v734 = vadd.f32 %v651, %v706
        %v735 = vadd.f32 %v652, %v729
        %v736 = vadd.f32 %v653, %v709
        %v737 = vadd.f32 %v654, %v732
        %738 = vrot.lane.b32.xlu0 %v431, 1
        %v739 = vpop.permute.xlu0 %738
        %740 = vrot.lane.b32.xlu0 %v433, 1
        %v741 = vpop.permute.xlu0 %740
        %742 = vrot.lane.b32.xlu0 %v432, 1
        %v743 = vpop.permute.xlu0 %742
        %744 = vrot.lane.b32.xlu0 %v434, 1
        %v745 = vpop.permute.xlu0 %744
        %vm746 = vcmp.lt.s32.totalorder %v449, 1
        %v747 = vsel %vm746, %v739, %v743
        %v748 = vsel %vm746, %v741, %v745
        %v749 = vsel %vm746, %v743, %v739
        %v750 = vsel %vm746, %v745, %v741
        %s751 = scalar_lea.vmem %s11, 6
        %v752 = vld [vmem:[%s751] sm:$0x3]
        %v754 = vperm.slane %v752, 0
        %v755 = vperm.slane %v752, 1
        %v758 = vmul.f32 %v749, %v754
        %v759 = vmul.f32 %v747, %v755
        %v760 = vmul.f32 %v750, %v754
        %v761 = vmul.f32 %v748, %v755
        %s762 = scalar_lea.vmem %s1, 48
        %v763 = vld [vmem:[%s762] sm:$0xff]
        %v764 = vld [vmem:[%s762 + $0x8] sm:$0xff]
        %v766 = vsel %vm467, %v763, 0
        %v769 = vsel %vm467, %v764, 0
        %771 = vmatpush.msra.mxu0 0.0
        %772 = vmatpush.msra.mxu0 0.0
        %773 = vmatpush.msra.mxu0 0.0
        %774 = vmatpush.msra.mxu0 0.0
        %775 = vmatpush.msra.mxu0 0.0
        %776 = vmatpush.msra.mxu0 0.0
        %777 = vmatpush.msra.mxu0 0.0
        %778 = vmatpush.msra.mxu0 0.0
        %779 = vmatpush.msra.mxu0 0.0
        %780 = vmatpush.msra.mxu0 0.0
        %781 = vmatpush.msra.mxu0 0.0
        %782 = vmatpush.msra.mxu0 0.0
        %783 = vmatpush.msra.mxu0 0.0
        %784 = vmatpush.msra.mxu0 0.0
        %785 = vmatpush.msra.mxu0 %v760
        %786 = vmatpush.msra.mxu0 %v758
        %787 = vmatmul.f32.gmra.mxu0 %v766
        %v788 = vpop.f32.mrf.mxu0
        %v789 = vadd.f32 0.0, %v788
        %790 = vmatmul.f32.gmra.mxu0 %v769
        %v791 = vpop.f32.mrf.mxu0
        %v792 = vadd.f32 0.0, %v791
        %793 = vdwg.mxu0
        %794 = vmatpush.msra.mxu0 0.0
        %795 = vmatpush.msra.mxu0 0.0
        %796 = vmatpush.msra.mxu0 0.0
        %797 = vmatpush.msra.mxu0 0.0
        %798 = vmatpush.msra.mxu0 0.0
        %799 = vmatpush.msra.mxu0 0.0
        %800 = vmatpush.msra.mxu0 0.0
        %801 = vmatpush.msra.mxu0 0.0
        %802 = vmatpush.msra.mxu0 0.0
        %803 = vmatpush.msra.mxu0 0.0
        %804 = vmatpush.msra.mxu0 0.0
        %805 = vmatpush.msra.mxu0 0.0
        %806 = vmatpush.msra.mxu0 0.0
        %807 = vmatpush.msra.mxu0 0.0
        %808 = vmatpush.msra.mxu0 %v761
        %809 = vmatpush.msra.mxu0 %v759
        %810 = vmatmul.f32.gmra.mxu0 %v766
        %v811 = vpop.f32.mrf.mxu0
        %v812 = vadd.f32 0.0, %v811
        %813 = vmatmul.f32.gmra.mxu0 %v769
        %v814 = vpop.f32.mrf.mxu0
        %v815 = vadd.f32 0.0, %v814
        %816 = vdwg.mxu0
        %v817 = vadd.f32 %v734, %v789
        %v818 = vadd.f32 %v735, %v812
        %v819 = vadd.f32 %v736, %v792
        %v820 = vadd.f32 %v737, %v815
        %821 = vrot.lane.b32.xlu0 %v431, 127
        %v822 = vpop.permute.xlu0 %821
        %823 = vrot.lane.b32.xlu0 %v433, 127
        %v824 = vpop.permute.xlu0 %823
        %825 = vrot.lane.b32.xlu0 %v432, 127
        %v826 = vpop.permute.xlu0 %825
        %827 = vrot.lane.b32.xlu0 %v434, 127
        %v828 = vpop.permute.xlu0 %827
        %vm829 = vcmp.lt.s32.totalorder %v449, 127
        %v830 = vsel %vm829, %v822, %v826
        %v831 = vsel %vm829, %v824, %v828
        %v832 = vsel %vm829, %v826, %v822
        %v833 = vsel %vm829, %v828, %v824
        %s834 = scalar_lea.vmem %s11, 8
        %v835 = vld [vmem:[%s834] sm:$0x3]
        %v837 = vperm.slane %v835, 0
        %v838 = vperm.slane %v835, 1
        %v841 = vmul.f32 %v830, %v837
        %v842 = vmul.f32 %v832, %v838
        %v843 = vmul.f32 %v831, %v837
        %v844 = vmul.f32 %v833, %v838
        %s845 = scalar_lea.vmem %s1, 80
        %v846 = vld [vmem:[%s845] sm:$0xff]
        %v847 = vld [vmem:[%s845 + $0x8] sm:$0xff]
        %v849 = vsel %vm467, %v846, 0
        %v852 = vsel %vm467, %v847, 0
        %854 = vmatpush.msra.mxu0 0.0
        %855 = vmatpush.msra.mxu0 0.0
        %856 = vmatpush.msra.mxu0 0.0
        %857 = vmatpush.msra.mxu0 0.0
        %858 = vmatpush.msra.mxu0 0.0
        %859 = vmatpush.msra.mxu0 0.0
        %860 = vmatpush.msra.mxu0 0.0
        %861 = vmatpush.msra.mxu0 0.0
        %862 = vmatpush.msra.mxu0 0.0
        %863 = vmatpush.msra.mxu0 0.0
        %864 = vmatpush.msra.mxu0 0.0
        %865 = vmatpush.msra.mxu0 0.0
        %866 = vmatpush.msra.mxu0 0.0
        %867 = vmatpush.msra.mxu0 0.0
        %868 = vmatpush.msra.mxu0 %v843
        %869 = vmatpush.msra.mxu0 %v841
        %870 = vmatmul.f32.gmra.mxu0 %v849
        %v871 = vpop.f32.mrf.mxu0
        %v872 = vadd.f32 0.0, %v871
        %873 = vmatmul.f32.gmra.mxu0 %v852
        %v874 = vpop.f32.mrf.mxu0
        %v875 = vadd.f32 0.0, %v874
        %876 = vdwg.mxu0
        %877 = vmatpush.msra.mxu0 0.0
        %878 = vmatpush.msra.mxu0 0.0
        %879 = vmatpush.msra.mxu0 0.0
        %880 = vmatpush.msra.mxu0 0.0
        %881 = vmatpush.msra.mxu0 0.0
        %882 = vmatpush.msra.mxu0 0.0
        %883 = vmatpush.msra.mxu0 0.0
        %884 = vmatpush.msra.mxu0 0.0
        %885 = vmatpush.msra.mxu0 0.0
        %886 = vmatpush.msra.mxu0 0.0
        %887 = vmatpush.msra.mxu0 0.0
        %888 = vmatpush.msra.mxu0 0.0
        %889 = vmatpush.msra.mxu0 0.0
        %890 = vmatpush.msra.mxu0 0.0
        %891 = vmatpush.msra.mxu0 %v844
        %892 = vmatpush.msra.mxu0 %v842
        %893 = vmatmul.f32.gmra.mxu0 %v849
        %v894 = vpop.f32.mrf.mxu0
        %v895 = vadd.f32 0.0, %v894
        %896 = vmatmul.f32.gmra.mxu0 %v852
        %v897 = vpop.f32.mrf.mxu0
        %v898 = vadd.f32 0.0, %v897
        %899 = vdwg.mxu0
        %v900 = vadd.f32 %v817, %v872
        %v901 = vadd.f32 %v818, %v895
        %v902 = vadd.f32 %v819, %v875
        %v903 = vadd.f32 %v820, %v898
        %904 = vrot.lane.b32.xlu0 %v431, 113
        %v905 = vpop.permute.xlu0 %904
        %906 = vrot.lane.b32.xlu0 %v433, 113
        %v907 = vpop.permute.xlu0 %906
        %908 = vrot.lane.b32.xlu0 %v432, 113
        %v909 = vpop.permute.xlu0 %908
        %910 = vrot.lane.b32.xlu0 %v434, 113
        %v911 = vpop.permute.xlu0 %910
        %vm912 = vcmp.lt.s32.totalorder %v449, 113
        %v913 = vsel %vm912, %v905, %v909
        %v914 = vsel %vm912, %v907, %v911
        %v915 = vsel %vm912, %v909, %v905
        %v916 = vsel %vm912, %v911, %v907
        %s917 = scalar_lea.vmem %s11, 10
        %v918 = vld [vmem:[%s917] sm:$0x3]
        %v920 = vperm.slane %v918, 0
        %v921 = vperm.slane %v918, 1
        %v924 = vmul.f32 %v913, %v920
        %v925 = vmul.f32 %v915, %v921
        %v926 = vmul.f32 %v914, %v920
        %v927 = vmul.f32 %v916, %v921
        %s928 = scalar_lea.vmem %s1, 96
        %v929 = vld [vmem:[%s928] sm:$0xff]
        %v930 = vld [vmem:[%s928 + $0x8] sm:$0xff]
        %v932 = vsel %vm467, %v929, 0
        %v935 = vsel %vm467, %v930, 0
        %937 = vmatpush.msra.mxu0 0.0
        %938 = vmatpush.msra.mxu0 0.0
        %939 = vmatpush.msra.mxu0 0.0
        %940 = vmatpush.msra.mxu0 0.0
        %941 = vmatpush.msra.mxu0 0.0
        %942 = vmatpush.msra.mxu0 0.0
        %943 = vmatpush.msra.mxu0 0.0
        %944 = vmatpush.msra.mxu0 0.0
        %945 = vmatpush.msra.mxu0 0.0
        %946 = vmatpush.msra.mxu0 0.0
        %947 = vmatpush.msra.mxu0 0.0
        %948 = vmatpush.msra.mxu0 0.0
        %949 = vmatpush.msra.mxu0 0.0
        %950 = vmatpush.msra.mxu0 0.0
        %951 = vmatpush.msra.mxu0 %v926
        %952 = vmatpush.msra.mxu0 %v924
        %953 = vmatmul.f32.gmra.mxu0 %v932
        %v954 = vpop.f32.mrf.mxu0
        %v955 = vadd.f32 0.0, %v954
        %956 = vmatmul.f32.gmra.mxu0 %v935
        %v957 = vpop.f32.mrf.mxu0
        %v958 = vadd.f32 0.0, %v957
        %959 = vdwg.mxu0
        %960 = vmatpush.msra.mxu0 0.0
        %961 = vmatpush.msra.mxu0 0.0
        %962 = vmatpush.msra.mxu0 0.0
        %963 = vmatpush.msra.mxu0 0.0
        %964 = vmatpush.msra.mxu0 0.0
        %965 = vmatpush.msra.mxu0 0.0
        %966 = vmatpush.msra.mxu0 0.0
        %967 = vmatpush.msra.mxu0 0.0
        %968 = vmatpush.msra.mxu0 0.0
        %969 = vmatpush.msra.mxu0 0.0
        %970 = vmatpush.msra.mxu0 0.0
        %971 = vmatpush.msra.mxu0 0.0
        %972 = vmatpush.msra.mxu0 0.0
        %973 = vmatpush.msra.mxu0 0.0
        %974 = vmatpush.msra.mxu0 %v927
        %975 = vmatpush.msra.mxu0 %v925
        %976 = vmatmul.f32.gmra.mxu0 %v932
        %v977 = vpop.f32.mrf.mxu0
        %v978 = vadd.f32 0.0, %v977
        %979 = vmatmul.f32.gmra.mxu0 %v935
        %v980 = vpop.f32.mrf.mxu0
        %v981 = vadd.f32 0.0, %v980
        %982 = vdwg.mxu0
        %v983 = vadd.f32 %v900, %v955
        %v984 = vadd.f32 %v901, %v978
        %v985 = vadd.f32 %v902, %v958
        %v986 = vadd.f32 %v903, %v981
        %987 = vrot.lane.b32.xlu0 %v431, 112
        %v988 = vpop.permute.xlu0 %987
        %989 = vrot.lane.b32.xlu0 %v433, 112
        %v990 = vpop.permute.xlu0 %989
        %991 = vrot.lane.b32.xlu0 %v432, 112
        %v992 = vpop.permute.xlu0 %991
        %993 = vrot.lane.b32.xlu0 %v434, 112
        %v994 = vpop.permute.xlu0 %993
        %vm995 = vcmp.lt.s32.totalorder %v449, 112
        %v996 = vsel %vm995, %v988, %v992
        %v997 = vsel %vm995, %v990, %v994
        %v998 = vsel %vm995, %v992, %v988
        %v999 = vsel %vm995, %v994, %v990
        %s1000 = scalar_lea.vmem %s11, 12
        %v1001 = vld [vmem:[%s1000] sm:$0x3]
        %v1003 = vperm.slane %v1001, 0
        %v1004 = vperm.slane %v1001, 1
        %v1007 = vmul.f32 %v996, %v1003
        %v1008 = vmul.f32 %v998, %v1004
        %v1009 = vmul.f32 %v997, %v1003
        %v1010 = vmul.f32 %v999, %v1004
        %s1011 = scalar_lea.vmem %s1, 112
        %v1012 = vld [vmem:[%s1011] sm:$0xff]
        %v1013 = vld [vmem:[%s1011 + $0x8] sm:$0xff]
        %v1015 = vsel %vm467, %v1012, 0
        %v1018 = vsel %vm467, %v1013, 0
        %1020 = vmatpush.msra.mxu0 0.0
        %1021 = vmatpush.msra.mxu0 0.0
        %1022 = vmatpush.msra.mxu0 0.0
        %1023 = vmatpush.msra.mxu0 0.0
        %1024 = vmatpush.msra.mxu0 0.0
        %1025 = vmatpush.msra.mxu0 0.0
        %1026 = vmatpush.msra.mxu0 0.0
        %1027 = vmatpush.msra.mxu0 0.0
        %1028 = vmatpush.msra.mxu0 0.0
        %1029 = vmatpush.msra.mxu0 0.0
        %1030 = vmatpush.msra.mxu0 0.0
        %1031 = vmatpush.msra.mxu0 0.0
        %1032 = vmatpush.msra.mxu0 0.0
        %1033 = vmatpush.msra.mxu0 0.0
        %1034 = vmatpush.msra.mxu0 %v1009
        %1035 = vmatpush.msra.mxu0 %v1007
        %1036 = vmatmul.f32.gmra.mxu0 %v1015
        %v1037 = vpop.f32.mrf.mxu0
        %v1038 = vadd.f32 0.0, %v1037
        %1039 = vmatmul.f32.gmra.mxu0 %v1018
        %v1040 = vpop.f32.mrf.mxu0
        %v1041 = vadd.f32 0.0, %v1040
        %1042 = vdwg.mxu0
        %1043 = vmatpush.msra.mxu0 0.0
        %1044 = vmatpush.msra.mxu0 0.0
        %1045 = vmatpush.msra.mxu0 0.0
        %1046 = vmatpush.msra.mxu0 0.0
        %1047 = vmatpush.msra.mxu0 0.0
        %1048 = vmatpush.msra.mxu0 0.0
        %1049 = vmatpush.msra.mxu0 0.0
        %1050 = vmatpush.msra.mxu0 0.0
        %1051 = vmatpush.msra.mxu0 0.0
        %1052 = vmatpush.msra.mxu0 0.0
        %1053 = vmatpush.msra.mxu0 0.0
        %1054 = vmatpush.msra.mxu0 0.0
        %1055 = vmatpush.msra.mxu0 0.0
        %1056 = vmatpush.msra.mxu0 0.0
        %1057 = vmatpush.msra.mxu0 %v1010
        %1058 = vmatpush.msra.mxu0 %v1008
        %1059 = vmatmul.f32.gmra.mxu0 %v1015
        %v1060 = vpop.f32.mrf.mxu0
        %v1061 = vadd.f32 0.0, %v1060
        %1062 = vmatmul.f32.gmra.mxu0 %v1018
        %v1063 = vpop.f32.mrf.mxu0
        %v1064 = vadd.f32 0.0, %v1063
        %1065 = vdwg.mxu0
        %v1066 = vadd.f32 %v983, %v1038
        %v1067 = vadd.f32 %v984, %v1061
        %v1068 = vadd.f32 %v985, %v1041
        %v1069 = vadd.f32 %v986, %v1064
        %1070 = vrot.lane.b32.xlu0 %v431, 111
        %v1071 = vpop.permute.xlu0 %1070
        %1072 = vrot.lane.b32.xlu0 %v433, 111
        %v1073 = vpop.permute.xlu0 %1072
        %1074 = vrot.lane.b32.xlu0 %v432, 111
        %v1075 = vpop.permute.xlu0 %1074
        %1076 = vrot.lane.b32.xlu0 %v434, 111
        %v1077 = vpop.permute.xlu0 %1076
        %vm1078 = vcmp.lt.s32.totalorder %v449, 111
        %v1079 = vsel %vm1078, %v1071, %v1075
        %v1080 = vsel %vm1078, %v1073, %v1077
        %v1081 = vsel %vm1078, %v1075, %v1071
        %v1082 = vsel %vm1078, %v1077, %v1073
        %s1083 = scalar_lea.vmem %s11, 14
        %v1084 = vld [vmem:[%s1083] sm:$0x3]
        %v1086 = vperm.slane %v1084, 0
        %v1087 = vperm.slane %v1084, 1
        %v1090 = vmul.f32 %v1079, %v1086
        %v1091 = vmul.f32 %v1081, %v1087
        %v1092 = vmul.f32 %v1080, %v1086
        %v1093 = vmul.f32 %v1082, %v1087
        %s1094 = scalar_lea.vmem %s1, 128
        %v1095 = vld [vmem:[%s1094] sm:$0xff]
        %v1096 = vld [vmem:[%s1094 + $0x8] sm:$0xff]
        %v1098 = vsel %vm467, %v1095, 0
        %v1101 = vsel %vm467, %v1096, 0
        %1103 = vmatpush.msra.mxu0 0.0
        %1104 = vmatpush.msra.mxu0 0.0
        %1105 = vmatpush.msra.mxu0 0.0
        %1106 = vmatpush.msra.mxu0 0.0
        %1107 = vmatpush.msra.mxu0 0.0
        %1108 = vmatpush.msra.mxu0 0.0
        %1109 = vmatpush.msra.mxu0 0.0
        %1110 = vmatpush.msra.mxu0 0.0
        %1111 = vmatpush.msra.mxu0 0.0
        %1112 = vmatpush.msra.mxu0 0.0
        %1113 = vmatpush.msra.mxu0 0.0
        %1114 = vmatpush.msra.mxu0 0.0
        %1115 = vmatpush.msra.mxu0 0.0
        %1116 = vmatpush.msra.mxu0 0.0
        %1117 = vmatpush.msra.mxu0 %v1092
        %1118 = vmatpush.msra.mxu0 %v1090
        %1119 = vmatmul.f32.gmra.mxu0 %v1098
        %v1120 = vpop.f32.mrf.mxu0
        %v1121 = vadd.f32 0.0, %v1120
        %1122 = vmatmul.f32.gmra.mxu0 %v1101
        %v1123 = vpop.f32.mrf.mxu0
        %v1124 = vadd.f32 0.0, %v1123
        %1125 = vdwg.mxu0
        %1126 = vmatpush.msra.mxu0 0.0
        %1127 = vmatpush.msra.mxu0 0.0
        %1128 = vmatpush.msra.mxu0 0.0
        %1129 = vmatpush.msra.mxu0 0.0
        %1130 = vmatpush.msra.mxu0 0.0
        %1131 = vmatpush.msra.mxu0 0.0
        %1132 = vmatpush.msra.mxu0 0.0
        %1133 = vmatpush.msra.mxu0 0.0
        %1134 = vmatpush.msra.mxu0 0.0
        %1135 = vmatpush.msra.mxu0 0.0
        %1136 = vmatpush.msra.mxu0 0.0
        %1137 = vmatpush.msra.mxu0 0.0
        %1138 = vmatpush.msra.mxu0 0.0
        %1139 = vmatpush.msra.mxu0 0.0
        %1140 = vmatpush.msra.mxu0 %v1093
        %1141 = vmatpush.msra.mxu0 %v1091
        %1142 = vmatmul.f32.gmra.mxu0 %v1098
        %v1143 = vpop.f32.mrf.mxu0
        %v1144 = vadd.f32 0.0, %v1143
        %1145 = vmatmul.f32.gmra.mxu0 %v1101
        %v1146 = vpop.f32.mrf.mxu0
        %v1147 = vadd.f32 0.0, %v1146
        %1148 = vdwg.mxu0
        %v1149 = vadd.f32 %v1066, %v1121
        %v1150 = vadd.f32 %v1067, %v1144
        %v1151 = vadd.f32 %v1068, %v1124
        %v1152 = vadd.f32 %v1069, %v1147
        %1154 = vset.pattern.permute.xlu0 0
        %1155 = vperm.xlu0 %1154, %v435
        %v1156 = vpop.permute.xlu0 %1155
        %1159 = vset.pattern.permute.xlu0 0
        %1160 = vperm.xlu0 %1159, %v436
        %v1161 = vpop.permute.xlu0 %1160
        %v1163 = vadd.f32 %v1149, %v1156
        %v1164 = vadd.f32 %v1150, %v1156
        %v1165 = vadd.f32 %v1151, %v1161
        %v1166 = vadd.f32 %v1152, %v1161
        %v1167 = vmax.f32 %v1163, 0.0
        %v1168 = vmax.f32 %v1164, 0.0
        %v1169 = vmax.f32 %v1165, 0.0
        %v1170 = vmax.f32 %v1166, 0.0
        %v1171 = vld [vmem:[%s4] sm:$0xff]
        %v1172 = vld [vmem:[%s4 + $0x8] sm:$0xff]
        %s1173 = scalar_lea.vmem %s3, 64
        %v1174 = vld [vmem:[%s1173] sm:$0xff]
        %v1175 = vld [vmem:[%s1173 + $0x8] sm:$0xff]
        %1176 = vrot.lane.b32.xlu0 %v1167, 17
        %v1177 = vpop.permute.xlu0 %1176
        %1178 = vrot.lane.b32.xlu0 %v1169, 17
        %v1179 = vpop.permute.xlu0 %1178
        %1180 = vrot.lane.b32.xlu0 %v1168, 17
        %v1181 = vpop.permute.xlu0 %1180
        %1182 = vrot.lane.b32.xlu0 %v1170, 17
        %v1183 = vpop.permute.xlu0 %1182
        %v1184 = vsel %vm450, %v1177, %v1181
        %v1185 = vsel %vm450, %v1179, %v1183
        %v1186 = vsel %vm450, %v1181, %v1177
        %v1187 = vsel %vm450, %v1183, %v1179
        %v1188 = vmul.f32 %v1186, %v457
        %v1189 = vmul.f32 %v1184, %v458
        %v1190 = vmul.f32 %v1187, %v457
        %v1191 = vmul.f32 %v1185, %v458
        %v1192 = vld [vmem:[%s3] sm:$0xff]
        %v1193 = vld [vmem:[%s3 + $0x8] sm:$0xff]
        %v1195 = vsel %vm467, %v1192, 0
        %v1198 = vsel %vm467, %v1193, 0
        %1200 = vmatpush.msra.mxu0 0.0
        %1201 = vmatpush.msra.mxu0 0.0
        %1202 = vmatpush.msra.mxu0 0.0
        %1203 = vmatpush.msra.mxu0 0.0
        %1204 = vmatpush.msra.mxu0 0.0
        %1205 = vmatpush.msra.mxu0 0.0
        %1206 = vmatpush.msra.mxu0 0.0
        %1207 = vmatpush.msra.mxu0 0.0
        %1208 = vmatpush.msra.mxu0 0.0
        %1209 = vmatpush.msra.mxu0 0.0
        %1210 = vmatpush.msra.mxu0 0.0
        %1211 = vmatpush.msra.mxu0 0.0
        %1212 = vmatpush.msra.mxu0 0.0
        %1213 = vmatpush.msra.mxu0 0.0
        %1214 = vmatpush.msra.mxu0 %v1190
        %1215 = vmatpush.msra.mxu0 %v1188
        %1216 = vmatmul.f32.gmra.mxu0 %v1195
        %v1217 = vpop.f32.mrf.mxu0
        %v1218 = vadd.f32 0.0, %v1217
        %1219 = vmatmul.f32.gmra.mxu0 %v1198
        %v1220 = vpop.f32.mrf.mxu0
        %v1221 = vadd.f32 0.0, %v1220
        %1222 = vdwg.mxu0
        %1223 = vmatpush.msra.mxu0 0.0
        %1224 = vmatpush.msra.mxu0 0.0
        %1225 = vmatpush.msra.mxu0 0.0
        %1226 = vmatpush.msra.mxu0 0.0
        %1227 = vmatpush.msra.mxu0 0.0
        %1228 = vmatpush.msra.mxu0 0.0
        %1229 = vmatpush.msra.mxu0 0.0
        %1230 = vmatpush.msra.mxu0 0.0
        %1231 = vmatpush.msra.mxu0 0.0
        %1232 = vmatpush.msra.mxu0 0.0
        %1233 = vmatpush.msra.mxu0 0.0
        %1234 = vmatpush.msra.mxu0 0.0
        %1235 = vmatpush.msra.mxu0 0.0
        %1236 = vmatpush.msra.mxu0 0.0
        %1237 = vmatpush.msra.mxu0 %v1191
        %1238 = vmatpush.msra.mxu0 %v1189
        %1239 = vmatmul.f32.gmra.mxu0 %v1195
        %v1240 = vpop.f32.mrf.mxu0
        %v1241 = vadd.f32 0.0, %v1240
        %1242 = vmatmul.f32.gmra.mxu0 %v1198
        %v1243 = vpop.f32.mrf.mxu0
        %v1244 = vadd.f32 0.0, %v1243
        %1245 = vdwg.mxu0
        %v1247 = vsel %vm467, %v1174, 0
        %v1250 = vsel %vm467, %v1175, 0
        %1252 = vmatpush.msra.mxu0 0.0
        %1253 = vmatpush.msra.mxu0 0.0
        %1254 = vmatpush.msra.mxu0 0.0
        %1255 = vmatpush.msra.mxu0 0.0
        %1256 = vmatpush.msra.mxu0 0.0
        %1257 = vmatpush.msra.mxu0 0.0
        %1258 = vmatpush.msra.mxu0 0.0
        %1259 = vmatpush.msra.mxu0 0.0
        %1260 = vmatpush.msra.mxu0 0.0
        %1261 = vmatpush.msra.mxu0 0.0
        %1262 = vmatpush.msra.mxu0 0.0
        %1263 = vmatpush.msra.mxu0 0.0
        %1264 = vmatpush.msra.mxu0 0.0
        %1265 = vmatpush.msra.mxu0 0.0
        %1266 = vmatpush.msra.mxu0 %v1169
        %1267 = vmatpush.msra.mxu0 %v1167
        %1268 = vmatmul.f32.gmra.mxu0 %v1247
        %v1269 = vpop.f32.mrf.mxu0
        %v1270 = vadd.f32 %v1218, %v1269
        %1271 = vmatmul.f32.gmra.mxu0 %v1250
        %v1272 = vpop.f32.mrf.mxu0
        %v1273 = vadd.f32 %v1221, %v1272
        %1274 = vdwg.mxu0
        %1275 = vmatpush.msra.mxu0 0.0
        %1276 = vmatpush.msra.mxu0 0.0
        %1277 = vmatpush.msra.mxu0 0.0
        %1278 = vmatpush.msra.mxu0 0.0
        %1279 = vmatpush.msra.mxu0 0.0
        %1280 = vmatpush.msra.mxu0 0.0
        %1281 = vmatpush.msra.mxu0 0.0
        %1282 = vmatpush.msra.mxu0 0.0
        %1283 = vmatpush.msra.mxu0 0.0
        %1284 = vmatpush.msra.mxu0 0.0
        %1285 = vmatpush.msra.mxu0 0.0
        %1286 = vmatpush.msra.mxu0 0.0
        %1287 = vmatpush.msra.mxu0 0.0
        %1288 = vmatpush.msra.mxu0 0.0
        %1289 = vmatpush.msra.mxu0 %v1170
        %1290 = vmatpush.msra.mxu0 %v1168
        %1291 = vmatmul.f32.gmra.mxu0 %v1247
        %v1292 = vpop.f32.mrf.mxu0
        %v1293 = vadd.f32 %v1241, %v1292
        %1294 = vmatmul.f32.gmra.mxu0 %v1250
        %v1295 = vpop.f32.mrf.mxu0
        %v1296 = vadd.f32 %v1244, %v1295
        %1297 = vdwg.mxu0
        %1298 = vrot.lane.b32.xlu0 %v1167, 16
        %v1299 = vpop.permute.xlu0 %1298
        %1300 = vrot.lane.b32.xlu0 %v1169, 16
        %v1301 = vpop.permute.xlu0 %1300
        %1302 = vrot.lane.b32.xlu0 %v1168, 16
        %v1303 = vpop.permute.xlu0 %1302
        %1304 = vrot.lane.b32.xlu0 %v1170, 16
        %v1305 = vpop.permute.xlu0 %1304
        %v1306 = vsel %vm580, %v1299, %v1303
        %v1307 = vsel %vm580, %v1301, %v1305
        %v1308 = vsel %vm580, %v1303, %v1299
        %v1309 = vsel %vm580, %v1305, %v1301
        %v1310 = vmul.f32 %v1308, %v588
        %v1311 = vmul.f32 %v1306, %v589
        %v1312 = vmul.f32 %v1309, %v588
        %v1313 = vmul.f32 %v1307, %v589
        %s1314 = scalar_lea.vmem %s3, 16
        %v1315 = vld [vmem:[%s1314] sm:$0xff]
        %v1316 = vld [vmem:[%s1314 + $0x8] sm:$0xff]
        %v1318 = vsel %vm467, %v1315, 0
        %v1321 = vsel %vm467, %v1316, 0
        %1323 = vmatpush.msra.mxu0 0.0
        %1324 = vmatpush.msra.mxu0 0.0
        %1325 = vmatpush.msra.mxu0 0.0
        %1326 = vmatpush.msra.mxu0 0.0
        %1327 = vmatpush.msra.mxu0 0.0
        %1328 = vmatpush.msra.mxu0 0.0
        %1329 = vmatpush.msra.mxu0 0.0
        %1330 = vmatpush.msra.mxu0 0.0
        %1331 = vmatpush.msra.mxu0 0.0
        %1332 = vmatpush.msra.mxu0 0.0
        %1333 = vmatpush.msra.mxu0 0.0
        %1334 = vmatpush.msra.mxu0 0.0
        %1335 = vmatpush.msra.mxu0 0.0
        %1336 = vmatpush.msra.mxu0 0.0
        %1337 = vmatpush.msra.mxu0 %v1312
        %1338 = vmatpush.msra.mxu0 %v1310
        %1339 = vmatmul.f32.gmra.mxu0 %v1318
        %v1340 = vpop.f32.mrf.mxu0
        %v1341 = vadd.f32 0.0, %v1340
        %1342 = vmatmul.f32.gmra.mxu0 %v1321
        %v1343 = vpop.f32.mrf.mxu0
        %v1344 = vadd.f32 0.0, %v1343
        %1345 = vdwg.mxu0
        %1346 = vmatpush.msra.mxu0 0.0
        %1347 = vmatpush.msra.mxu0 0.0
        %1348 = vmatpush.msra.mxu0 0.0
        %1349 = vmatpush.msra.mxu0 0.0
        %1350 = vmatpush.msra.mxu0 0.0
        %1351 = vmatpush.msra.mxu0 0.0
        %1352 = vmatpush.msra.mxu0 0.0
        %1353 = vmatpush.msra.mxu0 0.0
        %1354 = vmatpush.msra.mxu0 0.0
        %1355 = vmatpush.msra.mxu0 0.0
        %1356 = vmatpush.msra.mxu0 0.0
        %1357 = vmatpush.msra.mxu0 0.0
        %1358 = vmatpush.msra.mxu0 0.0
        %1359 = vmatpush.msra.mxu0 0.0
        %1360 = vmatpush.msra.mxu0 %v1313
        %1361 = vmatpush.msra.mxu0 %v1311
        %1362 = vmatmul.f32.gmra.mxu0 %v1318
        %v1363 = vpop.f32.mrf.mxu0
        %v1364 = vadd.f32 0.0, %v1363
        %1365 = vmatmul.f32.gmra.mxu0 %v1321
        %v1366 = vpop.f32.mrf.mxu0
        %v1367 = vadd.f32 0.0, %v1366
        %1368 = vdwg.mxu0
        %v1369 = vadd.f32 %v1270, %v1341
        %v1370 = vadd.f32 %v1293, %v1364
        %v1371 = vadd.f32 %v1273, %v1344
        %v1372 = vadd.f32 %v1296, %v1367
        %1373 = vrot.lane.b32.xlu0 %v1167, 15
        %v1374 = vpop.permute.xlu0 %1373
        %1375 = vrot.lane.b32.xlu0 %v1169, 15
        %v1376 = vpop.permute.xlu0 %1375
        %1377 = vrot.lane.b32.xlu0 %v1168, 15
        %v1378 = vpop.permute.xlu0 %1377
        %1379 = vrot.lane.b32.xlu0 %v1170, 15
        %v1380 = vpop.permute.xlu0 %1379
        %v1381 = vsel %vm663, %v1374, %v1378
        %v1382 = vsel %vm663, %v1376, %v1380
        %v1383 = vsel %vm663, %v1378, %v1374
        %v1384 = vsel %vm663, %v1380, %v1376
        %v1385 = vmul.f32 %v1383, %v671
        %v1386 = vmul.f32 %v1381, %v672
        %v1387 = vmul.f32 %v1384, %v671
        %v1388 = vmul.f32 %v1382, %v672
        %s1389 = scalar_lea.vmem %s3, 32
        %v1390 = vld [vmem:[%s1389] sm:$0xff]
        %v1391 = vld [vmem:[%s1389 + $0x8] sm:$0xff]
        %v1393 = vsel %vm467, %v1390, 0
        %v1396 = vsel %vm467, %v1391, 0
        %1398 = vmatpush.msra.mxu0 0.0
        %1399 = vmatpush.msra.mxu0 0.0
        %1400 = vmatpush.msra.mxu0 0.0
        %1401 = vmatpush.msra.mxu0 0.0
        %1402 = vmatpush.msra.mxu0 0.0
        %1403 = vmatpush.msra.mxu0 0.0
        %1404 = vmatpush.msra.mxu0 0.0
        %1405 = vmatpush.msra.mxu0 0.0
        %1406 = vmatpush.msra.mxu0 0.0
        %1407 = vmatpush.msra.mxu0 0.0
        %1408 = vmatpush.msra.mxu0 0.0
        %1409 = vmatpush.msra.mxu0 0.0
        %1410 = vmatpush.msra.mxu0 0.0
        %1411 = vmatpush.msra.mxu0 0.0
        %1412 = vmatpush.msra.mxu0 %v1387
        %1413 = vmatpush.msra.mxu0 %v1385
        %1414 = vmatmul.f32.gmra.mxu0 %v1393
        %v1415 = vpop.f32.mrf.mxu0
        %v1416 = vadd.f32 0.0, %v1415
        %1417 = vmatmul.f32.gmra.mxu0 %v1396
        %v1418 = vpop.f32.mrf.mxu0
        %v1419 = vadd.f32 0.0, %v1418
        %1420 = vdwg.mxu0
        %1421 = vmatpush.msra.mxu0 0.0
        %1422 = vmatpush.msra.mxu0 0.0
        %1423 = vmatpush.msra.mxu0 0.0
        %1424 = vmatpush.msra.mxu0 0.0
        %1425 = vmatpush.msra.mxu0 0.0
        %1426 = vmatpush.msra.mxu0 0.0
        %1427 = vmatpush.msra.mxu0 0.0
        %1428 = vmatpush.msra.mxu0 0.0
        %1429 = vmatpush.msra.mxu0 0.0
        %1430 = vmatpush.msra.mxu0 0.0
        %1431 = vmatpush.msra.mxu0 0.0
        %1432 = vmatpush.msra.mxu0 0.0
        %1433 = vmatpush.msra.mxu0 0.0
        %1434 = vmatpush.msra.mxu0 0.0
        %1435 = vmatpush.msra.mxu0 %v1388
        %1436 = vmatpush.msra.mxu0 %v1386
        %1437 = vmatmul.f32.gmra.mxu0 %v1393
        %v1438 = vpop.f32.mrf.mxu0
        %v1439 = vadd.f32 0.0, %v1438
        %1440 = vmatmul.f32.gmra.mxu0 %v1396
        %v1441 = vpop.f32.mrf.mxu0
        %v1442 = vadd.f32 0.0, %v1441
        %1443 = vdwg.mxu0
        %v1444 = vadd.f32 %v1369, %v1416
        %v1445 = vadd.f32 %v1370, %v1439
        %v1446 = vadd.f32 %v1371, %v1419
        %v1447 = vadd.f32 %v1372, %v1442
        %1448 = vrot.lane.b32.xlu0 %v1167, 1
        %v1449 = vpop.permute.xlu0 %1448
        %1450 = vrot.lane.b32.xlu0 %v1169, 1
        %v1451 = vpop.permute.xlu0 %1450
        %1452 = vrot.lane.b32.xlu0 %v1168, 1
        %v1453 = vpop.permute.xlu0 %1452
        %1454 = vrot.lane.b32.xlu0 %v1170, 1
        %v1455 = vpop.permute.xlu0 %1454
        %v1456 = vsel %vm746, %v1449, %v1453
        %v1457 = vsel %vm746, %v1451, %v1455
        %v1458 = vsel %vm746, %v1453, %v1449
        %v1459 = vsel %vm746, %v1455, %v1451
        %v1460 = vmul.f32 %v1458, %v754
        %v1461 = vmul.f32 %v1456, %v755
        %v1462 = vmul.f32 %v1459, %v754
        %v1463 = vmul.f32 %v1457, %v755
        %s1464 = scalar_lea.vmem %s3, 48
        %v1465 = vld [vmem:[%s1464] sm:$0xff]
        %v1466 = vld [vmem:[%s1464 + $0x8] sm:$0xff]
        %v1468 = vsel %vm467, %v1465, 0
        %v1471 = vsel %vm467, %v1466, 0
        %1473 = vmatpush.msra.mxu0 0.0
        %1474 = vmatpush.msra.mxu0 0.0
        %1475 = vmatpush.msra.mxu0 0.0
        %1476 = vmatpush.msra.mxu0 0.0
        %1477 = vmatpush.msra.mxu0 0.0
        %1478 = vmatpush.msra.mxu0 0.0
        %1479 = vmatpush.msra.mxu0 0.0
        %1480 = vmatpush.msra.mxu0 0.0
        %1481 = vmatpush.msra.mxu0 0.0
        %1482 = vmatpush.msra.mxu0 0.0
        %1483 = vmatpush.msra.mxu0 0.0
        %1484 = vmatpush.msra.mxu0 0.0
        %1485 = vmatpush.msra.mxu0 0.0
        %1486 = vmatpush.msra.mxu0 0.0
        %1487 = vmatpush.msra.mxu0 %v1462
        %1488 = vmatpush.msra.mxu0 %v1460
        %1489 = vmatmul.f32.gmra.mxu0 %v1468
        %v1490 = vpop.f32.mrf.mxu0
        %v1491 = vadd.f32 0.0, %v1490
        %1492 = vmatmul.f32.gmra.mxu0 %v1471
        %v1493 = vpop.f32.mrf.mxu0
        %v1494 = vadd.f32 0.0, %v1493
        %1495 = vdwg.mxu0
        %1496 = vmatpush.msra.mxu0 0.0
        %1497 = vmatpush.msra.mxu0 0.0
        %1498 = vmatpush.msra.mxu0 0.0
        %1499 = vmatpush.msra.mxu0 0.0
        %1500 = vmatpush.msra.mxu0 0.0
        %1501 = vmatpush.msra.mxu0 0.0
        %1502 = vmatpush.msra.mxu0 0.0
        %1503 = vmatpush.msra.mxu0 0.0
        %1504 = vmatpush.msra.mxu0 0.0
        %1505 = vmatpush.msra.mxu0 0.0
        %1506 = vmatpush.msra.mxu0 0.0
        %1507 = vmatpush.msra.mxu0 0.0
        %1508 = vmatpush.msra.mxu0 0.0
        %1509 = vmatpush.msra.mxu0 0.0
        %1510 = vmatpush.msra.mxu0 %v1463
        %1511 = vmatpush.msra.mxu0 %v1461
        %1512 = vmatmul.f32.gmra.mxu0 %v1468
        %v1513 = vpop.f32.mrf.mxu0
        %v1514 = vadd.f32 0.0, %v1513
        %1515 = vmatmul.f32.gmra.mxu0 %v1471
        %v1516 = vpop.f32.mrf.mxu0
        %v1517 = vadd.f32 0.0, %v1516
        %1518 = vdwg.mxu0
        %v1519 = vadd.f32 %v1444, %v1491
        %v1520 = vadd.f32 %v1445, %v1514
        %v1521 = vadd.f32 %v1446, %v1494
        %v1522 = vadd.f32 %v1447, %v1517
        %1523 = vrot.lane.b32.xlu0 %v1167, 127
        %v1524 = vpop.permute.xlu0 %1523
        %1525 = vrot.lane.b32.xlu0 %v1169, 127
        %v1526 = vpop.permute.xlu0 %1525
        %1527 = vrot.lane.b32.xlu0 %v1168, 127
        %v1528 = vpop.permute.xlu0 %1527
        %1529 = vrot.lane.b32.xlu0 %v1170, 127
        %v1530 = vpop.permute.xlu0 %1529
        %v1531 = vsel %vm829, %v1524, %v1528
        %v1532 = vsel %vm829, %v1526, %v1530
        %v1533 = vsel %vm829, %v1528, %v1524
        %v1534 = vsel %vm829, %v1530, %v1526
        %v1535 = vmul.f32 %v1531, %v837
        %v1536 = vmul.f32 %v1533, %v838
        %v1537 = vmul.f32 %v1532, %v837
        %v1538 = vmul.f32 %v1534, %v838
        %s1539 = scalar_lea.vmem %s3, 80
        %v1540 = vld [vmem:[%s1539] sm:$0xff]
        %v1541 = vld [vmem:[%s1539 + $0x8] sm:$0xff]
        %v1543 = vsel %vm467, %v1540, 0
        %v1546 = vsel %vm467, %v1541, 0
        %1548 = vmatpush.msra.mxu0 0.0
        %1549 = vmatpush.msra.mxu0 0.0
        %1550 = vmatpush.msra.mxu0 0.0
        %1551 = vmatpush.msra.mxu0 0.0
        %1552 = vmatpush.msra.mxu0 0.0
        %1553 = vmatpush.msra.mxu0 0.0
        %1554 = vmatpush.msra.mxu0 0.0
        %1555 = vmatpush.msra.mxu0 0.0
        %1556 = vmatpush.msra.mxu0 0.0
        %1557 = vmatpush.msra.mxu0 0.0
        %1558 = vmatpush.msra.mxu0 0.0
        %1559 = vmatpush.msra.mxu0 0.0
        %1560 = vmatpush.msra.mxu0 0.0
        %1561 = vmatpush.msra.mxu0 0.0
        %1562 = vmatpush.msra.mxu0 %v1537
        %1563 = vmatpush.msra.mxu0 %v1535
        %1564 = vmatmul.f32.gmra.mxu0 %v1543
        %v1565 = vpop.f32.mrf.mxu0
        %v1566 = vadd.f32 0.0, %v1565
        %1567 = vmatmul.f32.gmra.mxu0 %v1546
        %v1568 = vpop.f32.mrf.mxu0
        %v1569 = vadd.f32 0.0, %v1568
        %1570 = vdwg.mxu0
        %1571 = vmatpush.msra.mxu0 0.0
        %1572 = vmatpush.msra.mxu0 0.0
        %1573 = vmatpush.msra.mxu0 0.0
        %1574 = vmatpush.msra.mxu0 0.0
        %1575 = vmatpush.msra.mxu0 0.0
        %1576 = vmatpush.msra.mxu0 0.0
        %1577 = vmatpush.msra.mxu0 0.0
        %1578 = vmatpush.msra.mxu0 0.0
        %1579 = vmatpush.msra.mxu0 0.0
        %1580 = vmatpush.msra.mxu0 0.0
        %1581 = vmatpush.msra.mxu0 0.0
        %1582 = vmatpush.msra.mxu0 0.0
        %1583 = vmatpush.msra.mxu0 0.0
        %1584 = vmatpush.msra.mxu0 0.0
        %1585 = vmatpush.msra.mxu0 %v1538
        %1586 = vmatpush.msra.mxu0 %v1536
        %1587 = vmatmul.f32.gmra.mxu0 %v1543
        %v1588 = vpop.f32.mrf.mxu0
        %v1589 = vadd.f32 0.0, %v1588
        %1590 = vmatmul.f32.gmra.mxu0 %v1546
        %v1591 = vpop.f32.mrf.mxu0
        %v1592 = vadd.f32 0.0, %v1591
        %1593 = vdwg.mxu0
        %v1594 = vadd.f32 %v1519, %v1566
        %v1595 = vadd.f32 %v1520, %v1589
        %v1596 = vadd.f32 %v1521, %v1569
        %v1597 = vadd.f32 %v1522, %v1592
        %1598 = vrot.lane.b32.xlu0 %v1167, 113
        %v1599 = vpop.permute.xlu0 %1598
        %1600 = vrot.lane.b32.xlu0 %v1169, 113
        %v1601 = vpop.permute.xlu0 %1600
        %1602 = vrot.lane.b32.xlu0 %v1168, 113
        %v1603 = vpop.permute.xlu0 %1602
        %1604 = vrot.lane.b32.xlu0 %v1170, 113
        %v1605 = vpop.permute.xlu0 %1604
        %v1606 = vsel %vm912, %v1599, %v1603
        %v1607 = vsel %vm912, %v1601, %v1605
        %v1608 = vsel %vm912, %v1603, %v1599
        %v1609 = vsel %vm912, %v1605, %v1601
        %v1610 = vmul.f32 %v1606, %v920
        %v1611 = vmul.f32 %v1608, %v921
        %v1612 = vmul.f32 %v1607, %v920
        %v1613 = vmul.f32 %v1609, %v921
        %s1614 = scalar_lea.vmem %s3, 96
        %v1615 = vld [vmem:[%s1614] sm:$0xff]
        %v1616 = vld [vmem:[%s1614 + $0x8] sm:$0xff]
        %v1618 = vsel %vm467, %v1615, 0
        %v1621 = vsel %vm467, %v1616, 0
        %1623 = vmatpush.msra.mxu0 0.0
        %1624 = vmatpush.msra.mxu0 0.0
        %1625 = vmatpush.msra.mxu0 0.0
        %1626 = vmatpush.msra.mxu0 0.0
        %1627 = vmatpush.msra.mxu0 0.0
        %1628 = vmatpush.msra.mxu0 0.0
        %1629 = vmatpush.msra.mxu0 0.0
        %1630 = vmatpush.msra.mxu0 0.0
        %1631 = vmatpush.msra.mxu0 0.0
        %1632 = vmatpush.msra.mxu0 0.0
        %1633 = vmatpush.msra.mxu0 0.0
        %1634 = vmatpush.msra.mxu0 0.0
        %1635 = vmatpush.msra.mxu0 0.0
        %1636 = vmatpush.msra.mxu0 0.0
        %1637 = vmatpush.msra.mxu0 %v1612
        %1638 = vmatpush.msra.mxu0 %v1610
        %1639 = vmatmul.f32.gmra.mxu0 %v1618
        %v1640 = vpop.f32.mrf.mxu0
        %v1641 = vadd.f32 0.0, %v1640
        %1642 = vmatmul.f32.gmra.mxu0 %v1621
        %v1643 = vpop.f32.mrf.mxu0
        %v1644 = vadd.f32 0.0, %v1643
        %1645 = vdwg.mxu0
        %1646 = vmatpush.msra.mxu0 0.0
        %1647 = vmatpush.msra.mxu0 0.0
        %1648 = vmatpush.msra.mxu0 0.0
        %1649 = vmatpush.msra.mxu0 0.0
        %1650 = vmatpush.msra.mxu0 0.0
        %1651 = vmatpush.msra.mxu0 0.0
        %1652 = vmatpush.msra.mxu0 0.0
        %1653 = vmatpush.msra.mxu0 0.0
        %1654 = vmatpush.msra.mxu0 0.0
        %1655 = vmatpush.msra.mxu0 0.0
        %1656 = vmatpush.msra.mxu0 0.0
        %1657 = vmatpush.msra.mxu0 0.0
        %1658 = vmatpush.msra.mxu0 0.0
        %1659 = vmatpush.msra.mxu0 0.0
        %1660 = vmatpush.msra.mxu0 %v1613
        %1661 = vmatpush.msra.mxu0 %v1611
        %1662 = vmatmul.f32.gmra.mxu0 %v1618
        %v1663 = vpop.f32.mrf.mxu0
        %v1664 = vadd.f32 0.0, %v1663
        %1665 = vmatmul.f32.gmra.mxu0 %v1621
        %v1666 = vpop.f32.mrf.mxu0
        %v1667 = vadd.f32 0.0, %v1666
        %1668 = vdwg.mxu0
        %v1669 = vadd.f32 %v1594, %v1641
        %v1670 = vadd.f32 %v1595, %v1664
        %v1671 = vadd.f32 %v1596, %v1644
        %v1672 = vadd.f32 %v1597, %v1667
        %1673 = vrot.lane.b32.xlu0 %v1167, 112
        %v1674 = vpop.permute.xlu0 %1673
        %1675 = vrot.lane.b32.xlu0 %v1169, 112
        %v1676 = vpop.permute.xlu0 %1675
        %1677 = vrot.lane.b32.xlu0 %v1168, 112
        %v1678 = vpop.permute.xlu0 %1677
        %1679 = vrot.lane.b32.xlu0 %v1170, 112
        %v1680 = vpop.permute.xlu0 %1679
        %v1681 = vsel %vm995, %v1674, %v1678
        %v1682 = vsel %vm995, %v1676, %v1680
        %v1683 = vsel %vm995, %v1678, %v1674
        %v1684 = vsel %vm995, %v1680, %v1676
        %v1685 = vmul.f32 %v1681, %v1003
        %v1686 = vmul.f32 %v1683, %v1004
        %v1687 = vmul.f32 %v1682, %v1003
        %v1688 = vmul.f32 %v1684, %v1004
        %s1689 = scalar_lea.vmem %s3, 112
        %v1690 = vld [vmem:[%s1689] sm:$0xff]
        %v1691 = vld [vmem:[%s1689 + $0x8] sm:$0xff]
        %v1693 = vsel %vm467, %v1690, 0
        %v1696 = vsel %vm467, %v1691, 0
        %1698 = vmatpush.msra.mxu0 0.0
        %1699 = vmatpush.msra.mxu0 0.0
        %1700 = vmatpush.msra.mxu0 0.0
        %1701 = vmatpush.msra.mxu0 0.0
        %1702 = vmatpush.msra.mxu0 0.0
        %1703 = vmatpush.msra.mxu0 0.0
        %1704 = vmatpush.msra.mxu0 0.0
        %1705 = vmatpush.msra.mxu0 0.0
        %1706 = vmatpush.msra.mxu0 0.0
        %1707 = vmatpush.msra.mxu0 0.0
        %1708 = vmatpush.msra.mxu0 0.0
        %1709 = vmatpush.msra.mxu0 0.0
        %1710 = vmatpush.msra.mxu0 0.0
        %1711 = vmatpush.msra.mxu0 0.0
        %1712 = vmatpush.msra.mxu0 %v1687
        %1713 = vmatpush.msra.mxu0 %v1685
        %1714 = vmatmul.f32.gmra.mxu0 %v1693
        %v1715 = vpop.f32.mrf.mxu0
        %v1716 = vadd.f32 0.0, %v1715
        %1717 = vmatmul.f32.gmra.mxu0 %v1696
        %v1718 = vpop.f32.mrf.mxu0
        %v1719 = vadd.f32 0.0, %v1718
        %1720 = vdwg.mxu0
        %1721 = vmatpush.msra.mxu0 0.0
        %1722 = vmatpush.msra.mxu0 0.0
        %1723 = vmatpush.msra.mxu0 0.0
        %1724 = vmatpush.msra.mxu0 0.0
        %1725 = vmatpush.msra.mxu0 0.0
        %1726 = vmatpush.msra.mxu0 0.0
        %1727 = vmatpush.msra.mxu0 0.0
        %1728 = vmatpush.msra.mxu0 0.0
        %1729 = vmatpush.msra.mxu0 0.0
        %1730 = vmatpush.msra.mxu0 0.0
        %1731 = vmatpush.msra.mxu0 0.0
        %1732 = vmatpush.msra.mxu0 0.0
        %1733 = vmatpush.msra.mxu0 0.0
        %1734 = vmatpush.msra.mxu0 0.0
        %1735 = vmatpush.msra.mxu0 %v1688
        %1736 = vmatpush.msra.mxu0 %v1686
        %1737 = vmatmul.f32.gmra.mxu0 %v1693
        %v1738 = vpop.f32.mrf.mxu0
        %v1739 = vadd.f32 0.0, %v1738
        %1740 = vmatmul.f32.gmra.mxu0 %v1696
        %v1741 = vpop.f32.mrf.mxu0
        %v1742 = vadd.f32 0.0, %v1741
        %1743 = vdwg.mxu0
        %v1744 = vadd.f32 %v1669, %v1716
        %v1745 = vadd.f32 %v1670, %v1739
        %v1746 = vadd.f32 %v1671, %v1719
        %v1747 = vadd.f32 %v1672, %v1742
        %1748 = vrot.lane.b32.xlu0 %v1167, 111
        %v1749 = vpop.permute.xlu0 %1748
        %1750 = vrot.lane.b32.xlu0 %v1169, 111
        %v1751 = vpop.permute.xlu0 %1750
        %1752 = vrot.lane.b32.xlu0 %v1168, 111
        %v1753 = vpop.permute.xlu0 %1752
        %1754 = vrot.lane.b32.xlu0 %v1170, 111
        %v1755 = vpop.permute.xlu0 %1754
        %v1756 = vsel %vm1078, %v1749, %v1753
        %v1757 = vsel %vm1078, %v1751, %v1755
        %v1758 = vsel %vm1078, %v1753, %v1749
        %v1759 = vsel %vm1078, %v1755, %v1751
        %v1760 = vmul.f32 %v1756, %v1086
        %v1761 = vmul.f32 %v1758, %v1087
        %v1762 = vmul.f32 %v1757, %v1086
        %v1763 = vmul.f32 %v1759, %v1087
        %s1764 = scalar_lea.vmem %s3, 128
        %v1765 = vld [vmem:[%s1764] sm:$0xff]
        %v1766 = vld [vmem:[%s1764 + $0x8] sm:$0xff]
        %v1768 = vsel %vm467, %v1765, 0
        %v1771 = vsel %vm467, %v1766, 0
        %1773 = vmatpush.msra.mxu0 0.0
        %1774 = vmatpush.msra.mxu0 0.0
        %1775 = vmatpush.msra.mxu0 0.0
        %1776 = vmatpush.msra.mxu0 0.0
        %1777 = vmatpush.msra.mxu0 0.0
        %1778 = vmatpush.msra.mxu0 0.0
        %1779 = vmatpush.msra.mxu0 0.0
        %1780 = vmatpush.msra.mxu0 0.0
        %1781 = vmatpush.msra.mxu0 0.0
        %1782 = vmatpush.msra.mxu0 0.0
        %1783 = vmatpush.msra.mxu0 0.0
        %1784 = vmatpush.msra.mxu0 0.0
        %1785 = vmatpush.msra.mxu0 0.0
        %1786 = vmatpush.msra.mxu0 0.0
        %1787 = vmatpush.msra.mxu0 %v1762
        %1788 = vmatpush.msra.mxu0 %v1760
        %1789 = vmatmul.f32.gmra.mxu0 %v1768
        %v1790 = vpop.f32.mrf.mxu0
        %v1791 = vadd.f32 0.0, %v1790
        %1792 = vmatmul.f32.gmra.mxu0 %v1771
        %v1793 = vpop.f32.mrf.mxu0
        %v1794 = vadd.f32 0.0, %v1793
        %1795 = vdwg.mxu0
        %1796 = vmatpush.msra.mxu0 0.0
        %1797 = vmatpush.msra.mxu0 0.0
        %1798 = vmatpush.msra.mxu0 0.0
        %1799 = vmatpush.msra.mxu0 0.0
        %1800 = vmatpush.msra.mxu0 0.0
        %1801 = vmatpush.msra.mxu0 0.0
        %1802 = vmatpush.msra.mxu0 0.0
        %1803 = vmatpush.msra.mxu0 0.0
        %1804 = vmatpush.msra.mxu0 0.0
        %1805 = vmatpush.msra.mxu0 0.0
        %1806 = vmatpush.msra.mxu0 0.0
        %1807 = vmatpush.msra.mxu0 0.0
        %1808 = vmatpush.msra.mxu0 0.0
        %1809 = vmatpush.msra.mxu0 0.0
        %1810 = vmatpush.msra.mxu0 %v1763
        %1811 = vmatpush.msra.mxu0 %v1761
        %1812 = vmatmul.f32.gmra.mxu0 %v1768
        %v1813 = vpop.f32.mrf.mxu0
        %v1814 = vadd.f32 0.0, %v1813
        %1815 = vmatmul.f32.gmra.mxu0 %v1771
        %v1816 = vpop.f32.mrf.mxu0
        %v1817 = vadd.f32 0.0, %v1816
        %1818 = vdwg.mxu0
        %v1819 = vadd.f32 %v1744, %v1791
        %v1820 = vadd.f32 %v1745, %v1814
        %v1821 = vadd.f32 %v1746, %v1794
        %v1822 = vadd.f32 %v1747, %v1817
        %1824 = vset.pattern.permute.xlu0 0
        %1825 = vperm.xlu0 %1824, %v1171
        %v1826 = vpop.permute.xlu0 %1825
        %1829 = vset.pattern.permute.xlu0 0
        %1830 = vperm.xlu0 %1829, %v1172
        %v1831 = vpop.permute.xlu0 %1830
        %v1833 = vadd.f32 %v1819, %v1826
        %v1834 = vadd.f32 %v1820, %v1826
        %v1835 = vadd.f32 %v1821, %v1831
        %v1836 = vadd.f32 %v1822, %v1831
        %v1837 = vadd.f32 %v1833, %v1834
        %1838 = vadd.xlane.f32.xlu0 %v1837
        %v1839 = vpop.xlane.xlu0 %1838
        %v1840 = vadd.f32 %v1835, %v1836
        %1841 = vadd.xlane.f32.xlu0 %v1840
        %v1842 = vpop.xlane.xlu0 %1841
        %v1843 = vmul.f32 %v1839, 0.00390625
        %v1844 = vmul.f32 %v1842, 0.00390625
        %v1845 = vld [vmem:[%s5] sm:$0xff]
        %v1846 = vld [vmem:[%s5 + $0x8] sm:$0xff]
        %v1847 = vmul.f32 %v1845, %v1843
        %v1848 = vmul.f32 %v1846, %v1844
        %vm1849 = vcmask 31744
        %v1850 = vsel %vm1849, %v1847, 0.0
        %v1851 = vsel %vm1849, %v1848, 0.0
        %v1852 = vadd.f32 %v1850, %v1851
        %v1853 = vrot.slane %v1852, 4
        %v1854 = vadd.f32 %v1852, %v1853
        %v1855 = vrot.slane %v1854, 2
        %v1856 = vadd.f32 %v1854, %v1855
        %v1857 = vrot.slane %v1856, 1
        %v1858 = vadd.f32 %v1856, %v1857
        %v1859 = vld [vmem:[%s6] sm:$0x1]
        %v1860 = vadd.f32 %v1858, %v1859
        %v1861 = vmax.f32 %v1860, 0.0
        %v1862 = vld [vmem:[%s7] sm:$0xff]
        %v1863 = vld [vmem:[%s7 + $0x8] sm:$0xff]
        %v1864 = vperm.slane %v1861, 0
        %v1865 = vmul.f32 %v1862, %v1864
        %v1866 = vmul.f32 %v1863, %v1864
        %v1867 = vsel %vm1849, %v1865, 0.0
        %1868 = vadd.xlane.f32.xlu0 %v1867
        %v1869 = vpop.xlane.xlu0 %1868
        %v1870 = vsel %vm1849, %v1866, 0.0
        %1871 = vadd.xlane.f32.xlu0 %v1870
        %v1872 = vpop.xlane.xlu0 %1871
        %v1873 = vld [vmem:[%s8] sm:$0xff]
        %v1874 = vld [vmem:[%s8 + $0x8] sm:$0xff]
        %v1875 = vadd.f32 %v1869, %v1873
        %v1876 = vadd.f32 %v1872, %v1874
        %v1877 = vxor.u32 %v1875, 2147483648
        %v1878 = vxor.u32 %v1876, 2147483648
        %v1879 = vmul.f32 %v1877, 1.442695
        %v1880 = vpow.pop %v1879
        %v1881 = vmul.f32 %v1878, 1.442695
        %v1882 = vpow.pop %v1881
        %v1883 = vadd.f32 %v1880, 1.0
        %v1884 = vadd.f32 %v1882, 1.0
        %v1885 = vrcp.pop %v1883
        %v1886 = vmul.f32 %v1883, %v1885
        %v1887 = vsub.f32 1.0, %v1886
        %v1888 = vmul.f32 %v1885, %v1887
        %v1889 = vadd.f32 %v1885, %v1888
        %vm1890 = vweird.f32 %v1883
        %vm1891 = vweird.f32 %v1885
        %vm1892 = vmor %vm1890, %vm1891
        %v1893 = vsel %vm1892, %v1885, %v1889
        %v1894 = vand.u32 2147483647, %v1883
        %vm1895 = vcmp.eq.f32.partialorder %v1894, 8.507059e+37
        %v1896 = vand.u32 %v1883, 2147483648
        %v1897 = vor.u32 1.1754944e-38, %v1896
        %v1898 = vsel %vm1895, %v1897, %v1893
        %v1899 = vmul.f32 1.0, %v1898
        %v1900 = vrcp.pop %v1884
        %v1901 = vmul.f32 %v1884, %v1900
        %v1902 = vsub.f32 1.0, %v1901
        %v1903 = vmul.f32 %v1900, %v1902
        %v1904 = vadd.f32 %v1900, %v1903
        %vm1905 = vweird.f32 %v1884
        %vm1906 = vweird.f32 %v1900
        %vm1907 = vmor %vm1905, %vm1906
        %v1908 = vsel %vm1907, %v1900, %v1904
        %v1909 = vand.u32 2147483647, %v1884
        %vm1910 = vcmp.eq.f32.partialorder %v1909, 8.507059e+37
        %v1911 = vand.u32 %v1884, 2147483648
        %v1912 = vor.u32 1.1754944e-38, %v1911
        %v1913 = vsel %vm1910, %v1912, %v1908
        %v1914 = vmul.f32 1.0, %v1913
        %1916 = vset.pattern.permute.xlu0 0
        %1917 = vperm.xlu0 %1916, %v1899
        %v1918 = vpop.permute.xlu0 %1917
        %1921 = vset.pattern.permute.xlu0 0
        %1922 = vperm.xlu0 %1921, %v1914
        %v1923 = vpop.permute.xlu0 %1922
        %v1925 = vmul.f32 %v1833, %v1918
        %v1926 = vmul.f32 %v1834, %v1918
        %v1927 = vmul.f32 %v1835, %v1923
        %v1928 = vmul.f32 %v1836, %v1923
        %v1929 = vadd.f32 %v1925, %v431
        %v1930 = vadd.f32 %v1926, %v432
        %v1931 = vadd.f32 %v1927, %v433
        %v1932 = vadd.f32 %v1928, %v434
        %s1933 = scalar_lea.vmem %s2, 16
        %v1934 = vld [vmem:[%s1933] sm:$0xff]
        %v1935 = vld [vmem:[%s1933 + $0x8] sm:$0xff]
        %s1936 = scalar_lea.vmem %s1, 208
        %v1937 = vld [vmem:[%s1936] sm:$0xff]
        %v1938 = vld [vmem:[%s1936 + $0x8] sm:$0xff]
        %1939 = vrot.lane.b32.xlu0 %v1929, 17
        %v1940 = vpop.permute.xlu0 %1939
        %1941 = vrot.lane.b32.xlu0 %v1931, 17
        %v1942 = vpop.permute.xlu0 %1941
        %1943 = vrot.lane.b32.xlu0 %v1930, 17
        %v1944 = vpop.permute.xlu0 %1943
        %1945 = vrot.lane.b32.xlu0 %v1932, 17
        %v1946 = vpop.permute.xlu0 %1945
        %v1947 = vsel %vm450, %v1940, %v1944
        %v1948 = vsel %vm450, %v1942, %v1946
        %v1949 = vsel %vm450, %v1944, %v1940
        %v1950 = vsel %vm450, %v1946, %v1942
        %v1951 = vmul.f32 %v1949, %v457
        %v1952 = vmul.f32 %v1947, %v458
        %v1953 = vmul.f32 %v1950, %v457
        %v1954 = vmul.f32 %v1948, %v458
        %s1955 = scalar_lea.vmem %s1, 144
        %v1956 = vld [vmem:[%s1955] sm:$0xff]
        %v1957 = vld [vmem:[%s1955 + $0x8] sm:$0xff]
        %v1959 = vsel %vm467, %v1956, 0
        %v1962 = vsel %vm467, %v1957, 0
        %1964 = vmatpush.msra.mxu0 0.0
        %1965 = vmatpush.msra.mxu0 0.0
        %1966 = vmatpush.msra.mxu0 0.0
        %1967 = vmatpush.msra.mxu0 0.0
        %1968 = vmatpush.msra.mxu0 0.0
        %1969 = vmatpush.msra.mxu0 0.0
        %1970 = vmatpush.msra.mxu0 0.0
        %1971 = vmatpush.msra.mxu0 0.0
        %1972 = vmatpush.msra.mxu0 0.0
        %1973 = vmatpush.msra.mxu0 0.0
        %1974 = vmatpush.msra.mxu0 0.0
        %1975 = vmatpush.msra.mxu0 0.0
        %1976 = vmatpush.msra.mxu0 0.0
        %1977 = vmatpush.msra.mxu0 0.0
        %1978 = vmatpush.msra.mxu0 %v1953
        %1979 = vmatpush.msra.mxu0 %v1951
        %1980 = vmatmul.f32.gmra.mxu0 %v1959
        %v1981 = vpop.f32.mrf.mxu0
        %v1982 = vadd.f32 0.0, %v1981
        %1983 = vmatmul.f32.gmra.mxu0 %v1962
        %v1984 = vpop.f32.mrf.mxu0
        %v1985 = vadd.f32 0.0, %v1984
        %1986 = vdwg.mxu0
        %1987 = vmatpush.msra.mxu0 0.0
        %1988 = vmatpush.msra.mxu0 0.0
        %1989 = vmatpush.msra.mxu0 0.0
        %1990 = vmatpush.msra.mxu0 0.0
        %1991 = vmatpush.msra.mxu0 0.0
        %1992 = vmatpush.msra.mxu0 0.0
        %1993 = vmatpush.msra.mxu0 0.0
        %1994 = vmatpush.msra.mxu0 0.0
        %1995 = vmatpush.msra.mxu0 0.0
        %1996 = vmatpush.msra.mxu0 0.0
        %1997 = vmatpush.msra.mxu0 0.0
        %1998 = vmatpush.msra.mxu0 0.0
        %1999 = vmatpush.msra.mxu0 0.0
        %2000 = vmatpush.msra.mxu0 0.0
        %2001 = vmatpush.msra.mxu0 %v1954
        %2002 = vmatpush.msra.mxu0 %v1952
        %2003 = vmatmul.f32.gmra.mxu0 %v1959
        %v2004 = vpop.f32.mrf.mxu0
        %v2005 = vadd.f32 0.0, %v2004
        %2006 = vmatmul.f32.gmra.mxu0 %v1962
        %v2007 = vpop.f32.mrf.mxu0
        %v2008 = vadd.f32 0.0, %v2007
        %2009 = vdwg.mxu0
        %v2011 = vsel %vm467, %v1937, 0
        %v2014 = vsel %vm467, %v1938, 0
        %2016 = vmatpush.msra.mxu0 0.0
        %2017 = vmatpush.msra.mxu0 0.0
        %2018 = vmatpush.msra.mxu0 0.0
        %2019 = vmatpush.msra.mxu0 0.0
        %2020 = vmatpush.msra.mxu0 0.0
        %2021 = vmatpush.msra.mxu0 0.0
        %2022 = vmatpush.msra.mxu0 0.0
        %2023 = vmatpush.msra.mxu0 0.0
        %2024 = vmatpush.msra.mxu0 0.0
        %2025 = vmatpush.msra.mxu0 0.0
        %2026 = vmatpush.msra.mxu0 0.0
        %2027 = vmatpush.msra.mxu0 0.0
        %2028 = vmatpush.msra.mxu0 0.0
        %2029 = vmatpush.msra.mxu0 0.0
        %2030 = vmatpush.msra.mxu0 %v1931
        %2031 = vmatpush.msra.mxu0 %v1929
        %2032 = vmatmul.f32.gmra.mxu0 %v2011
        %v2033 = vpop.f32.mrf.mxu0
        %v2034 = vadd.f32 %v1982, %v2033
        %2035 = vmatmul.f32.gmra.mxu0 %v2014
        %v2036 = vpop.f32.mrf.mxu0
        %v2037 = vadd.f32 %v1985, %v2036
        %2038 = vdwg.mxu0
        %2039 = vmatpush.msra.mxu0 0.0
        %2040 = vmatpush.msra.mxu0 0.0
        %2041 = vmatpush.msra.mxu0 0.0
        %2042 = vmatpush.msra.mxu0 0.0
        %2043 = vmatpush.msra.mxu0 0.0
        %2044 = vmatpush.msra.mxu0 0.0
        %2045 = vmatpush.msra.mxu0 0.0
        %2046 = vmatpush.msra.mxu0 0.0
        %2047 = vmatpush.msra.mxu0 0.0
        %2048 = vmatpush.msra.mxu0 0.0
        %2049 = vmatpush.msra.mxu0 0.0
        %2050 = vmatpush.msra.mxu0 0.0
        %2051 = vmatpush.msra.mxu0 0.0
        %2052 = vmatpush.msra.mxu0 0.0
        %2053 = vmatpush.msra.mxu0 %v1932
        %2054 = vmatpush.msra.mxu0 %v1930
        %2055 = vmatmul.f32.gmra.mxu0 %v2011
        %v2056 = vpop.f32.mrf.mxu0
        %v2057 = vadd.f32 %v2005, %v2056
        %2058 = vmatmul.f32.gmra.mxu0 %v2014
        %v2059 = vpop.f32.mrf.mxu0
        %v2060 = vadd.f32 %v2008, %v2059
        %2061 = vdwg.mxu0
        %2062 = vrot.lane.b32.xlu0 %v1929, 16
        %v2063 = vpop.permute.xlu0 %2062
        %2064 = vrot.lane.b32.xlu0 %v1931, 16
        %v2065 = vpop.permute.xlu0 %2064
        %2066 = vrot.lane.b32.xlu0 %v1930, 16
        %v2067 = vpop.permute.xlu0 %2066
        %2068 = vrot.lane.b32.xlu0 %v1932, 16
        %v2069 = vpop.permute.xlu0 %2068
        %v2070 = vsel %vm580, %v2063, %v2067
        %v2071 = vsel %vm580, %v2065, %v2069
        %v2072 = vsel %vm580, %v2067, %v2063
        %v2073 = vsel %vm580, %v2069, %v2065
        %v2074 = vmul.f32 %v2072, %v588
        %v2075 = vmul.f32 %v2070, %v589
        %v2076 = vmul.f32 %v2073, %v588
        %v2077 = vmul.f32 %v2071, %v589
        %s2078 = scalar_lea.vmem %s1, 160
        %v2079 = vld [vmem:[%s2078] sm:$0xff]
        %v2080 = vld [vmem:[%s2078 + $0x8] sm:$0xff]
        %v2082 = vsel %vm467, %v2079, 0
        %v2085 = vsel %vm467, %v2080, 0
        %2087 = vmatpush.msra.mxu0 0.0
        %2088 = vmatpush.msra.mxu0 0.0
        %2089 = vmatpush.msra.mxu0 0.0
        %2090 = vmatpush.msra.mxu0 0.0
        %2091 = vmatpush.msra.mxu0 0.0
        %2092 = vmatpush.msra.mxu0 0.0
        %2093 = vmatpush.msra.mxu0 0.0
        %2094 = vmatpush.msra.mxu0 0.0
        %2095 = vmatpush.msra.mxu0 0.0
        %2096 = vmatpush.msra.mxu0 0.0
        %2097 = vmatpush.msra.mxu0 0.0
        %2098 = vmatpush.msra.mxu0 0.0
        %2099 = vmatpush.msra.mxu0 0.0
        %2100 = vmatpush.msra.mxu0 0.0
        %2101 = vmatpush.msra.mxu0 %v2076
        %2102 = vmatpush.msra.mxu0 %v2074
        %2103 = vmatmul.f32.gmra.mxu0 %v2082
        %v2104 = vpop.f32.mrf.mxu0
        %v2105 = vadd.f32 0.0, %v2104
        %2106 = vmatmul.f32.gmra.mxu0 %v2085
        %v2107 = vpop.f32.mrf.mxu0
        %v2108 = vadd.f32 0.0, %v2107
        %2109 = vdwg.mxu0
        %2110 = vmatpush.msra.mxu0 0.0
        %2111 = vmatpush.msra.mxu0 0.0
        %2112 = vmatpush.msra.mxu0 0.0
        %2113 = vmatpush.msra.mxu0 0.0
        %2114 = vmatpush.msra.mxu0 0.0
        %2115 = vmatpush.msra.mxu0 0.0
        %2116 = vmatpush.msra.mxu0 0.0
        %2117 = vmatpush.msra.mxu0 0.0
        %2118 = vmatpush.msra.mxu0 0.0
        %2119 = vmatpush.msra.mxu0 0.0
        %2120 = vmatpush.msra.mxu0 0.0
        %2121 = vmatpush.msra.mxu0 0.0
        %2122 = vmatpush.msra.mxu0 0.0
        %2123 = vmatpush.msra.mxu0 0.0
        %2124 = vmatpush.msra.mxu0 %v2077
        %2125 = vmatpush.msra.mxu0 %v2075
        %2126 = vmatmul.f32.gmra.mxu0 %v2082
        %v2127 = vpop.f32.mrf.mxu0
        %v2128 = vadd.f32 0.0, %v2127
        %2129 = vmatmul.f32.gmra.mxu0 %v2085
        %v2130 = vpop.f32.mrf.mxu0
        %v2131 = vadd.f32 0.0, %v2130
        %2132 = vdwg.mxu0
        %v2133 = vadd.f32 %v2034, %v2105
        %v2134 = vadd.f32 %v2057, %v2128
        %v2135 = vadd.f32 %v2037, %v2108
        %v2136 = vadd.f32 %v2060, %v2131
        %2137 = vrot.lane.b32.xlu0 %v1929, 15
        %v2138 = vpop.permute.xlu0 %2137
        %2139 = vrot.lane.b32.xlu0 %v1931, 15
        %v2140 = vpop.permute.xlu0 %2139
        %2141 = vrot.lane.b32.xlu0 %v1930, 15
        %v2142 = vpop.permute.xlu0 %2141
        %2143 = vrot.lane.b32.xlu0 %v1932, 15
        %v2144 = vpop.permute.xlu0 %2143
        %v2145 = vsel %vm663, %v2138, %v2142
        %v2146 = vsel %vm663, %v2140, %v2144
        %v2147 = vsel %vm663, %v2142, %v2138
        %v2148 = vsel %vm663, %v2144, %v2140
        %v2149 = vmul.f32 %v2147, %v671
        %v2150 = vmul.f32 %v2145, %v672
        %v2151 = vmul.f32 %v2148, %v671
        %v2152 = vmul.f32 %v2146, %v672
        %s2153 = scalar_lea.vmem %s1, 176
        %v2154 = vld [vmem:[%s2153] sm:$0xff]
        %v2155 = vld [vmem:[%s2153 + $0x8] sm:$0xff]
        %v2157 = vsel %vm467, %v2154, 0
        %v2160 = vsel %vm467, %v2155, 0
        %2162 = vmatpush.msra.mxu0 0.0
        %2163 = vmatpush.msra.mxu0 0.0
        %2164 = vmatpush.msra.mxu0 0.0
        %2165 = vmatpush.msra.mxu0 0.0
        %2166 = vmatpush.msra.mxu0 0.0
        %2167 = vmatpush.msra.mxu0 0.0
        %2168 = vmatpush.msra.mxu0 0.0
        %2169 = vmatpush.msra.mxu0 0.0
        %2170 = vmatpush.msra.mxu0 0.0
        %2171 = vmatpush.msra.mxu0 0.0
        %2172 = vmatpush.msra.mxu0 0.0
        %2173 = vmatpush.msra.mxu0 0.0
        %2174 = vmatpush.msra.mxu0 0.0
        %2175 = vmatpush.msra.mxu0 0.0
        %2176 = vmatpush.msra.mxu0 %v2151
        %2177 = vmatpush.msra.mxu0 %v2149
        %2178 = vmatmul.f32.gmra.mxu0 %v2157
        %v2179 = vpop.f32.mrf.mxu0
        %v2180 = vadd.f32 0.0, %v2179
        %2181 = vmatmul.f32.gmra.mxu0 %v2160
        %v2182 = vpop.f32.mrf.mxu0
        %v2183 = vadd.f32 0.0, %v2182
        %2184 = vdwg.mxu0
        %2185 = vmatpush.msra.mxu0 0.0
        %2186 = vmatpush.msra.mxu0 0.0
        %2187 = vmatpush.msra.mxu0 0.0
        %2188 = vmatpush.msra.mxu0 0.0
        %2189 = vmatpush.msra.mxu0 0.0
        %2190 = vmatpush.msra.mxu0 0.0
        %2191 = vmatpush.msra.mxu0 0.0
        %2192 = vmatpush.msra.mxu0 0.0
        %2193 = vmatpush.msra.mxu0 0.0
        %2194 = vmatpush.msra.mxu0 0.0
        %2195 = vmatpush.msra.mxu0 0.0
        %2196 = vmatpush.msra.mxu0 0.0
        %2197 = vmatpush.msra.mxu0 0.0
        %2198 = vmatpush.msra.mxu0 0.0
        %2199 = vmatpush.msra.mxu0 %v2152
        %2200 = vmatpush.msra.mxu0 %v2150
        %2201 = vmatmul.f32.gmra.mxu0 %v2157
        %v2202 = vpop.f32.mrf.mxu0
        %v2203 = vadd.f32 0.0, %v2202
        %2204 = vmatmul.f32.gmra.mxu0 %v2160
        %v2205 = vpop.f32.mrf.mxu0
        %v2206 = vadd.f32 0.0, %v2205
        %2207 = vdwg.mxu0
        %v2208 = vadd.f32 %v2133, %v2180
        %v2209 = vadd.f32 %v2134, %v2203
        %v2210 = vadd.f32 %v2135, %v2183
        %v2211 = vadd.f32 %v2136, %v2206
        %2212 = vrot.lane.b32.xlu0 %v1929, 1
        %v2213 = vpop.permute.xlu0 %2212
        %2214 = vrot.lane.b32.xlu0 %v1931, 1
        %v2215 = vpop.permute.xlu0 %2214
        %2216 = vrot.lane.b32.xlu0 %v1930, 1
        %v2217 = vpop.permute.xlu0 %2216
        %2218 = vrot.lane.b32.xlu0 %v1932, 1
        %v2219 = vpop.permute.xlu0 %2218
        %v2220 = vsel %vm746, %v2213, %v2217
        %v2221 = vsel %vm746, %v2215, %v2219
        %v2222 = vsel %vm746, %v2217, %v2213
        %v2223 = vsel %vm746, %v2219, %v2215
        %v2224 = vmul.f32 %v2222, %v754
        %v2225 = vmul.f32 %v2220, %v755
        %v2226 = vmul.f32 %v2223, %v754
        %v2227 = vmul.f32 %v2221, %v755
        %s2228 = scalar_lea.vmem %s1, 192
        %v2229 = vld [vmem:[%s2228] sm:$0xff]
        %v2230 = vld [vmem:[%s2228 + $0x8] sm:$0xff]
        %v2232 = vsel %vm467, %v2229, 0
        %v2235 = vsel %vm467, %v2230, 0
        %2237 = vmatpush.msra.mxu0 0.0
        %2238 = vmatpush.msra.mxu0 0.0
        %2239 = vmatpush.msra.mxu0 0.0
        %2240 = vmatpush.msra.mxu0 0.0
        %2241 = vmatpush.msra.mxu0 0.0
        %2242 = vmatpush.msra.mxu0 0.0
        %2243 = vmatpush.msra.mxu0 0.0
        %2244 = vmatpush.msra.mxu0 0.0
        %2245 = vmatpush.msra.mxu0 0.0
        %2246 = vmatpush.msra.mxu0 0.0
        %2247 = vmatpush.msra.mxu0 0.0
        %2248 = vmatpush.msra.mxu0 0.0
        %2249 = vmatpush.msra.mxu0 0.0
        %2250 = vmatpush.msra.mxu0 0.0
        %2251 = vmatpush.msra.mxu0 %v2226
        %2252 = vmatpush.msra.mxu0 %v2224
        %2253 = vmatmul.f32.gmra.mxu0 %v2232
        %v2254 = vpop.f32.mrf.mxu0
        %v2255 = vadd.f32 0.0, %v2254
        %2256 = vmatmul.f32.gmra.mxu0 %v2235
        %v2257 = vpop.f32.mrf.mxu0
        %v2258 = vadd.f32 0.0, %v2257
        %2259 = vdwg.mxu0
        %2260 = vmatpush.msra.mxu0 0.0
        %2261 = vmatpush.msra.mxu0 0.0
        %2262 = vmatpush.msra.mxu0 0.0
        %2263 = vmatpush.msra.mxu0 0.0
        %2264 = vmatpush.msra.mxu0 0.0
        %2265 = vmatpush.msra.mxu0 0.0
        %2266 = vmatpush.msra.mxu0 0.0
        %2267 = vmatpush.msra.mxu0 0.0
        %2268 = vmatpush.msra.mxu0 0.0
        %2269 = vmatpush.msra.mxu0 0.0
        %2270 = vmatpush.msra.mxu0 0.0
        %2271 = vmatpush.msra.mxu0 0.0
        %2272 = vmatpush.msra.mxu0 0.0
        %2273 = vmatpush.msra.mxu0 0.0
        %2274 = vmatpush.msra.mxu0 %v2227
        %2275 = vmatpush.msra.mxu0 %v2225
        %2276 = vmatmul.f32.gmra.mxu0 %v2232
        %v2277 = vpop.f32.mrf.mxu0
        %v2278 = vadd.f32 0.0, %v2277
        %2279 = vmatmul.f32.gmra.mxu0 %v2235
        %v2280 = vpop.f32.mrf.mxu0
        %v2281 = vadd.f32 0.0, %v2280
        %2282 = vdwg.mxu0
        %v2283 = vadd.f32 %v2208, %v2255
        %v2284 = vadd.f32 %v2209, %v2278
        %v2285 = vadd.f32 %v2210, %v2258
        %v2286 = vadd.f32 %v2211, %v2281
        %2287 = vrot.lane.b32.xlu0 %v1929, 127
        %v2288 = vpop.permute.xlu0 %2287
        %2289 = vrot.lane.b32.xlu0 %v1931, 127
        %v2290 = vpop.permute.xlu0 %2289
        %2291 = vrot.lane.b32.xlu0 %v1930, 127
        %v2292 = vpop.permute.xlu0 %2291
        %2293 = vrot.lane.b32.xlu0 %v1932, 127
        %v2294 = vpop.permute.xlu0 %2293
        %v2295 = vsel %vm829, %v2288, %v2292
        %v2296 = vsel %vm829, %v2290, %v2294
        %v2297 = vsel %vm829, %v2292, %v2288
        %v2298 = vsel %vm829, %v2294, %v2290
        %v2299 = vmul.f32 %v2295, %v837
        %v2300 = vmul.f32 %v2297, %v838
        %v2301 = vmul.f32 %v2296, %v837
        %v2302 = vmul.f32 %v2298, %v838
        %s2303 = scalar_lea.vmem %s1, 224
        %v2304 = vld [vmem:[%s2303] sm:$0xff]
        %v2305 = vld [vmem:[%s2303 + $0x8] sm:$0xff]
        %v2307 = vsel %vm467, %v2304, 0
        %v2310 = vsel %vm467, %v2305, 0
        %2312 = vmatpush.msra.mxu0 0.0
        %2313 = vmatpush.msra.mxu0 0.0
        %2314 = vmatpush.msra.mxu0 0.0
        %2315 = vmatpush.msra.mxu0 0.0
        %2316 = vmatpush.msra.mxu0 0.0
        %2317 = vmatpush.msra.mxu0 0.0
        %2318 = vmatpush.msra.mxu0 0.0
        %2319 = vmatpush.msra.mxu0 0.0
        %2320 = vmatpush.msra.mxu0 0.0
        %2321 = vmatpush.msra.mxu0 0.0
        %2322 = vmatpush.msra.mxu0 0.0
        %2323 = vmatpush.msra.mxu0 0.0
        %2324 = vmatpush.msra.mxu0 0.0
        %2325 = vmatpush.msra.mxu0 0.0
        %2326 = vmatpush.msra.mxu0 %v2301
        %2327 = vmatpush.msra.mxu0 %v2299
        %2328 = vmatmul.f32.gmra.mxu0 %v2307
        %v2329 = vpop.f32.mrf.mxu0
        %v2330 = vadd.f32 0.0, %v2329
        %2331 = vmatmul.f32.gmra.mxu0 %v2310
        %v2332 = vpop.f32.mrf.mxu0
        %v2333 = vadd.f32 0.0, %v2332
        %2334 = vdwg.mxu0
        %2335 = vmatpush.msra.mxu0 0.0
        %2336 = vmatpush.msra.mxu0 0.0
        %2337 = vmatpush.msra.mxu0 0.0
        %2338 = vmatpush.msra.mxu0 0.0
        %2339 = vmatpush.msra.mxu0 0.0
        %2340 = vmatpush.msra.mxu0 0.0
        %2341 = vmatpush.msra.mxu0 0.0
        %2342 = vmatpush.msra.mxu0 0.0
        %2343 = vmatpush.msra.mxu0 0.0
        %2344 = vmatpush.msra.mxu0 0.0
        %2345 = vmatpush.msra.mxu0 0.0
        %2346 = vmatpush.msra.mxu0 0.0
        %2347 = vmatpush.msra.mxu0 0.0
        %2348 = vmatpush.msra.mxu0 0.0
        %2349 = vmatpush.msra.mxu0 %v2302
        %2350 = vmatpush.msra.mxu0 %v2300
        %2351 = vmatmul.f32.gmra.mxu0 %v2307
        %v2352 = vpop.f32.mrf.mxu0
        %v2353 = vadd.f32 0.0, %v2352
        %2354 = vmatmul.f32.gmra.mxu0 %v2310
        %v2355 = vpop.f32.mrf.mxu0
        %v2356 = vadd.f32 0.0, %v2355
        %2357 = vdwg.mxu0
        %v2358 = vadd.f32 %v2283, %v2330
        %v2359 = vadd.f32 %v2284, %v2353
        %v2360 = vadd.f32 %v2285, %v2333
        %v2361 = vadd.f32 %v2286, %v2356
        %2362 = vrot.lane.b32.xlu0 %v1929, 113
        %v2363 = vpop.permute.xlu0 %2362
        %2364 = vrot.lane.b32.xlu0 %v1931, 113
        %v2365 = vpop.permute.xlu0 %2364
        %2366 = vrot.lane.b32.xlu0 %v1930, 113
        %v2367 = vpop.permute.xlu0 %2366
        %2368 = vrot.lane.b32.xlu0 %v1932, 113
        %v2369 = vpop.permute.xlu0 %2368
        %v2370 = vsel %vm912, %v2363, %v2367
        %v2371 = vsel %vm912, %v2365, %v2369
        %v2372 = vsel %vm912, %v2367, %v2363
        %v2373 = vsel %vm912, %v2369, %v2365
        %v2374 = vmul.f32 %v2370, %v920
        %v2375 = vmul.f32 %v2372, %v921
        %v2376 = vmul.f32 %v2371, %v920
        %v2377 = vmul.f32 %v2373, %v921
        %s2378 = scalar_lea.vmem %s1, 240
        %v2379 = vld [vmem:[%s2378] sm:$0xff]
        %v2380 = vld [vmem:[%s2378 + $0x8] sm:$0xff]
        %v2382 = vsel %vm467, %v2379, 0
        %v2385 = vsel %vm467, %v2380, 0
        %2387 = vmatpush.msra.mxu0 0.0
        %2388 = vmatpush.msra.mxu0 0.0
        %2389 = vmatpush.msra.mxu0 0.0
        %2390 = vmatpush.msra.mxu0 0.0
        %2391 = vmatpush.msra.mxu0 0.0
        %2392 = vmatpush.msra.mxu0 0.0
        %2393 = vmatpush.msra.mxu0 0.0
        %2394 = vmatpush.msra.mxu0 0.0
        %2395 = vmatpush.msra.mxu0 0.0
        %2396 = vmatpush.msra.mxu0 0.0
        %2397 = vmatpush.msra.mxu0 0.0
        %2398 = vmatpush.msra.mxu0 0.0
        %2399 = vmatpush.msra.mxu0 0.0
        %2400 = vmatpush.msra.mxu0 0.0
        %2401 = vmatpush.msra.mxu0 %v2376
        %2402 = vmatpush.msra.mxu0 %v2374
        %2403 = vmatmul.f32.gmra.mxu0 %v2382
        %v2404 = vpop.f32.mrf.mxu0
        %v2405 = vadd.f32 0.0, %v2404
        %2406 = vmatmul.f32.gmra.mxu0 %v2385
        %v2407 = vpop.f32.mrf.mxu0
        %v2408 = vadd.f32 0.0, %v2407
        %2409 = vdwg.mxu0
        %2410 = vmatpush.msra.mxu0 0.0
        %2411 = vmatpush.msra.mxu0 0.0
        %2412 = vmatpush.msra.mxu0 0.0
        %2413 = vmatpush.msra.mxu0 0.0
        %2414 = vmatpush.msra.mxu0 0.0
        %2415 = vmatpush.msra.mxu0 0.0
        %2416 = vmatpush.msra.mxu0 0.0
        %2417 = vmatpush.msra.mxu0 0.0
        %2418 = vmatpush.msra.mxu0 0.0
        %2419 = vmatpush.msra.mxu0 0.0
        %2420 = vmatpush.msra.mxu0 0.0
        %2421 = vmatpush.msra.mxu0 0.0
        %2422 = vmatpush.msra.mxu0 0.0
        %2423 = vmatpush.msra.mxu0 0.0
        %2424 = vmatpush.msra.mxu0 %v2377
        %2425 = vmatpush.msra.mxu0 %v2375
        %2426 = vmatmul.f32.gmra.mxu0 %v2382
        %v2427 = vpop.f32.mrf.mxu0
        %v2428 = vadd.f32 0.0, %v2427
        %2429 = vmatmul.f32.gmra.mxu0 %v2385
        %v2430 = vpop.f32.mrf.mxu0
        %v2431 = vadd.f32 0.0, %v2430
        %2432 = vdwg.mxu0
        %v2433 = vadd.f32 %v2358, %v2405
        %v2434 = vadd.f32 %v2359, %v2428
        %v2435 = vadd.f32 %v2360, %v2408
        %v2436 = vadd.f32 %v2361, %v2431
        %2437 = vrot.lane.b32.xlu0 %v1929, 112
        %v2438 = vpop.permute.xlu0 %2437
        %2439 = vrot.lane.b32.xlu0 %v1931, 112
        %v2440 = vpop.permute.xlu0 %2439
        %2441 = vrot.lane.b32.xlu0 %v1930, 112
        %v2442 = vpop.permute.xlu0 %2441
        %2443 = vrot.lane.b32.xlu0 %v1932, 112
        %v2444 = vpop.permute.xlu0 %2443
        %v2445 = vsel %vm995, %v2438, %v2442
        %v2446 = vsel %vm995, %v2440, %v2444
        %v2447 = vsel %vm995, %v2442, %v2438
        %v2448 = vsel %vm995, %v2444, %v2440
        %v2449 = vmul.f32 %v2445, %v1003
        %v2450 = vmul.f32 %v2447, %v1004
        %v2451 = vmul.f32 %v2446, %v1003
        %v2452 = vmul.f32 %v2448, %v1004
        %s2453 = scalar_lea.vmem %s1, 256
        %v2454 = vld [vmem:[%s2453] sm:$0xff]
        %v2455 = vld [vmem:[%s2453 + $0x8] sm:$0xff]
        %v2457 = vsel %vm467, %v2454, 0
        %v2460 = vsel %vm467, %v2455, 0
        %2462 = vmatpush.msra.mxu0 0.0
        %2463 = vmatpush.msra.mxu0 0.0
        %2464 = vmatpush.msra.mxu0 0.0
        %2465 = vmatpush.msra.mxu0 0.0
        %2466 = vmatpush.msra.mxu0 0.0
        %2467 = vmatpush.msra.mxu0 0.0
        %2468 = vmatpush.msra.mxu0 0.0
        %2469 = vmatpush.msra.mxu0 0.0
        %2470 = vmatpush.msra.mxu0 0.0
        %2471 = vmatpush.msra.mxu0 0.0
        %2472 = vmatpush.msra.mxu0 0.0
        %2473 = vmatpush.msra.mxu0 0.0
        %2474 = vmatpush.msra.mxu0 0.0
        %2475 = vmatpush.msra.mxu0 0.0
        %2476 = vmatpush.msra.mxu0 %v2451
        %2477 = vmatpush.msra.mxu0 %v2449
        %2478 = vmatmul.f32.gmra.mxu0 %v2457
        %v2479 = vpop.f32.mrf.mxu0
        %v2480 = vadd.f32 0.0, %v2479
        %2481 = vmatmul.f32.gmra.mxu0 %v2460
        %v2482 = vpop.f32.mrf.mxu0
        %v2483 = vadd.f32 0.0, %v2482
        %2484 = vdwg.mxu0
        %2485 = vmatpush.msra.mxu0 0.0
        %2486 = vmatpush.msra.mxu0 0.0
        %2487 = vmatpush.msra.mxu0 0.0
        %2488 = vmatpush.msra.mxu0 0.0
        %2489 = vmatpush.msra.mxu0 0.0
        %2490 = vmatpush.msra.mxu0 0.0
        %2491 = vmatpush.msra.mxu0 0.0
        %2492 = vmatpush.msra.mxu0 0.0
        %2493 = vmatpush.msra.mxu0 0.0
        %2494 = vmatpush.msra.mxu0 0.0
        %2495 = vmatpush.msra.mxu0 0.0
        %2496 = vmatpush.msra.mxu0 0.0
        %2497 = vmatpush.msra.mxu0 0.0
        %2498 = vmatpush.msra.mxu0 0.0
        %2499 = vmatpush.msra.mxu0 %v2452
        %2500 = vmatpush.msra.mxu0 %v2450
        %2501 = vmatmul.f32.gmra.mxu0 %v2457
        %v2502 = vpop.f32.mrf.mxu0
        %v2503 = vadd.f32 0.0, %v2502
        %2504 = vmatmul.f32.gmra.mxu0 %v2460
        %v2505 = vpop.f32.mrf.mxu0
        %v2506 = vadd.f32 0.0, %v2505
        %2507 = vdwg.mxu0
        %v2508 = vadd.f32 %v2433, %v2480
        %v2509 = vadd.f32 %v2434, %v2503
        %v2510 = vadd.f32 %v2435, %v2483
        %v2511 = vadd.f32 %v2436, %v2506
        %2512 = vrot.lane.b32.xlu0 %v1929, 111
        %v2513 = vpop.permute.xlu0 %2512
        %2514 = vrot.lane.b32.xlu0 %v1931, 111
        %v2515 = vpop.permute.xlu0 %2514
        %2516 = vrot.lane.b32.xlu0 %v1930, 111
        %v2517 = vpop.permute.xlu0 %2516
        %2518 = vrot.lane.b32.xlu0 %v1932, 111
        %v2519 = vpop.permute.xlu0 %2518
        %v2520 = vsel %vm1078, %v2513, %v2517
        %v2521 = vsel %vm1078, %v2515, %v2519
        %v2522 = vsel %vm1078, %v2517, %v2513
        %v2523 = vsel %vm1078, %v2519, %v2515
        %v2524 = vmul.f32 %v2520, %v1086
        %v2525 = vmul.f32 %v2522, %v1087
        %v2526 = vmul.f32 %v2521, %v1086
        %v2527 = vmul.f32 %v2523, %v1087
        %s2528 = scalar_lea.vmem %s1, 272
        %v2529 = vld [vmem:[%s2528] sm:$0xff]
        %v2530 = vld [vmem:[%s2528 + $0x8] sm:$0xff]
        %v2532 = vsel %vm467, %v2529, 0
        %v2535 = vsel %vm467, %v2530, 0
        %2537 = vmatpush.msra.mxu0 0.0
        %2538 = vmatpush.msra.mxu0 0.0
        %2539 = vmatpush.msra.mxu0 0.0
        %2540 = vmatpush.msra.mxu0 0.0
        %2541 = vmatpush.msra.mxu0 0.0
        %2542 = vmatpush.msra.mxu0 0.0
        %2543 = vmatpush.msra.mxu0 0.0
        %2544 = vmatpush.msra.mxu0 0.0
        %2545 = vmatpush.msra.mxu0 0.0
        %2546 = vmatpush.msra.mxu0 0.0
        %2547 = vmatpush.msra.mxu0 0.0
        %2548 = vmatpush.msra.mxu0 0.0
        %2549 = vmatpush.msra.mxu0 0.0
        %2550 = vmatpush.msra.mxu0 0.0
        %2551 = vmatpush.msra.mxu0 %v2526
        %2552 = vmatpush.msra.mxu0 %v2524
        %2553 = vmatmul.f32.gmra.mxu0 %v2532
        %v2554 = vpop.f32.mrf.mxu0
        %v2555 = vadd.f32 0.0, %v2554
        %2556 = vmatmul.f32.gmra.mxu0 %v2535
        %v2557 = vpop.f32.mrf.mxu0
        %v2558 = vadd.f32 0.0, %v2557
        %2559 = vdwg.mxu0
        %2560 = vmatpush.msra.mxu0 0.0
        %2561 = vmatpush.msra.mxu0 0.0
        %2562 = vmatpush.msra.mxu0 0.0
        %2563 = vmatpush.msra.mxu0 0.0
        %2564 = vmatpush.msra.mxu0 0.0
        %2565 = vmatpush.msra.mxu0 0.0
        %2566 = vmatpush.msra.mxu0 0.0
        %2567 = vmatpush.msra.mxu0 0.0
        %2568 = vmatpush.msra.mxu0 0.0
        %2569 = vmatpush.msra.mxu0 0.0
        %2570 = vmatpush.msra.mxu0 0.0
        %2571 = vmatpush.msra.mxu0 0.0
        %2572 = vmatpush.msra.mxu0 0.0
        %2573 = vmatpush.msra.mxu0 0.0
        %2574 = vmatpush.msra.mxu0 %v2527
        %2575 = vmatpush.msra.mxu0 %v2525
        %2576 = vmatmul.f32.gmra.mxu0 %v2532
        %v2577 = vpop.f32.mrf.mxu0
        %v2578 = vadd.f32 0.0, %v2577
        %2579 = vmatmul.f32.gmra.mxu0 %v2535
        %v2580 = vpop.f32.mrf.mxu0
        %v2581 = vadd.f32 0.0, %v2580
        %2582 = vdwg.mxu0
        %v2583 = vadd.f32 %v2508, %v2555
        %v2584 = vadd.f32 %v2509, %v2578
        %v2585 = vadd.f32 %v2510, %v2558
        %v2586 = vadd.f32 %v2511, %v2581
        %2588 = vset.pattern.permute.xlu0 0
        %2589 = vperm.xlu0 %2588, %v1934
        %v2590 = vpop.permute.xlu0 %2589
        %2593 = vset.pattern.permute.xlu0 0
        %2594 = vperm.xlu0 %2593, %v1935
        %v2595 = vpop.permute.xlu0 %2594
        %v2597 = vadd.f32 %v2583, %v2590
        %v2598 = vadd.f32 %v2584, %v2590
        %v2599 = vadd.f32 %v2585, %v2595
        %v2600 = vadd.f32 %v2586, %v2595
        %v2601 = vmax.f32 %v2597, 0.0
        %v2602 = vmax.f32 %v2598, 0.0
        %v2603 = vmax.f32 %v2599, 0.0
        %v2604 = vmax.f32 %v2600, 0.0
        %s2605 = scalar_lea.vmem %s4, 16
        %v2606 = vld [vmem:[%s2605] sm:$0xff]
        %v2607 = vld [vmem:[%s2605 + $0x8] sm:$0xff]
        %s2608 = scalar_lea.vmem %s3, 208
        %v2609 = vld [vmem:[%s2608] sm:$0xff]
        %v2610 = vld [vmem:[%s2608 + $0x8] sm:$0xff]
        %2611 = vrot.lane.b32.xlu0 %v2601, 17
        %v2612 = vpop.permute.xlu0 %2611
        %2613 = vrot.lane.b32.xlu0 %v2603, 17
        %v2614 = vpop.permute.xlu0 %2613
        %2615 = vrot.lane.b32.xlu0 %v2602, 17
        %v2616 = vpop.permute.xlu0 %2615
        %2617 = vrot.lane.b32.xlu0 %v2604, 17
        %v2618 = vpop.permute.xlu0 %2617
        %v2619 = vsel %vm450, %v2612, %v2616
        %v2620 = vsel %vm450, %v2614, %v2618
        %v2621 = vsel %vm450, %v2616, %v2612
        %v2622 = vsel %vm450, %v2618, %v2614
        %v2623 = vmul.f32 %v2621, %v457
        %v2624 = vmul.f32 %v2619, %v458
        %v2625 = vmul.f32 %v2622, %v457
        %v2626 = vmul.f32 %v2620, %v458
        %s2627 = scalar_lea.vmem %s3, 144
        %v2628 = vld [vmem:[%s2627] sm:$0xff]
        %v2629 = vld [vmem:[%s2627 + $0x8] sm:$0xff]
        %v2631 = vsel %vm467, %v2628, 0
        %v2634 = vsel %vm467, %v2629, 0
        %2636 = vmatpush.msra.mxu0 0.0
        %2637 = vmatpush.msra.mxu0 0.0
        %2638 = vmatpush.msra.mxu0 0.0
        %2639 = vmatpush.msra.mxu0 0.0
        %2640 = vmatpush.msra.mxu0 0.0
        %2641 = vmatpush.msra.mxu0 0.0
        %2642 = vmatpush.msra.mxu0 0.0
        %2643 = vmatpush.msra.mxu0 0.0
        %2644 = vmatpush.msra.mxu0 0.0
        %2645 = vmatpush.msra.mxu0 0.0
        %2646 = vmatpush.msra.mxu0 0.0
        %2647 = vmatpush.msra.mxu0 0.0
        %2648 = vmatpush.msra.mxu0 0.0
        %2649 = vmatpush.msra.mxu0 0.0
        %2650 = vmatpush.msra.mxu0 %v2625
        %2651 = vmatpush.msra.mxu0 %v2623
        %2652 = vmatmul.f32.gmra.mxu0 %v2631
        %v2653 = vpop.f32.mrf.mxu0
        %v2654 = vadd.f32 0.0, %v2653
        %2655 = vmatmul.f32.gmra.mxu0 %v2634
        %v2656 = vpop.f32.mrf.mxu0
        %v2657 = vadd.f32 0.0, %v2656
        %2658 = vdwg.mxu0
        %2659 = vmatpush.msra.mxu0 0.0
        %2660 = vmatpush.msra.mxu0 0.0
        %2661 = vmatpush.msra.mxu0 0.0
        %2662 = vmatpush.msra.mxu0 0.0
        %2663 = vmatpush.msra.mxu0 0.0
        %2664 = vmatpush.msra.mxu0 0.0
        %2665 = vmatpush.msra.mxu0 0.0
        %2666 = vmatpush.msra.mxu0 0.0
        %2667 = vmatpush.msra.mxu0 0.0
        %2668 = vmatpush.msra.mxu0 0.0
        %2669 = vmatpush.msra.mxu0 0.0
        %2670 = vmatpush.msra.mxu0 0.0
        %2671 = vmatpush.msra.mxu0 0.0
        %2672 = vmatpush.msra.mxu0 0.0
        %2673 = vmatpush.msra.mxu0 %v2626
        %2674 = vmatpush.msra.mxu0 %v2624
        %2675 = vmatmul.f32.gmra.mxu0 %v2631
        %v2676 = vpop.f32.mrf.mxu0
        %v2677 = vadd.f32 0.0, %v2676
        %2678 = vmatmul.f32.gmra.mxu0 %v2634
        %v2679 = vpop.f32.mrf.mxu0
        %v2680 = vadd.f32 0.0, %v2679
        %2681 = vdwg.mxu0
        %v2683 = vsel %vm467, %v2609, 0
        %v2686 = vsel %vm467, %v2610, 0
        %2688 = vmatpush.msra.mxu0 0.0
        %2689 = vmatpush.msra.mxu0 0.0
        %2690 = vmatpush.msra.mxu0 0.0
        %2691 = vmatpush.msra.mxu0 0.0
        %2692 = vmatpush.msra.mxu0 0.0
        %2693 = vmatpush.msra.mxu0 0.0
        %2694 = vmatpush.msra.mxu0 0.0
        %2695 = vmatpush.msra.mxu0 0.0
        %2696 = vmatpush.msra.mxu0 0.0
        %2697 = vmatpush.msra.mxu0 0.0
        %2698 = vmatpush.msra.mxu0 0.0
        %2699 = vmatpush.msra.mxu0 0.0
        %2700 = vmatpush.msra.mxu0 0.0
        %2701 = vmatpush.msra.mxu0 0.0
        %2702 = vmatpush.msra.mxu0 %v2603
        %2703 = vmatpush.msra.mxu0 %v2601
        %2704 = vmatmul.f32.gmra.mxu0 %v2683
        %v2705 = vpop.f32.mrf.mxu0
        %v2706 = vadd.f32 %v2654, %v2705
        %2707 = vmatmul.f32.gmra.mxu0 %v2686
        %v2708 = vpop.f32.mrf.mxu0
        %v2709 = vadd.f32 %v2657, %v2708
        %2710 = vdwg.mxu0
        %2711 = vmatpush.msra.mxu0 0.0
        %2712 = vmatpush.msra.mxu0 0.0
        %2713 = vmatpush.msra.mxu0 0.0
        %2714 = vmatpush.msra.mxu0 0.0
        %2715 = vmatpush.msra.mxu0 0.0
        %2716 = vmatpush.msra.mxu0 0.0
        %2717 = vmatpush.msra.mxu0 0.0
        %2718 = vmatpush.msra.mxu0 0.0
        %2719 = vmatpush.msra.mxu0 0.0
        %2720 = vmatpush.msra.mxu0 0.0
        %2721 = vmatpush.msra.mxu0 0.0
        %2722 = vmatpush.msra.mxu0 0.0
        %2723 = vmatpush.msra.mxu0 0.0
        %2724 = vmatpush.msra.mxu0 0.0
        %2725 = vmatpush.msra.mxu0 %v2604
        %2726 = vmatpush.msra.mxu0 %v2602
        %2727 = vmatmul.f32.gmra.mxu0 %v2683
        %v2728 = vpop.f32.mrf.mxu0
        %v2729 = vadd.f32 %v2677, %v2728
        %2730 = vmatmul.f32.gmra.mxu0 %v2686
        %v2731 = vpop.f32.mrf.mxu0
        %v2732 = vadd.f32 %v2680, %v2731
        %2733 = vdwg.mxu0
        %2734 = vrot.lane.b32.xlu0 %v2601, 16
        %v2735 = vpop.permute.xlu0 %2734
        %2736 = vrot.lane.b32.xlu0 %v2603, 16
        %v2737 = vpop.permute.xlu0 %2736
        %2738 = vrot.lane.b32.xlu0 %v2602, 16
        %v2739 = vpop.permute.xlu0 %2738
        %2740 = vrot.lane.b32.xlu0 %v2604, 16
        %v2741 = vpop.permute.xlu0 %2740
        %v2742 = vsel %vm580, %v2735, %v2739
        %v2743 = vsel %vm580, %v2737, %v2741
        %v2744 = vsel %vm580, %v2739, %v2735
        %v2745 = vsel %vm580, %v2741, %v2737
        %v2746 = vmul.f32 %v2744, %v588
        %v2747 = vmul.f32 %v2742, %v589
        %v2748 = vmul.f32 %v2745, %v588
        %v2749 = vmul.f32 %v2743, %v589
        %s2750 = scalar_lea.vmem %s3, 160
        %v2751 = vld [vmem:[%s2750] sm:$0xff]
        %v2752 = vld [vmem:[%s2750 + $0x8] sm:$0xff]
        %v2754 = vsel %vm467, %v2751, 0
        %v2757 = vsel %vm467, %v2752, 0
        %2759 = vmatpush.msra.mxu0 0.0
        %2760 = vmatpush.msra.mxu0 0.0
        %2761 = vmatpush.msra.mxu0 0.0
        %2762 = vmatpush.msra.mxu0 0.0
        %2763 = vmatpush.msra.mxu0 0.0
        %2764 = vmatpush.msra.mxu0 0.0
        %2765 = vmatpush.msra.mxu0 0.0
        %2766 = vmatpush.msra.mxu0 0.0
        %2767 = vmatpush.msra.mxu0 0.0
        %2768 = vmatpush.msra.mxu0 0.0
        %2769 = vmatpush.msra.mxu0 0.0
        %2770 = vmatpush.msra.mxu0 0.0
        %2771 = vmatpush.msra.mxu0 0.0
        %2772 = vmatpush.msra.mxu0 0.0
        %2773 = vmatpush.msra.mxu0 %v2748
        %2774 = vmatpush.msra.mxu0 %v2746
        %2775 = vmatmul.f32.gmra.mxu0 %v2754
        %v2776 = vpop.f32.mrf.mxu0
        %v2777 = vadd.f32 0.0, %v2776
        %2778 = vmatmul.f32.gmra.mxu0 %v2757
        %v2779 = vpop.f32.mrf.mxu0
        %v2780 = vadd.f32 0.0, %v2779
        %2781 = vdwg.mxu0
        %2782 = vmatpush.msra.mxu0 0.0
        %2783 = vmatpush.msra.mxu0 0.0
        %2784 = vmatpush.msra.mxu0 0.0
        %2785 = vmatpush.msra.mxu0 0.0
        %2786 = vmatpush.msra.mxu0 0.0
        %2787 = vmatpush.msra.mxu0 0.0
        %2788 = vmatpush.msra.mxu0 0.0
        %2789 = vmatpush.msra.mxu0 0.0
        %2790 = vmatpush.msra.mxu0 0.0
        %2791 = vmatpush.msra.mxu0 0.0
        %2792 = vmatpush.msra.mxu0 0.0
        %2793 = vmatpush.msra.mxu0 0.0
        %2794 = vmatpush.msra.mxu0 0.0
        %2795 = vmatpush.msra.mxu0 0.0
        %2796 = vmatpush.msra.mxu0 %v2749
        %2797 = vmatpush.msra.mxu0 %v2747
        %2798 = vmatmul.f32.gmra.mxu0 %v2754
        %v2799 = vpop.f32.mrf.mxu0
        %v2800 = vadd.f32 0.0, %v2799
        %2801 = vmatmul.f32.gmra.mxu0 %v2757
        %v2802 = vpop.f32.mrf.mxu0
        %v2803 = vadd.f32 0.0, %v2802
        %2804 = vdwg.mxu0
        %v2805 = vadd.f32 %v2706, %v2777
        %v2806 = vadd.f32 %v2729, %v2800
        %v2807 = vadd.f32 %v2709, %v2780
        %v2808 = vadd.f32 %v2732, %v2803
        %2809 = vrot.lane.b32.xlu0 %v2601, 15
        %v2810 = vpop.permute.xlu0 %2809
        %2811 = vrot.lane.b32.xlu0 %v2603, 15
        %v2812 = vpop.permute.xlu0 %2811
        %2813 = vrot.lane.b32.xlu0 %v2602, 15
        %v2814 = vpop.permute.xlu0 %2813
        %2815 = vrot.lane.b32.xlu0 %v2604, 15
        %v2816 = vpop.permute.xlu0 %2815
        %v2817 = vsel %vm663, %v2810, %v2814
        %v2818 = vsel %vm663, %v2812, %v2816
        %v2819 = vsel %vm663, %v2814, %v2810
        %v2820 = vsel %vm663, %v2816, %v2812
        %v2821 = vmul.f32 %v2819, %v671
        %v2822 = vmul.f32 %v2817, %v672
        %v2823 = vmul.f32 %v2820, %v671
        %v2824 = vmul.f32 %v2818, %v672
        %s2825 = scalar_lea.vmem %s3, 176
        %v2826 = vld [vmem:[%s2825] sm:$0xff]
        %v2827 = vld [vmem:[%s2825 + $0x8] sm:$0xff]
        %v2829 = vsel %vm467, %v2826, 0
        %v2832 = vsel %vm467, %v2827, 0
        %2834 = vmatpush.msra.mxu0 0.0
        %2835 = vmatpush.msra.mxu0 0.0
        %2836 = vmatpush.msra.mxu0 0.0
        %2837 = vmatpush.msra.mxu0 0.0
        %2838 = vmatpush.msra.mxu0 0.0
        %2839 = vmatpush.msra.mxu0 0.0
        %2840 = vmatpush.msra.mxu0 0.0
        %2841 = vmatpush.msra.mxu0 0.0
        %2842 = vmatpush.msra.mxu0 0.0
        %2843 = vmatpush.msra.mxu0 0.0
        %2844 = vmatpush.msra.mxu0 0.0
        %2845 = vmatpush.msra.mxu0 0.0
        %2846 = vmatpush.msra.mxu0 0.0
        %2847 = vmatpush.msra.mxu0 0.0
        %2848 = vmatpush.msra.mxu0 %v2823
        %2849 = vmatpush.msra.mxu0 %v2821
        %2850 = vmatmul.f32.gmra.mxu0 %v2829
        %v2851 = vpop.f32.mrf.mxu0
        %v2852 = vadd.f32 0.0, %v2851
        %2853 = vmatmul.f32.gmra.mxu0 %v2832
        %v2854 = vpop.f32.mrf.mxu0
        %v2855 = vadd.f32 0.0, %v2854
        %2856 = vdwg.mxu0
        %2857 = vmatpush.msra.mxu0 0.0
        %2858 = vmatpush.msra.mxu0 0.0
        %2859 = vmatpush.msra.mxu0 0.0
        %2860 = vmatpush.msra.mxu0 0.0
        %2861 = vmatpush.msra.mxu0 0.0
        %2862 = vmatpush.msra.mxu0 0.0
        %2863 = vmatpush.msra.mxu0 0.0
        %2864 = vmatpush.msra.mxu0 0.0
        %2865 = vmatpush.msra.mxu0 0.0
        %2866 = vmatpush.msra.mxu0 0.0
        %2867 = vmatpush.msra.mxu0 0.0
        %2868 = vmatpush.msra.mxu0 0.0
        %2869 = vmatpush.msra.mxu0 0.0
        %2870 = vmatpush.msra.mxu0 0.0
        %2871 = vmatpush.msra.mxu0 %v2824
        %2872 = vmatpush.msra.mxu0 %v2822
        %2873 = vmatmul.f32.gmra.mxu0 %v2829
        %v2874 = vpop.f32.mrf.mxu0
        %v2875 = vadd.f32 0.0, %v2874
        %2876 = vmatmul.f32.gmra.mxu0 %v2832
        %v2877 = vpop.f32.mrf.mxu0
        %v2878 = vadd.f32 0.0, %v2877
        %2879 = vdwg.mxu0
        %v2880 = vadd.f32 %v2805, %v2852
        %v2881 = vadd.f32 %v2806, %v2875
        %v2882 = vadd.f32 %v2807, %v2855
        %v2883 = vadd.f32 %v2808, %v2878
        %2884 = vrot.lane.b32.xlu0 %v2601, 1
        %v2885 = vpop.permute.xlu0 %2884
        %2886 = vrot.lane.b32.xlu0 %v2603, 1
        %v2887 = vpop.permute.xlu0 %2886
        %2888 = vrot.lane.b32.xlu0 %v2602, 1
        %v2889 = vpop.permute.xlu0 %2888
        %2890 = vrot.lane.b32.xlu0 %v2604, 1
        %v2891 = vpop.permute.xlu0 %2890
        %v2892 = vsel %vm746, %v2885, %v2889
        %v2893 = vsel %vm746, %v2887, %v2891
        %v2894 = vsel %vm746, %v2889, %v2885
        %v2895 = vsel %vm746, %v2891, %v2887
        %v2896 = vmul.f32 %v2894, %v754
        %v2897 = vmul.f32 %v2892, %v755
        %v2898 = vmul.f32 %v2895, %v754
        %v2899 = vmul.f32 %v2893, %v755
        %s2900 = scalar_lea.vmem %s3, 192
        %v2901 = vld [vmem:[%s2900] sm:$0xff]
        %v2902 = vld [vmem:[%s2900 + $0x8] sm:$0xff]
        %v2904 = vsel %vm467, %v2901, 0
        %v2907 = vsel %vm467, %v2902, 0
        %2909 = vmatpush.msra.mxu0 0.0
        %2910 = vmatpush.msra.mxu0 0.0
        %2911 = vmatpush.msra.mxu0 0.0
        %2912 = vmatpush.msra.mxu0 0.0
        %2913 = vmatpush.msra.mxu0 0.0
        %2914 = vmatpush.msra.mxu0 0.0
        %2915 = vmatpush.msra.mxu0 0.0
        %2916 = vmatpush.msra.mxu0 0.0
        %2917 = vmatpush.msra.mxu0 0.0
        %2918 = vmatpush.msra.mxu0 0.0
        %2919 = vmatpush.msra.mxu0 0.0
        %2920 = vmatpush.msra.mxu0 0.0
        %2921 = vmatpush.msra.mxu0 0.0
        %2922 = vmatpush.msra.mxu0 0.0
        %2923 = vmatpush.msra.mxu0 %v2898
        %2924 = vmatpush.msra.mxu0 %v2896
        %2925 = vmatmul.f32.gmra.mxu0 %v2904
        %v2926 = vpop.f32.mrf.mxu0
        %v2927 = vadd.f32 0.0, %v2926
        %2928 = vmatmul.f32.gmra.mxu0 %v2907
        %v2929 = vpop.f32.mrf.mxu0
        %v2930 = vadd.f32 0.0, %v2929
        %2931 = vdwg.mxu0
        %2932 = vmatpush.msra.mxu0 0.0
        %2933 = vmatpush.msra.mxu0 0.0
        %2934 = vmatpush.msra.mxu0 0.0
        %2935 = vmatpush.msra.mxu0 0.0
        %2936 = vmatpush.msra.mxu0 0.0
        %2937 = vmatpush.msra.mxu0 0.0
        %2938 = vmatpush.msra.mxu0 0.0
        %2939 = vmatpush.msra.mxu0 0.0
        %2940 = vmatpush.msra.mxu0 0.0
        %2941 = vmatpush.msra.mxu0 0.0
        %2942 = vmatpush.msra.mxu0 0.0
        %2943 = vmatpush.msra.mxu0 0.0
        %2944 = vmatpush.msra.mxu0 0.0
        %2945 = vmatpush.msra.mxu0 0.0
        %2946 = vmatpush.msra.mxu0 %v2899
        %2947 = vmatpush.msra.mxu0 %v2897
        %2948 = vmatmul.f32.gmra.mxu0 %v2904
        %v2949 = vpop.f32.mrf.mxu0
        %v2950 = vadd.f32 0.0, %v2949
        %2951 = vmatmul.f32.gmra.mxu0 %v2907
        %v2952 = vpop.f32.mrf.mxu0
        %v2953 = vadd.f32 0.0, %v2952
        %2954 = vdwg.mxu0
        %v2955 = vadd.f32 %v2880, %v2927
        %v2956 = vadd.f32 %v2881, %v2950
        %v2957 = vadd.f32 %v2882, %v2930
        %v2958 = vadd.f32 %v2883, %v2953
        %2959 = vrot.lane.b32.xlu0 %v2601, 127
        %v2960 = vpop.permute.xlu0 %2959
        %2961 = vrot.lane.b32.xlu0 %v2603, 127
        %v2962 = vpop.permute.xlu0 %2961
        %2963 = vrot.lane.b32.xlu0 %v2602, 127
        %v2964 = vpop.permute.xlu0 %2963
        %2965 = vrot.lane.b32.xlu0 %v2604, 127
        %v2966 = vpop.permute.xlu0 %2965
        %v2967 = vsel %vm829, %v2960, %v2964
        %v2968 = vsel %vm829, %v2962, %v2966
        %v2969 = vsel %vm829, %v2964, %v2960
        %v2970 = vsel %vm829, %v2966, %v2962
        %v2971 = vmul.f32 %v2967, %v837
        %v2972 = vmul.f32 %v2969, %v838
        %v2973 = vmul.f32 %v2968, %v837
        %v2974 = vmul.f32 %v2970, %v838
        %s2975 = scalar_lea.vmem %s3, 224
        %v2976 = vld [vmem:[%s2975] sm:$0xff]
        %v2977 = vld [vmem:[%s2975 + $0x8] sm:$0xff]
        %v2979 = vsel %vm467, %v2976, 0
        %v2982 = vsel %vm467, %v2977, 0
        %2984 = vmatpush.msra.mxu0 0.0
        %2985 = vmatpush.msra.mxu0 0.0
        %2986 = vmatpush.msra.mxu0 0.0
        %2987 = vmatpush.msra.mxu0 0.0
        %2988 = vmatpush.msra.mxu0 0.0
        %2989 = vmatpush.msra.mxu0 0.0
        %2990 = vmatpush.msra.mxu0 0.0
        %2991 = vmatpush.msra.mxu0 0.0
        %2992 = vmatpush.msra.mxu0 0.0
        %2993 = vmatpush.msra.mxu0 0.0
        %2994 = vmatpush.msra.mxu0 0.0
        %2995 = vmatpush.msra.mxu0 0.0
        %2996 = vmatpush.msra.mxu0 0.0
        %2997 = vmatpush.msra.mxu0 0.0
        %2998 = vmatpush.msra.mxu0 %v2973
        %2999 = vmatpush.msra.mxu0 %v2971
        %3000 = vmatmul.f32.gmra.mxu0 %v2979
        %v3001 = vpop.f32.mrf.mxu0
        %v3002 = vadd.f32 0.0, %v3001
        %3003 = vmatmul.f32.gmra.mxu0 %v2982
        %v3004 = vpop.f32.mrf.mxu0
        %v3005 = vadd.f32 0.0, %v3004
        %3006 = vdwg.mxu0
        %3007 = vmatpush.msra.mxu0 0.0
        %3008 = vmatpush.msra.mxu0 0.0
        %3009 = vmatpush.msra.mxu0 0.0
        %3010 = vmatpush.msra.mxu0 0.0
        %3011 = vmatpush.msra.mxu0 0.0
        %3012 = vmatpush.msra.mxu0 0.0
        %3013 = vmatpush.msra.mxu0 0.0
        %3014 = vmatpush.msra.mxu0 0.0
        %3015 = vmatpush.msra.mxu0 0.0
        %3016 = vmatpush.msra.mxu0 0.0
        %3017 = vmatpush.msra.mxu0 0.0
        %3018 = vmatpush.msra.mxu0 0.0
        %3019 = vmatpush.msra.mxu0 0.0
        %3020 = vmatpush.msra.mxu0 0.0
        %3021 = vmatpush.msra.mxu0 %v2974
        %3022 = vmatpush.msra.mxu0 %v2972
        %3023 = vmatmul.f32.gmra.mxu0 %v2979
        %v3024 = vpop.f32.mrf.mxu0
        %v3025 = vadd.f32 0.0, %v3024
        %3026 = vmatmul.f32.gmra.mxu0 %v2982
        %v3027 = vpop.f32.mrf.mxu0
        %v3028 = vadd.f32 0.0, %v3027
        %3029 = vdwg.mxu0
        %v3030 = vadd.f32 %v2955, %v3002
        %v3031 = vadd.f32 %v2956, %v3025
        %v3032 = vadd.f32 %v2957, %v3005
        %v3033 = vadd.f32 %v2958, %v3028
        %3034 = vrot.lane.b32.xlu0 %v2601, 113
        %v3035 = vpop.permute.xlu0 %3034
        %3036 = vrot.lane.b32.xlu0 %v2603, 113
        %v3037 = vpop.permute.xlu0 %3036
        %3038 = vrot.lane.b32.xlu0 %v2602, 113
        %v3039 = vpop.permute.xlu0 %3038
        %3040 = vrot.lane.b32.xlu0 %v2604, 113
        %v3041 = vpop.permute.xlu0 %3040
        %v3042 = vsel %vm912, %v3035, %v3039
        %v3043 = vsel %vm912, %v3037, %v3041
        %v3044 = vsel %vm912, %v3039, %v3035
        %v3045 = vsel %vm912, %v3041, %v3037
        %v3046 = vmul.f32 %v3042, %v920
        %v3047 = vmul.f32 %v3044, %v921
        %v3048 = vmul.f32 %v3043, %v920
        %v3049 = vmul.f32 %v3045, %v921
        %s3050 = scalar_lea.vmem %s3, 240
        %v3051 = vld [vmem:[%s3050] sm:$0xff]
        %v3052 = vld [vmem:[%s3050 + $0x8] sm:$0xff]
        %v3054 = vsel %vm467, %v3051, 0
        %v3057 = vsel %vm467, %v3052, 0
        %3059 = vmatpush.msra.mxu0 0.0
        %3060 = vmatpush.msra.mxu0 0.0
        %3061 = vmatpush.msra.mxu0 0.0
        %3062 = vmatpush.msra.mxu0 0.0
        %3063 = vmatpush.msra.mxu0 0.0
        %3064 = vmatpush.msra.mxu0 0.0
        %3065 = vmatpush.msra.mxu0 0.0
        %3066 = vmatpush.msra.mxu0 0.0
        %3067 = vmatpush.msra.mxu0 0.0
        %3068 = vmatpush.msra.mxu0 0.0
        %3069 = vmatpush.msra.mxu0 0.0
        %3070 = vmatpush.msra.mxu0 0.0
        %3071 = vmatpush.msra.mxu0 0.0
        %3072 = vmatpush.msra.mxu0 0.0
        %3073 = vmatpush.msra.mxu0 %v3048
        %3074 = vmatpush.msra.mxu0 %v3046
        %3075 = vmatmul.f32.gmra.mxu0 %v3054
        %v3076 = vpop.f32.mrf.mxu0
        %v3077 = vadd.f32 0.0, %v3076
        %3078 = vmatmul.f32.gmra.mxu0 %v3057
        %v3079 = vpop.f32.mrf.mxu0
        %v3080 = vadd.f32 0.0, %v3079
        %3081 = vdwg.mxu0
        %3082 = vmatpush.msra.mxu0 0.0
        %3083 = vmatpush.msra.mxu0 0.0
        %3084 = vmatpush.msra.mxu0 0.0
        %3085 = vmatpush.msra.mxu0 0.0
        %3086 = vmatpush.msra.mxu0 0.0
        %3087 = vmatpush.msra.mxu0 0.0
        %3088 = vmatpush.msra.mxu0 0.0
        %3089 = vmatpush.msra.mxu0 0.0
        %3090 = vmatpush.msra.mxu0 0.0
        %3091 = vmatpush.msra.mxu0 0.0
        %3092 = vmatpush.msra.mxu0 0.0
        %3093 = vmatpush.msra.mxu0 0.0
        %3094 = vmatpush.msra.mxu0 0.0
        %3095 = vmatpush.msra.mxu0 0.0
        %3096 = vmatpush.msra.mxu0 %v3049
        %3097 = vmatpush.msra.mxu0 %v3047
        %3098 = vmatmul.f32.gmra.mxu0 %v3054
        %v3099 = vpop.f32.mrf.mxu0
        %v3100 = vadd.f32 0.0, %v3099
        %3101 = vmatmul.f32.gmra.mxu0 %v3057
        %v3102 = vpop.f32.mrf.mxu0
        %v3103 = vadd.f32 0.0, %v3102
        %3104 = vdwg.mxu0
        %v3105 = vadd.f32 %v3030, %v3077
        %v3106 = vadd.f32 %v3031, %v3100
        %v3107 = vadd.f32 %v3032, %v3080
        %v3108 = vadd.f32 %v3033, %v3103
        %3109 = vrot.lane.b32.xlu0 %v2601, 112
        %v3110 = vpop.permute.xlu0 %3109
        %3111 = vrot.lane.b32.xlu0 %v2603, 112
        %v3112 = vpop.permute.xlu0 %3111
        %3113 = vrot.lane.b32.xlu0 %v2602, 112
        %v3114 = vpop.permute.xlu0 %3113
        %3115 = vrot.lane.b32.xlu0 %v2604, 112
        %v3116 = vpop.permute.xlu0 %3115
        %v3117 = vsel %vm995, %v3110, %v3114
        %v3118 = vsel %vm995, %v3112, %v3116
        %v3119 = vsel %vm995, %v3114, %v3110
        %v3120 = vsel %vm995, %v3116, %v3112
        %v3121 = vmul.f32 %v3117, %v1003
        %v3122 = vmul.f32 %v3119, %v1004
        %v3123 = vmul.f32 %v3118, %v1003
        %v3124 = vmul.f32 %v3120, %v1004
        %s3125 = scalar_lea.vmem %s3, 256
        %v3126 = vld [vmem:[%s3125] sm:$0xff]
        %v3127 = vld [vmem:[%s3125 + $0x8] sm:$0xff]
        %v3129 = vsel %vm467, %v3126, 0
        %v3132 = vsel %vm467, %v3127, 0
        %3134 = vmatpush.msra.mxu0 0.0
        %3135 = vmatpush.msra.mxu0 0.0
        %3136 = vmatpush.msra.mxu0 0.0
        %3137 = vmatpush.msra.mxu0 0.0
        %3138 = vmatpush.msra.mxu0 0.0
        %3139 = vmatpush.msra.mxu0 0.0
        %3140 = vmatpush.msra.mxu0 0.0
        %3141 = vmatpush.msra.mxu0 0.0
        %3142 = vmatpush.msra.mxu0 0.0
        %3143 = vmatpush.msra.mxu0 0.0
        %3144 = vmatpush.msra.mxu0 0.0
        %3145 = vmatpush.msra.mxu0 0.0
        %3146 = vmatpush.msra.mxu0 0.0
        %3147 = vmatpush.msra.mxu0 0.0
        %3148 = vmatpush.msra.mxu0 %v3123
        %3149 = vmatpush.msra.mxu0 %v3121
        %3150 = vmatmul.f32.gmra.mxu0 %v3129
        %v3151 = vpop.f32.mrf.mxu0
        %v3152 = vadd.f32 0.0, %v3151
        %3153 = vmatmul.f32.gmra.mxu0 %v3132
        %v3154 = vpop.f32.mrf.mxu0
        %v3155 = vadd.f32 0.0, %v3154
        %3156 = vdwg.mxu0
        %3157 = vmatpush.msra.mxu0 0.0
        %3158 = vmatpush.msra.mxu0 0.0
        %3159 = vmatpush.msra.mxu0 0.0
        %3160 = vmatpush.msra.mxu0 0.0
        %3161 = vmatpush.msra.mxu0 0.0
        %3162 = vmatpush.msra.mxu0 0.0
        %3163 = vmatpush.msra.mxu0 0.0
        %3164 = vmatpush.msra.mxu0 0.0
        %3165 = vmatpush.msra.mxu0 0.0
        %3166 = vmatpush.msra.mxu0 0.0
        %3167 = vmatpush.msra.mxu0 0.0
        %3168 = vmatpush.msra.mxu0 0.0
        %3169 = vmatpush.msra.mxu0 0.0
        %3170 = vmatpush.msra.mxu0 0.0
        %3171 = vmatpush.msra.mxu0 %v3124
        %3172 = vmatpush.msra.mxu0 %v3122
        %3173 = vmatmul.f32.gmra.mxu0 %v3129
        %v3174 = vpop.f32.mrf.mxu0
        %v3175 = vadd.f32 0.0, %v3174
        %3176 = vmatmul.f32.gmra.mxu0 %v3132
        %v3177 = vpop.f32.mrf.mxu0
        %v3178 = vadd.f32 0.0, %v3177
        %3179 = vdwg.mxu0
        %v3180 = vadd.f32 %v3105, %v3152
        %v3181 = vadd.f32 %v3106, %v3175
        %v3182 = vadd.f32 %v3107, %v3155
        %v3183 = vadd.f32 %v3108, %v3178
        %3184 = vrot.lane.b32.xlu0 %v2601, 111
        %v3185 = vpop.permute.xlu0 %3184
        %3186 = vrot.lane.b32.xlu0 %v2603, 111
        %v3187 = vpop.permute.xlu0 %3186
        %3188 = vrot.lane.b32.xlu0 %v2602, 111
        %v3189 = vpop.permute.xlu0 %3188
        %3190 = vrot.lane.b32.xlu0 %v2604, 111
        %v3191 = vpop.permute.xlu0 %3190
        %v3192 = vsel %vm1078, %v3185, %v3189
        %v3193 = vsel %vm1078, %v3187, %v3191
        %v3194 = vsel %vm1078, %v3189, %v3185
        %v3195 = vsel %vm1078, %v3191, %v3187
        %v3196 = vmul.f32 %v3192, %v1086
        %v3197 = vmul.f32 %v3194, %v1087
        %v3198 = vmul.f32 %v3193, %v1086
        %v3199 = vmul.f32 %v3195, %v1087
        %s3200 = scalar_lea.vmem %s3, 272
        %v3201 = vld [vmem:[%s3200] sm:$0xff]
        %v3202 = vld [vmem:[%s3200 + $0x8] sm:$0xff]
        %v3204 = vsel %vm467, %v3201, 0
        %v3207 = vsel %vm467, %v3202, 0
        %3209 = vmatpush.msra.mxu0 0.0
        %3210 = vmatpush.msra.mxu0 0.0
        %3211 = vmatpush.msra.mxu0 0.0
        %3212 = vmatpush.msra.mxu0 0.0
        %3213 = vmatpush.msra.mxu0 0.0
        %3214 = vmatpush.msra.mxu0 0.0
        %3215 = vmatpush.msra.mxu0 0.0
        %3216 = vmatpush.msra.mxu0 0.0
        %3217 = vmatpush.msra.mxu0 0.0
        %3218 = vmatpush.msra.mxu0 0.0
        %3219 = vmatpush.msra.mxu0 0.0
        %3220 = vmatpush.msra.mxu0 0.0
        %3221 = vmatpush.msra.mxu0 0.0
        %3222 = vmatpush.msra.mxu0 0.0
        %3223 = vmatpush.msra.mxu0 %v3198
        %3224 = vmatpush.msra.mxu0 %v3196
        %3225 = vmatmul.f32.gmra.mxu0 %v3204
        %v3226 = vpop.f32.mrf.mxu0
        %v3227 = vadd.f32 0.0, %v3226
        %3228 = vmatmul.f32.gmra.mxu0 %v3207
        %v3229 = vpop.f32.mrf.mxu0
        %v3230 = vadd.f32 0.0, %v3229
        %3231 = vdwg.mxu0
        %3232 = vmatpush.msra.mxu0 0.0
        %3233 = vmatpush.msra.mxu0 0.0
        %3234 = vmatpush.msra.mxu0 0.0
        %3235 = vmatpush.msra.mxu0 0.0
        %3236 = vmatpush.msra.mxu0 0.0
        %3237 = vmatpush.msra.mxu0 0.0
        %3238 = vmatpush.msra.mxu0 0.0
        %3239 = vmatpush.msra.mxu0 0.0
        %3240 = vmatpush.msra.mxu0 0.0
        %3241 = vmatpush.msra.mxu0 0.0
        %3242 = vmatpush.msra.mxu0 0.0
        %3243 = vmatpush.msra.mxu0 0.0
        %3244 = vmatpush.msra.mxu0 0.0
        %3245 = vmatpush.msra.mxu0 0.0
        %3246 = vmatpush.msra.mxu0 %v3199
        %3247 = vmatpush.msra.mxu0 %v3197
        %3248 = vmatmul.f32.gmra.mxu0 %v3204
        %v3249 = vpop.f32.mrf.mxu0
        %v3250 = vadd.f32 0.0, %v3249
        %3251 = vmatmul.f32.gmra.mxu0 %v3207
        %v3252 = vpop.f32.mrf.mxu0
        %v3253 = vadd.f32 0.0, %v3252
        %3254 = vdwg.mxu0
        %v3255 = vadd.f32 %v3180, %v3227
        %v3256 = vadd.f32 %v3181, %v3250
        %v3257 = vadd.f32 %v3182, %v3230
        %v3258 = vadd.f32 %v3183, %v3253
        %3260 = vset.pattern.permute.xlu0 0
        %3261 = vperm.xlu0 %3260, %v2606
        %v3262 = vpop.permute.xlu0 %3261
        %3265 = vset.pattern.permute.xlu0 0
        %3266 = vperm.xlu0 %3265, %v2607
        %v3267 = vpop.permute.xlu0 %3266
        %v3269 = vadd.f32 %v3255, %v3262
        %v3270 = vadd.f32 %v3256, %v3262
        %v3271 = vadd.f32 %v3257, %v3267
        %v3272 = vadd.f32 %v3258, %v3267
        %v3273 = vadd.f32 %v3269, %v3270
        %3274 = vadd.xlane.f32.xlu0 %v3273
        %v3275 = vpop.xlane.xlu0 %3274
        %v3276 = vadd.f32 %v3271, %v3272
        %3277 = vadd.xlane.f32.xlu0 %v3276
        %v3278 = vpop.xlane.xlu0 %3277
        %v3279 = vmul.f32 %v3275, 0.00390625
        %v3280 = vmul.f32 %v3278, 0.00390625
        %s3281 = scalar_lea.vmem %s5, 16
        %v3282 = vld [vmem:[%s3281] sm:$0xff]
        %v3283 = vld [vmem:[%s3281 + $0x8] sm:$0xff]
        %v3284 = vmul.f32 %v3282, %v3279
        %v3285 = vmul.f32 %v3283, %v3280
        %v3286 = vsel %vm1849, %v3284, 0.0
        %v3287 = vsel %vm1849, %v3285, 0.0
        %v3288 = vadd.f32 %v3286, %v3287
        %v3289 = vrot.slane %v3288, 4
        %v3290 = vadd.f32 %v3288, %v3289
        %v3291 = vrot.slane %v3290, 2
        %v3292 = vadd.f32 %v3290, %v3291
        %v3293 = vrot.slane %v3292, 1
        %v3294 = vadd.f32 %v3292, %v3293
        %s3295 = scalar_lea.vmem %s6, 1
        %v3296 = vld [vmem:[%s3295] sm:$0x1]
        %v3297 = vadd.f32 %v3294, %v3296
        %v3298 = vmax.f32 %v3297, 0.0
        %s3299 = scalar_lea.vmem %s7, 16
        %v3300 = vld [vmem:[%s3299] sm:$0xff]
        %v3301 = vld [vmem:[%s3299 + $0x8] sm:$0xff]
        %v3302 = vperm.slane %v3298, 0
        %v3303 = vmul.f32 %v3300, %v3302
        %v3304 = vmul.f32 %v3301, %v3302
        %v3305 = vsel %vm1849, %v3303, 0.0
        %3306 = vadd.xlane.f32.xlu0 %v3305
        %v3307 = vpop.xlane.xlu0 %3306
        %v3308 = vsel %vm1849, %v3304, 0.0
        %3309 = vadd.xlane.f32.xlu0 %v3308
        %v3310 = vpop.xlane.xlu0 %3309
        %s3311 = scalar_lea.vmem %s8, 16
        %v3312 = vld [vmem:[%s3311] sm:$0xff]
        %v3313 = vld [vmem:[%s3311 + $0x8] sm:$0xff]
        %v3314 = vadd.f32 %v3307, %v3312
        %v3315 = vadd.f32 %v3310, %v3313
        %v3316 = vxor.u32 %v3314, 2147483648
        %v3317 = vxor.u32 %v3315, 2147483648
        %v3318 = vmul.f32 %v3316, 1.442695
        %v3319 = vpow.pop %v3318
        %v3320 = vmul.f32 %v3317, 1.442695
        %v3321 = vpow.pop %v3320
        %v3322 = vadd.f32 %v3319, 1.0
        %v3323 = vadd.f32 %v3321, 1.0
        %v3324 = vrcp.pop %v3322
        %v3325 = vmul.f32 %v3322, %v3324
        %v3326 = vsub.f32 1.0, %v3325
        %v3327 = vmul.f32 %v3324, %v3326
        %v3328 = vadd.f32 %v3324, %v3327
        %vm3329 = vweird.f32 %v3322
        %vm3330 = vweird.f32 %v3324
        %vm3331 = vmor %vm3329, %vm3330
        %v3332 = vsel %vm3331, %v3324, %v3328
        %v3333 = vand.u32 2147483647, %v3322
        %vm3334 = vcmp.eq.f32.partialorder %v3333, 8.507059e+37
        %v3335 = vand.u32 %v3322, 2147483648
        %v3336 = vor.u32 1.1754944e-38, %v3335
        %v3337 = vsel %vm3334, %v3336, %v3332
        %v3338 = vmul.f32 1.0, %v3337
        %v3339 = vrcp.pop %v3323
        %v3340 = vmul.f32 %v3323, %v3339
        %v3341 = vsub.f32 1.0, %v3340
        %v3342 = vmul.f32 %v3339, %v3341
        %v3343 = vadd.f32 %v3339, %v3342
        %vm3344 = vweird.f32 %v3323
        %vm3345 = vweird.f32 %v3339
        %vm3346 = vmor %vm3344, %vm3345
        %v3347 = vsel %vm3346, %v3339, %v3343
        %v3348 = vand.u32 2147483647, %v3323
        %vm3349 = vcmp.eq.f32.partialorder %v3348, 8.507059e+37
        %v3350 = vand.u32 %v3323, 2147483648
        %v3351 = vor.u32 1.1754944e-38, %v3350
        %v3352 = vsel %vm3349, %v3351, %v3347
        %v3353 = vmul.f32 1.0, %v3352
        %3355 = vset.pattern.permute.xlu0 0
        %3356 = vperm.xlu0 %3355, %v3338
        %v3357 = vpop.permute.xlu0 %3356
        %3360 = vset.pattern.permute.xlu0 0
        %3361 = vperm.xlu0 %3360, %v3353
        %v3362 = vpop.permute.xlu0 %3361
        %v3364 = vmul.f32 %v3269, %v3357
        %v3365 = vmul.f32 %v3270, %v3357
        %v3366 = vmul.f32 %v3271, %v3362
        %v3367 = vmul.f32 %v3272, %v3362
        %v3368 = vadd.f32 %v3364, %v1929
        %v3369 = vadd.f32 %v3365, %v1930
        %v3370 = vadd.f32 %v3366, %v1931
        %v3371 = vadd.f32 %v3367, %v1932
        %v3372 = vld [vmem:[%s10] sm:$0xff]
        %v3373 = vld [vmem:[%s10 + $0x8] sm:$0xff]
        %s3374 = scalar_lea.vmem [#allocation2], 64
        %v3375 = vld [vmem:[%s3374] sm:$0xff]
        %v3376 = vld [vmem:[%s3374 + $0x8] sm:$0xff]
        %3377 = vrot.lane.b32.xlu0 %v3368, 17
        %v3378 = vpop.permute.xlu0 %3377
        %3379 = vrot.lane.b32.xlu0 %v3370, 17
        %v3380 = vpop.permute.xlu0 %3379
        %3381 = vrot.lane.b32.xlu0 %v3369, 17
        %v3382 = vpop.permute.xlu0 %3381
        %3383 = vrot.lane.b32.xlu0 %v3371, 17
        %v3384 = vpop.permute.xlu0 %3383
        %v3385 = vsel %vm450, %v3378, %v3382
        %v3386 = vsel %vm450, %v3380, %v3384
        %v3387 = vsel %vm450, %v3382, %v3378
        %v3388 = vsel %vm450, %v3384, %v3380
        %v3389 = vmul.f32 %v3387, %v457
        %v3390 = vmul.f32 %v3385, %v458
        %v3391 = vmul.f32 %v3388, %v457
        %v3392 = vmul.f32 %v3386, %v458
        %v3393 = vld [vmem:[#allocation2] sm:$0xff]
        %v3394 = vld [vmem:[#allocation2 + $0x8] sm:$0xff]
        %v3396 = vsel %vm467, %v3393, 0
        %v3399 = vsel %vm467, %v3394, 0
        %3401 = vmatpush.msra.mxu0 0.0
        %3402 = vmatpush.msra.mxu0 0.0
        %3403 = vmatpush.msra.mxu0 0.0
        %3404 = vmatpush.msra.mxu0 0.0
        %3405 = vmatpush.msra.mxu0 0.0
        %3406 = vmatpush.msra.mxu0 0.0
        %3407 = vmatpush.msra.mxu0 0.0
        %3408 = vmatpush.msra.mxu0 0.0
        %3409 = vmatpush.msra.mxu0 0.0
        %3410 = vmatpush.msra.mxu0 0.0
        %3411 = vmatpush.msra.mxu0 0.0
        %3412 = vmatpush.msra.mxu0 0.0
        %3413 = vmatpush.msra.mxu0 0.0
        %3414 = vmatpush.msra.mxu0 0.0
        %3415 = vmatpush.msra.mxu0 %v3391
        %3416 = vmatpush.msra.mxu0 %v3389
        %3417 = vmatmul.f32.gmra.mxu0 %v3396
        %v3418 = vpop.f32.mrf.mxu0
        %v3419 = vadd.f32 0.0, %v3418
        %3420 = vmatmul.f32.gmra.mxu0 %v3399
        %v3421 = vpop.f32.mrf.mxu0
        %v3422 = vadd.f32 0.0, %v3421
        %3423 = vdwg.mxu0
        %3424 = vmatpush.msra.mxu0 0.0
        %3425 = vmatpush.msra.mxu0 0.0
        %3426 = vmatpush.msra.mxu0 0.0
        %3427 = vmatpush.msra.mxu0 0.0
        %3428 = vmatpush.msra.mxu0 0.0
        %3429 = vmatpush.msra.mxu0 0.0
        %3430 = vmatpush.msra.mxu0 0.0
        %3431 = vmatpush.msra.mxu0 0.0
        %3432 = vmatpush.msra.mxu0 0.0
        %3433 = vmatpush.msra.mxu0 0.0
        %3434 = vmatpush.msra.mxu0 0.0
        %3435 = vmatpush.msra.mxu0 0.0
        %3436 = vmatpush.msra.mxu0 0.0
        %3437 = vmatpush.msra.mxu0 0.0
        %3438 = vmatpush.msra.mxu0 %v3392
        %3439 = vmatpush.msra.mxu0 %v3390
        %3440 = vmatmul.f32.gmra.mxu0 %v3396
        %v3441 = vpop.f32.mrf.mxu0
        %v3442 = vadd.f32 0.0, %v3441
        %3443 = vmatmul.f32.gmra.mxu0 %v3399
        %v3444 = vpop.f32.mrf.mxu0
        %v3445 = vadd.f32 0.0, %v3444
        %3446 = vdwg.mxu0
        %v3448 = vsel %vm467, %v3375, 0
        %v3451 = vsel %vm467, %v3376, 0
        %3453 = vmatpush.msra.mxu0 0.0
        %3454 = vmatpush.msra.mxu0 0.0
        %3455 = vmatpush.msra.mxu0 0.0
        %3456 = vmatpush.msra.mxu0 0.0
        %3457 = vmatpush.msra.mxu0 0.0
        %3458 = vmatpush.msra.mxu0 0.0
        %3459 = vmatpush.msra.mxu0 0.0
        %3460 = vmatpush.msra.mxu0 0.0
        %3461 = vmatpush.msra.mxu0 0.0
        %3462 = vmatpush.msra.mxu0 0.0
        %3463 = vmatpush.msra.mxu0 0.0
        %3464 = vmatpush.msra.mxu0 0.0
        %3465 = vmatpush.msra.mxu0 0.0
        %3466 = vmatpush.msra.mxu0 0.0
        %3467 = vmatpush.msra.mxu0 %v3370
        %3468 = vmatpush.msra.mxu0 %v3368
        %3469 = vmatmul.f32.gmra.mxu0 %v3448
        %v3470 = vpop.f32.mrf.mxu0
        %v3471 = vadd.f32 %v3419, %v3470
        %3472 = vmatmul.f32.gmra.mxu0 %v3451
        %v3473 = vpop.f32.mrf.mxu0
        %v3474 = vadd.f32 %v3422, %v3473
        %3475 = vdwg.mxu0
        %3476 = vmatpush.msra.mxu0 0.0
        %3477 = vmatpush.msra.mxu0 0.0
        %3478 = vmatpush.msra.mxu0 0.0
        %3479 = vmatpush.msra.mxu0 0.0
        %3480 = vmatpush.msra.mxu0 0.0
        %3481 = vmatpush.msra.mxu0 0.0
        %3482 = vmatpush.msra.mxu0 0.0
        %3483 = vmatpush.msra.mxu0 0.0
        %3484 = vmatpush.msra.mxu0 0.0
        %3485 = vmatpush.msra.mxu0 0.0
        %3486 = vmatpush.msra.mxu0 0.0
        %3487 = vmatpush.msra.mxu0 0.0
        %3488 = vmatpush.msra.mxu0 0.0
        %3489 = vmatpush.msra.mxu0 0.0
        %3490 = vmatpush.msra.mxu0 %v3371
        %3491 = vmatpush.msra.mxu0 %v3369
        %3492 = vmatmul.f32.gmra.mxu0 %v3448
        %v3493 = vpop.f32.mrf.mxu0
        %v3494 = vadd.f32 %v3442, %v3493
        %3495 = vmatmul.f32.gmra.mxu0 %v3451
        %v3496 = vpop.f32.mrf.mxu0
        %v3497 = vadd.f32 %v3445, %v3496
        %3498 = vdwg.mxu0
        %3499 = vrot.lane.b32.xlu0 %v3368, 16
        %v3500 = vpop.permute.xlu0 %3499
        %3501 = vrot.lane.b32.xlu0 %v3370, 16
        %v3502 = vpop.permute.xlu0 %3501
        %3503 = vrot.lane.b32.xlu0 %v3369, 16
        %v3504 = vpop.permute.xlu0 %3503
        %3505 = vrot.lane.b32.xlu0 %v3371, 16
        %v3506 = vpop.permute.xlu0 %3505
        %v3507 = vsel %vm580, %v3500, %v3504
        %v3508 = vsel %vm580, %v3502, %v3506
        %v3509 = vsel %vm580, %v3504, %v3500
        %v3510 = vsel %vm580, %v3506, %v3502
        %v3511 = vmul.f32 %v3509, %v588
        %v3512 = vmul.f32 %v3507, %v589
        %v3513 = vmul.f32 %v3510, %v588
        %v3514 = vmul.f32 %v3508, %v589
        %s3515 = scalar_lea.vmem [#allocation2], 16
        %v3516 = vld [vmem:[%s3515] sm:$0xff]
        %v3517 = vld [vmem:[%s3515 + $0x8] sm:$0xff]
        %v3519 = vsel %vm467, %v3516, 0
        %v3522 = vsel %vm467, %v3517, 0
        %3524 = vmatpush.msra.mxu0 0.0
        %3525 = vmatpush.msra.mxu0 0.0
        %3526 = vmatpush.msra.mxu0 0.0
        %3527 = vmatpush.msra.mxu0 0.0
        %3528 = vmatpush.msra.mxu0 0.0
        %3529 = vmatpush.msra.mxu0 0.0
        %3530 = vmatpush.msra.mxu0 0.0
        %3531 = vmatpush.msra.mxu0 0.0
        %3532 = vmatpush.msra.mxu0 0.0
        %3533 = vmatpush.msra.mxu0 0.0
        %3534 = vmatpush.msra.mxu0 0.0
        %3535 = vmatpush.msra.mxu0 0.0
        %3536 = vmatpush.msra.mxu0 0.0
        %3537 = vmatpush.msra.mxu0 0.0
        %3538 = vmatpush.msra.mxu0 %v3513
        %3539 = vmatpush.msra.mxu0 %v3511
        %3540 = vmatmul.f32.gmra.mxu0 %v3519
        %v3541 = vpop.f32.mrf.mxu0
        %v3542 = vadd.f32 0.0, %v3541
        %3543 = vmatmul.f32.gmra.mxu0 %v3522
        %v3544 = vpop.f32.mrf.mxu0
        %v3545 = vadd.f32 0.0, %v3544
        %3546 = vdwg.mxu0
        %3547 = vmatpush.msra.mxu0 0.0
        %3548 = vmatpush.msra.mxu0 0.0
        %3549 = vmatpush.msra.mxu0 0.0
        %3550 = vmatpush.msra.mxu0 0.0
        %3551 = vmatpush.msra.mxu0 0.0
        %3552 = vmatpush.msra.mxu0 0.0
        %3553 = vmatpush.msra.mxu0 0.0
        %3554 = vmatpush.msra.mxu0 0.0
        %3555 = vmatpush.msra.mxu0 0.0
        %3556 = vmatpush.msra.mxu0 0.0
        %3557 = vmatpush.msra.mxu0 0.0
        %3558 = vmatpush.msra.mxu0 0.0
        %3559 = vmatpush.msra.mxu0 0.0
        %3560 = vmatpush.msra.mxu0 0.0
        %3561 = vmatpush.msra.mxu0 %v3514
        %3562 = vmatpush.msra.mxu0 %v3512
        %3563 = vmatmul.f32.gmra.mxu0 %v3519
        %v3564 = vpop.f32.mrf.mxu0
        %v3565 = vadd.f32 0.0, %v3564
        %3566 = vmatmul.f32.gmra.mxu0 %v3522
        %v3567 = vpop.f32.mrf.mxu0
        %v3568 = vadd.f32 0.0, %v3567
        %3569 = vdwg.mxu0
        %v3570 = vadd.f32 %v3471, %v3542
        %v3571 = vadd.f32 %v3494, %v3565
        %v3572 = vadd.f32 %v3474, %v3545
        %v3573 = vadd.f32 %v3497, %v3568
        %3574 = vrot.lane.b32.xlu0 %v3368, 15
        %v3575 = vpop.permute.xlu0 %3574
        %3576 = vrot.lane.b32.xlu0 %v3370, 15
        %v3577 = vpop.permute.xlu0 %3576
        %3578 = vrot.lane.b32.xlu0 %v3369, 15
        %v3579 = vpop.permute.xlu0 %3578
        %3580 = vrot.lane.b32.xlu0 %v3371, 15
        %v3581 = vpop.permute.xlu0 %3580
        %v3582 = vsel %vm663, %v3575, %v3579
        %v3583 = vsel %vm663, %v3577, %v3581
        %v3584 = vsel %vm663, %v3579, %v3575
        %v3585 = vsel %vm663, %v3581, %v3577
        %v3586 = vmul.f32 %v3584, %v671
        %v3587 = vmul.f32 %v3582, %v672
        %v3588 = vmul.f32 %v3585, %v671
        %v3589 = vmul.f32 %v3583, %v672
        %s3590 = scalar_lea.vmem [#allocation2], 32
        %v3591 = vld [vmem:[%s3590] sm:$0xff]
        %v3592 = vld [vmem:[%s3590 + $0x8] sm:$0xff]
        %v3594 = vsel %vm467, %v3591, 0
        %v3597 = vsel %vm467, %v3592, 0
        %3599 = vmatpush.msra.mxu0 0.0
        %3600 = vmatpush.msra.mxu0 0.0
        %3601 = vmatpush.msra.mxu0 0.0
        %3602 = vmatpush.msra.mxu0 0.0
        %3603 = vmatpush.msra.mxu0 0.0
        %3604 = vmatpush.msra.mxu0 0.0
        %3605 = vmatpush.msra.mxu0 0.0
        %3606 = vmatpush.msra.mxu0 0.0
        %3607 = vmatpush.msra.mxu0 0.0
        %3608 = vmatpush.msra.mxu0 0.0
        %3609 = vmatpush.msra.mxu0 0.0
        %3610 = vmatpush.msra.mxu0 0.0
        %3611 = vmatpush.msra.mxu0 0.0
        %3612 = vmatpush.msra.mxu0 0.0
        %3613 = vmatpush.msra.mxu0 %v3588
        %3614 = vmatpush.msra.mxu0 %v3586
        %3615 = vmatmul.f32.gmra.mxu0 %v3594
        %v3616 = vpop.f32.mrf.mxu0
        %v3617 = vadd.f32 0.0, %v3616
        %3618 = vmatmul.f32.gmra.mxu0 %v3597
        %v3619 = vpop.f32.mrf.mxu0
        %v3620 = vadd.f32 0.0, %v3619
        %3621 = vdwg.mxu0
        %3622 = vmatpush.msra.mxu0 0.0
        %3623 = vmatpush.msra.mxu0 0.0
        %3624 = vmatpush.msra.mxu0 0.0
        %3625 = vmatpush.msra.mxu0 0.0
        %3626 = vmatpush.msra.mxu0 0.0
        %3627 = vmatpush.msra.mxu0 0.0
        %3628 = vmatpush.msra.mxu0 0.0
        %3629 = vmatpush.msra.mxu0 0.0
        %3630 = vmatpush.msra.mxu0 0.0
        %3631 = vmatpush.msra.mxu0 0.0
        %3632 = vmatpush.msra.mxu0 0.0
        %3633 = vmatpush.msra.mxu0 0.0
        %3634 = vmatpush.msra.mxu0 0.0
        %3635 = vmatpush.msra.mxu0 0.0
        %3636 = vmatpush.msra.mxu0 %v3589
        %3637 = vmatpush.msra.mxu0 %v3587
        %3638 = vmatmul.f32.gmra.mxu0 %v3594
        %v3639 = vpop.f32.mrf.mxu0
        %v3640 = vadd.f32 0.0, %v3639
        %3641 = vmatmul.f32.gmra.mxu0 %v3597
        %v3642 = vpop.f32.mrf.mxu0
        %v3643 = vadd.f32 0.0, %v3642
        %3644 = vdwg.mxu0
        %v3645 = vadd.f32 %v3570, %v3617
        %v3646 = vadd.f32 %v3571, %v3640
        %v3647 = vadd.f32 %v3572, %v3620
        %v3648 = vadd.f32 %v3573, %v3643
        %3649 = vrot.lane.b32.xlu0 %v3368, 1
        %v3650 = vpop.permute.xlu0 %3649
        %3651 = vrot.lane.b32.xlu0 %v3370, 1
        %v3652 = vpop.permute.xlu0 %3651
        %3653 = vrot.lane.b32.xlu0 %v3369, 1
        %v3654 = vpop.permute.xlu0 %3653
        %3655 = vrot.lane.b32.xlu0 %v3371, 1
        %v3656 = vpop.permute.xlu0 %3655
        %v3657 = vsel %vm746, %v3650, %v3654
        %v3658 = vsel %vm746, %v3652, %v3656
        %v3659 = vsel %vm746, %v3654, %v3650
        %v3660 = vsel %vm746, %v3656, %v3652
        %v3661 = vmul.f32 %v3659, %v754
        %v3662 = vmul.f32 %v3657, %v755
        %v3663 = vmul.f32 %v3660, %v754
        %v3664 = vmul.f32 %v3658, %v755
        %s3665 = scalar_lea.vmem [#allocation2], 48
        %v3666 = vld [vmem:[%s3665] sm:$0xff]
        %v3667 = vld [vmem:[%s3665 + $0x8] sm:$0xff]
        %v3669 = vsel %vm467, %v3666, 0
        %v3672 = vsel %vm467, %v3667, 0
        %3674 = vmatpush.msra.mxu0 0.0
        %3675 = vmatpush.msra.mxu0 0.0
        %3676 = vmatpush.msra.mxu0 0.0
        %3677 = vmatpush.msra.mxu0 0.0
        %3678 = vmatpush.msra.mxu0 0.0
        %3679 = vmatpush.msra.mxu0 0.0
        %3680 = vmatpush.msra.mxu0 0.0
        %3681 = vmatpush.msra.mxu0 0.0
        %3682 = vmatpush.msra.mxu0 0.0
        %3683 = vmatpush.msra.mxu0 0.0
        %3684 = vmatpush.msra.mxu0 0.0
        %3685 = vmatpush.msra.mxu0 0.0
        %3686 = vmatpush.msra.mxu0 0.0
        %3687 = vmatpush.msra.mxu0 0.0
        %3688 = vmatpush.msra.mxu0 %v3663
        %3689 = vmatpush.msra.mxu0 %v3661
        %3690 = vmatmul.f32.gmra.mxu0 %v3669
        %v3691 = vpop.f32.mrf.mxu0
        %v3692 = vadd.f32 0.0, %v3691
        %3693 = vmatmul.f32.gmra.mxu0 %v3672
        %v3694 = vpop.f32.mrf.mxu0
        %v3695 = vadd.f32 0.0, %v3694
        %3696 = vdwg.mxu0
        %3697 = vmatpush.msra.mxu0 0.0
        %3698 = vmatpush.msra.mxu0 0.0
        %3699 = vmatpush.msra.mxu0 0.0
        %3700 = vmatpush.msra.mxu0 0.0
        %3701 = vmatpush.msra.mxu0 0.0
        %3702 = vmatpush.msra.mxu0 0.0
        %3703 = vmatpush.msra.mxu0 0.0
        %3704 = vmatpush.msra.mxu0 0.0
        %3705 = vmatpush.msra.mxu0 0.0
        %3706 = vmatpush.msra.mxu0 0.0
        %3707 = vmatpush.msra.mxu0 0.0
        %3708 = vmatpush.msra.mxu0 0.0
        %3709 = vmatpush.msra.mxu0 0.0
        %3710 = vmatpush.msra.mxu0 0.0
        %3711 = vmatpush.msra.mxu0 %v3664
        %3712 = vmatpush.msra.mxu0 %v3662
        %3713 = vmatmul.f32.gmra.mxu0 %v3669
        %v3714 = vpop.f32.mrf.mxu0
        %v3715 = vadd.f32 0.0, %v3714
        %3716 = vmatmul.f32.gmra.mxu0 %v3672
        %v3717 = vpop.f32.mrf.mxu0
        %v3718 = vadd.f32 0.0, %v3717
        %3719 = vdwg.mxu0
        %v3720 = vadd.f32 %v3645, %v3692
        %v3721 = vadd.f32 %v3646, %v3715
        %v3722 = vadd.f32 %v3647, %v3695
        %v3723 = vadd.f32 %v3648, %v3718
        %3724 = vrot.lane.b32.xlu0 %v3368, 127
        %v3725 = vpop.permute.xlu0 %3724
        %3726 = vrot.lane.b32.xlu0 %v3370, 127
        %v3727 = vpop.permute.xlu0 %3726
        %3728 = vrot.lane.b32.xlu0 %v3369, 127
        %v3729 = vpop.permute.xlu0 %3728
        %3730 = vrot.lane.b32.xlu0 %v3371, 127
        %v3731 = vpop.permute.xlu0 %3730
        %v3732 = vsel %vm829, %v3725, %v3729
        %v3733 = vsel %vm829, %v3727, %v3731
        %v3734 = vsel %vm829, %v3729, %v3725
        %v3735 = vsel %vm829, %v3731, %v3727
        %v3736 = vmul.f32 %v3732, %v837
        %v3737 = vmul.f32 %v3734, %v838
        %v3738 = vmul.f32 %v3733, %v837
        %v3739 = vmul.f32 %v3735, %v838
        %s3740 = scalar_lea.vmem [#allocation2], 80
        %v3741 = vld [vmem:[%s3740] sm:$0xff]
        %v3742 = vld [vmem:[%s3740 + $0x8] sm:$0xff]
        %v3744 = vsel %vm467, %v3741, 0
        %v3747 = vsel %vm467, %v3742, 0
        %3749 = vmatpush.msra.mxu0 0.0
        %3750 = vmatpush.msra.mxu0 0.0
        %3751 = vmatpush.msra.mxu0 0.0
        %3752 = vmatpush.msra.mxu0 0.0
        %3753 = vmatpush.msra.mxu0 0.0
        %3754 = vmatpush.msra.mxu0 0.0
        %3755 = vmatpush.msra.mxu0 0.0
        %3756 = vmatpush.msra.mxu0 0.0
        %3757 = vmatpush.msra.mxu0 0.0
        %3758 = vmatpush.msra.mxu0 0.0
        %3759 = vmatpush.msra.mxu0 0.0
        %3760 = vmatpush.msra.mxu0 0.0
        %3761 = vmatpush.msra.mxu0 0.0
        %3762 = vmatpush.msra.mxu0 0.0
        %3763 = vmatpush.msra.mxu0 %v3738
        %3764 = vmatpush.msra.mxu0 %v3736
        %3765 = vmatmul.f32.gmra.mxu0 %v3744
        %v3766 = vpop.f32.mrf.mxu0
        %v3767 = vadd.f32 0.0, %v3766
        %3768 = vmatmul.f32.gmra.mxu0 %v3747
        %v3769 = vpop.f32.mrf.mxu0
        %v3770 = vadd.f32 0.0, %v3769
        %3771 = vdwg.mxu0
        %3772 = vmatpush.msra.mxu0 0.0
        %3773 = vmatpush.msra.mxu0 0.0
        %3774 = vmatpush.msra.mxu0 0.0
        %3775 = vmatpush.msra.mxu0 0.0
        %3776 = vmatpush.msra.mxu0 0.0
        %3777 = vmatpush.msra.mxu0 0.0
        %3778 = vmatpush.msra.mxu0 0.0
        %3779 = vmatpush.msra.mxu0 0.0
        %3780 = vmatpush.msra.mxu0 0.0
        %3781 = vmatpush.msra.mxu0 0.0
        %3782 = vmatpush.msra.mxu0 0.0
        %3783 = vmatpush.msra.mxu0 0.0
        %3784 = vmatpush.msra.mxu0 0.0
        %3785 = vmatpush.msra.mxu0 0.0
        %3786 = vmatpush.msra.mxu0 %v3739
        %3787 = vmatpush.msra.mxu0 %v3737
        %3788 = vmatmul.f32.gmra.mxu0 %v3744
        %v3789 = vpop.f32.mrf.mxu0
        %v3790 = vadd.f32 0.0, %v3789
        %3791 = vmatmul.f32.gmra.mxu0 %v3747
        %v3792 = vpop.f32.mrf.mxu0
        %v3793 = vadd.f32 0.0, %v3792
        %3794 = vdwg.mxu0
        %v3795 = vadd.f32 %v3720, %v3767
        %v3796 = vadd.f32 %v3721, %v3790
        %v3797 = vadd.f32 %v3722, %v3770
        %v3798 = vadd.f32 %v3723, %v3793
        %3799 = vrot.lane.b32.xlu0 %v3368, 113
        %v3800 = vpop.permute.xlu0 %3799
        %3801 = vrot.lane.b32.xlu0 %v3370, 113
        %v3802 = vpop.permute.xlu0 %3801
        %3803 = vrot.lane.b32.xlu0 %v3369, 113
        %v3804 = vpop.permute.xlu0 %3803
        %3805 = vrot.lane.b32.xlu0 %v3371, 113
        %v3806 = vpop.permute.xlu0 %3805
        %v3807 = vsel %vm912, %v3800, %v3804
        %v3808 = vsel %vm912, %v3802, %v3806
        %v3809 = vsel %vm912, %v3804, %v3800
        %v3810 = vsel %vm912, %v3806, %v3802
        %v3811 = vmul.f32 %v3807, %v920
        %v3812 = vmul.f32 %v3809, %v921
        %v3813 = vmul.f32 %v3808, %v920
        %v3814 = vmul.f32 %v3810, %v921
        %s3815 = scalar_lea.vmem [#allocation2], 96
        %v3816 = vld [vmem:[%s3815] sm:$0xff]
        %v3817 = vld [vmem:[%s3815 + $0x8] sm:$0xff]
        %v3819 = vsel %vm467, %v3816, 0
        %v3822 = vsel %vm467, %v3817, 0
        %3824 = vmatpush.msra.mxu0 0.0
        %3825 = vmatpush.msra.mxu0 0.0
        %3826 = vmatpush.msra.mxu0 0.0
        %3827 = vmatpush.msra.mxu0 0.0
        %3828 = vmatpush.msra.mxu0 0.0
        %3829 = vmatpush.msra.mxu0 0.0
        %3830 = vmatpush.msra.mxu0 0.0
        %3831 = vmatpush.msra.mxu0 0.0
        %3832 = vmatpush.msra.mxu0 0.0
        %3833 = vmatpush.msra.mxu0 0.0
        %3834 = vmatpush.msra.mxu0 0.0
        %3835 = vmatpush.msra.mxu0 0.0
        %3836 = vmatpush.msra.mxu0 0.0
        %3837 = vmatpush.msra.mxu0 0.0
        %3838 = vmatpush.msra.mxu0 %v3813
        %3839 = vmatpush.msra.mxu0 %v3811
        %3840 = vmatmul.f32.gmra.mxu0 %v3819
        %v3841 = vpop.f32.mrf.mxu0
        %v3842 = vadd.f32 0.0, %v3841
        %3843 = vmatmul.f32.gmra.mxu0 %v3822
        %v3844 = vpop.f32.mrf.mxu0
        %v3845 = vadd.f32 0.0, %v3844
        %3846 = vdwg.mxu0
        %3847 = vmatpush.msra.mxu0 0.0
        %3848 = vmatpush.msra.mxu0 0.0
        %3849 = vmatpush.msra.mxu0 0.0
        %3850 = vmatpush.msra.mxu0 0.0
        %3851 = vmatpush.msra.mxu0 0.0
        %3852 = vmatpush.msra.mxu0 0.0
        %3853 = vmatpush.msra.mxu0 0.0
        %3854 = vmatpush.msra.mxu0 0.0
        %3855 = vmatpush.msra.mxu0 0.0
        %3856 = vmatpush.msra.mxu0 0.0
        %3857 = vmatpush.msra.mxu0 0.0
        %3858 = vmatpush.msra.mxu0 0.0
        %3859 = vmatpush.msra.mxu0 0.0
        %3860 = vmatpush.msra.mxu0 0.0
        %3861 = vmatpush.msra.mxu0 %v3814
        %3862 = vmatpush.msra.mxu0 %v3812
        %3863 = vmatmul.f32.gmra.mxu0 %v3819
        %v3864 = vpop.f32.mrf.mxu0
        %v3865 = vadd.f32 0.0, %v3864
        %3866 = vmatmul.f32.gmra.mxu0 %v3822
        %v3867 = vpop.f32.mrf.mxu0
        %v3868 = vadd.f32 0.0, %v3867
        %3869 = vdwg.mxu0
        %v3870 = vadd.f32 %v3795, %v3842
        %v3871 = vadd.f32 %v3796, %v3865
        %v3872 = vadd.f32 %v3797, %v3845
        %v3873 = vadd.f32 %v3798, %v3868
        %3874 = vrot.lane.b32.xlu0 %v3368, 112
        %v3875 = vpop.permute.xlu0 %3874
        %3876 = vrot.lane.b32.xlu0 %v3370, 112
        %v3877 = vpop.permute.xlu0 %3876
        %3878 = vrot.lane.b32.xlu0 %v3369, 112
        %v3879 = vpop.permute.xlu0 %3878
        %3880 = vrot.lane.b32.xlu0 %v3371, 112
        %v3881 = vpop.permute.xlu0 %3880
        %v3882 = vsel %vm995, %v3875, %v3879
        %v3883 = vsel %vm995, %v3877, %v3881
        %v3884 = vsel %vm995, %v3879, %v3875
        %v3885 = vsel %vm995, %v3881, %v3877
        %v3886 = vmul.f32 %v3882, %v1003
        %v3887 = vmul.f32 %v3884, %v1004
        %v3888 = vmul.f32 %v3883, %v1003
        %v3889 = vmul.f32 %v3885, %v1004
        %s3890 = scalar_lea.vmem [#allocation2], 112
        %v3891 = vld [vmem:[%s3890] sm:$0xff]
        %v3892 = vld [vmem:[%s3890 + $0x8] sm:$0xff]
        %v3894 = vsel %vm467, %v3891, 0
        %v3897 = vsel %vm467, %v3892, 0
        %3899 = vmatpush.msra.mxu0 0.0
        %3900 = vmatpush.msra.mxu0 0.0
        %3901 = vmatpush.msra.mxu0 0.0
        %3902 = vmatpush.msra.mxu0 0.0
        %3903 = vmatpush.msra.mxu0 0.0
        %3904 = vmatpush.msra.mxu0 0.0
        %3905 = vmatpush.msra.mxu0 0.0
        %3906 = vmatpush.msra.mxu0 0.0
        %3907 = vmatpush.msra.mxu0 0.0
        %3908 = vmatpush.msra.mxu0 0.0
        %3909 = vmatpush.msra.mxu0 0.0
        %3910 = vmatpush.msra.mxu0 0.0
        %3911 = vmatpush.msra.mxu0 0.0
        %3912 = vmatpush.msra.mxu0 0.0
        %3913 = vmatpush.msra.mxu0 %v3888
        %3914 = vmatpush.msra.mxu0 %v3886
        %3915 = vmatmul.f32.gmra.mxu0 %v3894
        %v3916 = vpop.f32.mrf.mxu0
        %v3917 = vadd.f32 0.0, %v3916
        %3918 = vmatmul.f32.gmra.mxu0 %v3897
        %v3919 = vpop.f32.mrf.mxu0
        %v3920 = vadd.f32 0.0, %v3919
        %3921 = vdwg.mxu0
        %3922 = vmatpush.msra.mxu0 0.0
        %3923 = vmatpush.msra.mxu0 0.0
        %3924 = vmatpush.msra.mxu0 0.0
        %3925 = vmatpush.msra.mxu0 0.0
        %3926 = vmatpush.msra.mxu0 0.0
        %3927 = vmatpush.msra.mxu0 0.0
        %3928 = vmatpush.msra.mxu0 0.0
        %3929 = vmatpush.msra.mxu0 0.0
        %3930 = vmatpush.msra.mxu0 0.0
        %3931 = vmatpush.msra.mxu0 0.0
        %3932 = vmatpush.msra.mxu0 0.0
        %3933 = vmatpush.msra.mxu0 0.0
        %3934 = vmatpush.msra.mxu0 0.0
        %3935 = vmatpush.msra.mxu0 0.0
        %3936 = vmatpush.msra.mxu0 %v3889
        %3937 = vmatpush.msra.mxu0 %v3887
        %3938 = vmatmul.f32.gmra.mxu0 %v3894
        %v3939 = vpop.f32.mrf.mxu0
        %v3940 = vadd.f32 0.0, %v3939
        %3941 = vmatmul.f32.gmra.mxu0 %v3897
        %v3942 = vpop.f32.mrf.mxu0
        %v3943 = vadd.f32 0.0, %v3942
        %3944 = vdwg.mxu0
        %v3945 = vadd.f32 %v3870, %v3917
        %v3946 = vadd.f32 %v3871, %v3940
        %v3947 = vadd.f32 %v3872, %v3920
        %v3948 = vadd.f32 %v3873, %v3943
        %3949 = vrot.lane.b32.xlu0 %v3368, 111
        %v3950 = vpop.permute.xlu0 %3949
        %3951 = vrot.lane.b32.xlu0 %v3370, 111
        %v3952 = vpop.permute.xlu0 %3951
        %3953 = vrot.lane.b32.xlu0 %v3369, 111
        %v3954 = vpop.permute.xlu0 %3953
        %3955 = vrot.lane.b32.xlu0 %v3371, 111
        %v3956 = vpop.permute.xlu0 %3955
        %v3957 = vsel %vm1078, %v3950, %v3954
        %v3958 = vsel %vm1078, %v3952, %v3956
        %v3959 = vsel %vm1078, %v3954, %v3950
        %v3960 = vsel %vm1078, %v3956, %v3952
        %v3961 = vmul.f32 %v3957, %v1086
        %v3962 = vmul.f32 %v3959, %v1087
        %v3963 = vmul.f32 %v3958, %v1086
        %v3964 = vmul.f32 %v3960, %v1087
        %s3965 = scalar_lea.vmem [#allocation2], 128
        %v3966 = vld [vmem:[%s3965] sm:$0xff]
        %v3967 = vld [vmem:[%s3965 + $0x8] sm:$0xff]
        %v3969 = vsel %vm467, %v3966, 0
        %v3972 = vsel %vm467, %v3967, 0
        %3974 = vmatpush.msra.mxu0 0.0
        %3975 = vmatpush.msra.mxu0 0.0
        %3976 = vmatpush.msra.mxu0 0.0
        %3977 = vmatpush.msra.mxu0 0.0
        %3978 = vmatpush.msra.mxu0 0.0
        %3979 = vmatpush.msra.mxu0 0.0
        %3980 = vmatpush.msra.mxu0 0.0
        %3981 = vmatpush.msra.mxu0 0.0
        %3982 = vmatpush.msra.mxu0 0.0
        %3983 = vmatpush.msra.mxu0 0.0
        %3984 = vmatpush.msra.mxu0 0.0
        %3985 = vmatpush.msra.mxu0 0.0
        %3986 = vmatpush.msra.mxu0 0.0
        %3987 = vmatpush.msra.mxu0 0.0
        %3988 = vmatpush.msra.mxu0 %v3963
        %3989 = vmatpush.msra.mxu0 %v3961
        %3990 = vmatmul.f32.gmra.mxu0 %v3969
        %v3991 = vpop.f32.mrf.mxu0
        %v3992 = vadd.f32 0.0, %v3991
        %3993 = vmatmul.f32.gmra.mxu0 %v3972
        %v3994 = vpop.f32.mrf.mxu0
        %v3995 = vadd.f32 0.0, %v3994
        %3996 = vdwg.mxu0
        %3997 = vmatpush.msra.mxu0 0.0
        %3998 = vmatpush.msra.mxu0 0.0
        %3999 = vmatpush.msra.mxu0 0.0
        %4000 = vmatpush.msra.mxu0 0.0
        %4001 = vmatpush.msra.mxu0 0.0
        %4002 = vmatpush.msra.mxu0 0.0
        %4003 = vmatpush.msra.mxu0 0.0
        %4004 = vmatpush.msra.mxu0 0.0
        %4005 = vmatpush.msra.mxu0 0.0
        %4006 = vmatpush.msra.mxu0 0.0
        %4007 = vmatpush.msra.mxu0 0.0
        %4008 = vmatpush.msra.mxu0 0.0
        %4009 = vmatpush.msra.mxu0 0.0
        %4010 = vmatpush.msra.mxu0 0.0
        %4011 = vmatpush.msra.mxu0 %v3964
        %4012 = vmatpush.msra.mxu0 %v3962
        %4013 = vmatmul.f32.gmra.mxu0 %v3969
        %v4014 = vpop.f32.mrf.mxu0
        %v4015 = vadd.f32 0.0, %v4014
        %4016 = vmatmul.f32.gmra.mxu0 %v3972
        %v4017 = vpop.f32.mrf.mxu0
        %v4018 = vadd.f32 0.0, %v4017
        %4019 = vdwg.mxu0
        %v4020 = vadd.f32 %v3945, %v3992
        %v4021 = vadd.f32 %v3946, %v4015
        %v4022 = vadd.f32 %v3947, %v3995
        %v4023 = vadd.f32 %v3948, %v4018
        %4025 = vset.pattern.permute.xlu0 0
        %4026 = vperm.xlu0 %4025, %v3372
        %v4027 = vpop.permute.xlu0 %4026
        %4030 = vset.pattern.permute.xlu0 0
        %4031 = vperm.xlu0 %4030, %v3373
        %v4032 = vpop.permute.xlu0 %4031
        %v4034 = vadd.f32 %v4020, %v4027
        %v4035 = vadd.f32 %v4021, %v4027
        %v4036 = vadd.f32 %v4022, %v4032
        %v4037 = vadd.f32 %v4023, %v4032
        %v4038 = vadd.f32 %v4034, %v431
        %v4039 = vadd.f32 %v4035, %v432
        %v4040 = vadd.f32 %v4036, %v433
        %v4041 = vadd.f32 %v4037, %v434
        %4042 = vst [vmem:[%s430] sm:$0xff] %v4038
        %4043 = vst [vmem:[%s430 + $0x8] sm:$0xff] %v4039
        %4044 = vst [vmem:[%s430 + $0x10] sm:$0xff] %v4040
        %4045 = vst [vmem:[%s430 + $0x18] sm:$0xff] %v4041
        %p4046 = scmp.lt.s32.totalorder %s24, 1
        %s4047 = scalar_select %p4046, %s24, 1
        %s4048 = smul.addr %s4047, 4
        %s4049 = smul.addr %s4048, 8
        %s4050 = scalar_lea.vmem %s12, %s4049
        // Predicated region
        $region73: #{rca_group.1} parent=67 // pred_check
          %p4051 = pneg %p299
        $region74: #{rca_group.1} parent=67 // pred_check_branch
          %4053 = sbr.rel (%p4051) target = $region76
        $region75: #{rca_group.1} parent=67 // pred_region
          _
        $region76: #{rca_group.1} parent=67 // pred_fallthru
          _
      $region68: #{rca_group.1} parent=5 // pred_fallthru
        _
      %p4054 = scmp.le.s32.totalorder 2, %s19
      // Predicated region
      $region77: #{rca_group.1} parent=5 // pred_check
        %p4055 = pneg %p4054
      $region78: #{rca_group.1} parent=5 // pred_check_branch
        %4057 = sbr.rel (%p4055) target = $region80
      $region79: #{rca_group.1} parent=5 // pred_region
        %s4058 = ssub.s32 %s19, 2
        // Predicated region
        $region81: #{rca_group.1} parent=79 // pred_check
          %p4059 = pneg %p305
        $region82: #{rca_group.1} parent=79 // pred_check_branch
          %4061 = sbr.rel (%p4059) target = $region84
        $region83: #{rca_group.1} parent=79 // pred_region
          %p4062 = scmp.lt.s32.totalorder %s25, 1
          %s4063 = scalar_select %p4062, %s25, 1
          %s4064 = smul.addr %s4063, 4
          %s4065 = smul.addr %s4064, 8
          %s4066 = scalar_lea.vmem %s12, %s4065
        $region84: #{rca_group.1} parent=79 // pred_fallthru
          _
      $region80: #{rca_group.1} parent=5 // pred_fallthru
        _
    $region6: #{rca_group.1} parent=1 // loop_footer
      %s23 = sadd.s32 1, %s19
    $region7: #{rca_group.1} parent=1 // loop_footer_branch
      %18 = sbr.rel target = $region3
    $region8: #{rca_group.1} parent=1 // loop_exit
      _
    %4067 = vsyncpa [#allocation3], 1
    %s4068 = scalar_lea.sflag [#allocation3], 1
    %4069 = vsyncpa %s4068, 1

</llo_original>
